<compile_context>
chip_gen: v7x
topology: tpu7x:2x2x1
jax: 0.10.0
libtpu: 0.0.40
codegen_flags: <defaults>
</compile_context>

<pallas_src>
import functools

import jax
import jax.numpy as jnp
from jax.experimental import pallas as pl
from jax.experimental.pallas import tpu as pltpu

C_IN = 1024                  # stage4 output channels (self.nchannels)
HIDDEN = int(1024 // 1.05)   # 975, matches nn.Linear(1024, int(1024 // 1.05))
HIDDEN_PAD = 1024            # lane-dense padded hidden width (zero-padded)
LANE = 128


def _head_kernel(x_ref, w1_ref, b1_ref, w2_ref, b2_ref, o_ref):
    # x_ref : (TM, C_IN) f32   -- already-pooled features, lane-dense rows.
    # w1_ref: (C_IN, HIDDEN_PAD) bf16,      b1_ref: (1, HIDDEN_PAD) f32
    # w2_ref: (HIDDEN_PAD, CLS_PAD) bf16,   b2_ref: (1, CLS_PAD) f32
    # o_ref : (TM, CLS_PAD) f32
    x = x_ref[...].astype(jnp.bfloat16)
    # fc1 (1024 -> 975, zero-padded to 1024): bf16 x bf16 MXU, f32 accumulate.
    h = jnp.dot(x, w1_ref[...],
                preferred_element_type=jnp.float32) + b1_ref[...]      # (TM, 1024)
    # F.dropout(p=droprate_fc) at inference (training=False) is the identity.
    # fc2 (975 -> classNum): padded hidden cols are exactly 0 (zero w1 cols,
    # zero b1 entries) and padded w2 rows are 0, so padding contributes 0.
    out = jnp.dot(h.astype(jnp.bfloat16), w2_ref[...],
                  preferred_element_type=jnp.float32) + b2_ref[...]    # (TM, CLS_PAD)
    o_ref[...] = out


def prepare_head_params(w1, b1, w2, b2):
    """One-time host-side prep: bf16 weights + lane-dense zero padding."""
    hidden, class_num = w2.shape
    assert w1.shape == (C_IN, hidden) and hidden == HIDDEN
    cls_pad = pl.cdiv(class_num, LANE) * LANE
    w1p = jnp.zeros((C_IN, HIDDEN_PAD), jnp.bfloat16)
    w1p = w1p.at[:, :hidden].set(w1.astype(jnp.bfloat16))
    b1p = jnp.zeros((1, HIDDEN_PAD), jnp.float32)
    b1p = b1p.at[:, :hidden].set(b1.astype(jnp.float32))
    w2p = jnp.zeros((HIDDEN_PAD, cls_pad), jnp.bfloat16)
    w2p = w2p.at[:hidden, :class_num].set(w2.astype(jnp.bfloat16))
    b2p = jnp.zeros((1, cls_pad), jnp.float32)
    b2p = b2p.at[:, :class_num].set(b2.astype(jnp.float32))
    return w1p, b1p, w2p, b2p


def micronet_m3_head(x_nchw, w1p, b1p, w2p, b2p, *, class_num, block_n=128):
    """MicroNet_M3 head: AvgPool2d(7) + view + fc1 + (eval) dropout + fc2.

    x_nchw: (N, 1024, 7, 7) f32 stage4 feature map (PyTorch NCHW layout).
    w1p/b1p/w2p/b2p: padded/bf16 parameters from prepare_head_params.
    block_n: batch tile; 128 fills the v5e MXU, pass 256 on v6e/v7x batches.
    """
    n, c, hh, ww = x_nchw.shape
    assert c == C_IN and hh == 7 and ww == 7
    cls_pad = w2p.shape[1]

    # nn.AvgPool2d(7) on a 7x7 map == mean over the 49 spatial positions,
    # followed by view(-1, 1024). Done by XLA: the pooled intermediate is only
    # 4 KiB per sample, far cheaper than hauling the 49-lane-padded feature
    # block through VMEM inside the kernel.
    pooled = jnp.mean(x_nchw.reshape(n, c, hh * ww), axis=-1)   # (N, 1024) f32

    # Batch tiling: weights stay VMEM-resident (constant index_map); the batch
    # axis is "parallel" so v7x's two TensorCores split it once N > block_n.
    if n <= block_n:
        tm, n_pad = n, n
    else:
        tm = block_n
        n_pad = pl.cdiv(n, tm) * tm
        if n_pad != n:
            pooled = jnp.pad(pooled, ((0, n_pad - n), (0, 0)))
    grid = (n_pad // tm,)

    flops = 2 * n_pad * (C_IN * HIDDEN_PAD + HIDDEN_PAD * cls_pad)
    bytes_accessed = (pooled.size * 4 + w1p.size * 2 + b1p.size * 4
                      + w2p.size * 2 + b2p.size * 4 + n_pad * cls_pad * 4)

    out = pl.pallas_call(
        _head_kernel,
        out_shape=jax.ShapeDtypeStruct((n_pad, cls_pad), jnp.float32),
        grid=grid,
        in_specs=[
            pl.BlockSpec((tm, C_IN), lambda i: (i, 0)),   # per-tile pooled features
            pl.BlockSpec(w1p.shape, lambda i: (0, 0)),    # fc1 weight (resident)
            pl.BlockSpec(b1p.shape, lambda i: (0, 0)),    # fc1 bias
            pl.BlockSpec(w2p.shape, lambda i: (0, 0)),    # fc2 weight (resident)
            pl.BlockSpec(b2p.shape, lambda i: (0, 0)),    # fc2 bias
        ],
        out_specs=pl.BlockSpec((tm, cls_pad), lambda i: (i, 0)),
        compiler_params=pltpu.CompilerParams(
            dimension_semantics=("parallel",),
            vmem_limit_bytes=32 * 1024 * 1024),   # ~6 MiB used; ample headroom
        cost_estimate=pl.CostEstimate(
            flops=flops, transcendentals=0, bytes_accessed=bytes_accessed),
    )(pooled, w1p, b1p, w2p, b2p)

    # Strip batch padding and the lane padding of the class dimension.
    return out[:n, :class_num]


if __name__ == "__main__":
    key = jax.random.PRNGKey(0)
    k_x, k_w1, k_b1, k_w2, k_b2 = jax.random.split(key, 5)

    n = 2           # small batch
    class_num = 10  # classNum constructor argument (small value chosen)

    # Stage4 output feature map that feeds avg_pooling in the PyTorch forward.
    x = jax.random.normal(k_x, (n, C_IN, 7, 7), dtype=jnp.float32)

    # nn.Linear default U(-1/sqrt(fan_in), 1/sqrt(fan_in)) weight init. The
    # module zeroes Linear biases at __init__; small nonzero biases are used
    # here purely to exercise the bias-broadcast path in the kernel.
    bound1 = 1.0 / (float(C_IN) ** 0.5)
    w1 = jax.random.uniform(k_w1, (C_IN, HIDDEN), jnp.float32, -bound1, bound1)
    b1 = jax.random.uniform(k_b1, (HIDDEN,), jnp.float32, -0.05, 0.05)
    bound2 = 1.0 / (float(HIDDEN) ** 0.5)
    w2 = jax.random.uniform(k_w2, (HIDDEN, class_num), jnp.float32, -bound2, bound2)
    b2 = jax.random.uniform(k_b2, (class_num,), jnp.float32, -0.05, 0.05)

    w1p, b1p, w2p, b2p = prepare_head_params(w1, b1, w2, b2)

    head = jax.jit(functools.partial(micronet_m3_head, class_num=class_num))
    out = jax.block_until_ready(head(x, w1p, b1p, w2p, b2p))

    # Pure-JAX f32 reference of the PyTorch head (pool -> fc1 -> fc2). The
    # kernel uses bf16 weights, so compare with a tolerance that bounds the
    # bf16 drift explicitly (observed ~1e-3 at these scales).
    pooled_ref = jnp.mean(x.reshape(n, C_IN, 49), axis=-1)
    h_ref = pooled_ref @ w1 + b1
    ref = h_ref @ w2 + b2

    assert out.shape == (n, class_num)
    assert jnp.allclose(out, ref, atol=1e-2, rtol=1e-2), "mismatch vs f32 reference"
    print("KERNEL_OK")
</pallas_src>

<mosaic_0001>
module attributes {stable_mosaic.version = 11 : i64} {
  func.func @_head_kernel(%arg0: i32, %arg1: memref<2x1024xf32, #tpu.memory_space<vmem>>, %arg2: memref<1024x1024xbf16, #tpu.memory_space<vmem>>, %arg3: memref<1x1024xf32, #tpu.memory_space<vmem>>, %arg4: memref<1024x128xbf16, #tpu.memory_space<vmem>>, %arg5: memref<1x128xf32, #tpu.memory_space<vmem>>, %arg6: memref<2x128xf32, #tpu.memory_space<vmem>>) attributes {dimension_semantics = [#tpu.dimension_semantics<parallel>], iteration_bounds = array<i64: 1>, scalar_prefetch = 0 : i64, scratch_operands = 0 : i64, tpu.core_type = #tpu.core_type<tc>, window_params = [{transform_indices = @transform_0, window_bounds = array<i64: 2, 1024>}, {pipeline_mode = #tpu.pipeline_mode<synchronous>, transform_indices = @transform_1, window_bounds = array<i64: 1024, 1024>}, {pipeline_mode = #tpu.pipeline_mode<synchronous>, transform_indices = @transform_2, window_bounds = array<i64: 1, 1024>}, {pipeline_mode = #tpu.pipeline_mode<synchronous>, transform_indices = @transform_3, window_bounds = array<i64: 1024, 128>}, {pipeline_mode = #tpu.pipeline_mode<synchronous>, transform_indices = @transform_4, window_bounds = array<i64: 1, 128>}, {transform_indices = @transform_5, window_bounds = array<i64: 2, 128>}]} {
    %c0 = arith.constant 0 : index
    %c0_0 = arith.constant 0 : index
    %0 = vector.load %arg1[%c0, %c0_0] : memref<2x1024xf32, #tpu.memory_space<vmem>>, vector<2x1024xf32>
    %1 = arith.truncf %0 : vector<2x1024xf32> to vector<2x1024xbf16>
    %c0_1 = arith.constant 0 : index
    %c0_2 = arith.constant 0 : index
    %2 = vector.load %arg2[%c0_1, %c0_2] : memref<1024x1024xbf16, #tpu.memory_space<vmem>>, vector<1024x1024xbf16>
    %cst = arith.constant dense<0.000000e+00> : vector<2x1024xf32>
    %3 = tpu.matmul %1, %2, %cst {dimension_numbers = #tpu.dot_dimension_numbers<[1], [0], [0], [1], [0, 0, 1, 1], [], []>} : vector<2x1024xbf16>, vector<1024x1024xbf16>, vector<2x1024xf32> -> vector<2x1024xf32>
    %c0_3 = arith.constant 0 : index
    %c0_4 = arith.constant 0 : index
    %4 = vector.load %arg3[%c0_3, %c0_4] : memref<1x1024xf32, #tpu.memory_space<vmem>>, vector<1x1024xf32>
    %5 = vector.broadcast %4 : vector<1x1024xf32> to vector<2x1024xf32>
    %6 = arith.addf %3, %5 : vector<2x1024xf32>
    %7 = arith.truncf %6 : vector<2x1024xf32> to vector<2x1024xbf16>
    %c0_5 = arith.constant 0 : index
    %c0_6 = arith.constant 0 : index
    %8 = vector.load %arg4[%c0_5, %c0_6] : memref<1024x128xbf16, #tpu.memory_space<vmem>>, vector<1024x128xbf16>
    %cst_7 = arith.constant dense<0.000000e+00> : vector<2x128xf32>
    %9 = tpu.matmul %7, %8, %cst_7 {dimension_numbers = #tpu.dot_dimension_numbers<[1], [0], [0], [1], [0, 0, 1, 1], [], []>} : vector<2x1024xbf16>, vector<1024x128xbf16>, vector<2x128xf32> -> vector<2x128xf32>
    %c0_8 = arith.constant 0 : index
    %c0_9 = arith.constant 0 : index
    %10 = vector.load %arg5[%c0_8, %c0_9] : memref<1x128xf32, #tpu.memory_space<vmem>>, vector<1x128xf32>
    %11 = vector.broadcast %10 : vector<1x128xf32> to vector<2x128xf32>
    %12 = arith.addf %9, %11 : vector<2x128xf32>
    %c0_10 = arith.constant 0 : index
    %c0_11 = arith.constant 0 : index
    %13 = vector.load %arg6[%c0_10, %c0_11] : memref<2x128xf32, #tpu.memory_space<vmem>>, vector<2x128xf32>
    tpu.vector_store %arg6[%c0_10, %c0_11], %12 {strides = array<i32>} : memref<2x128xf32, #tpu.memory_space<vmem>>, vector<2x128xf32>,
    return
  }
  func.func @transform_0(%arg0: i32) -> (i32, i32) {
    %c0_i32 = arith.constant 0 : i32
    %c0_i32_0 = arith.constant 0 : i32
    return %arg0, %c0_i32 : i32, i32
  }
  func.func @transform_1(%arg0: i32) -> (i32, i32) {
    %c0_i32 = arith.constant 0 : i32
    %c0_i32_0 = arith.constant 0 : i32
    %c0_i32_1 = arith.constant 0 : i32
    return %c0_i32, %c0_i32_0 : i32, i32
  }
  func.func @transform_2(%arg0: i32) -> (i32, i32) {
    %c0_i32 = arith.constant 0 : i32
    %c0_i32_0 = arith.constant 0 : i32
    %c0_i32_1 = arith.constant 0 : i32
    return %c0_i32, %c0_i32_0 : i32, i32
  }
  func.func @transform_3(%arg0: i32) -> (i32, i32) {
    %c0_i32 = arith.constant 0 : i32
    %c0_i32_0 = arith.constant 0 : i32
    %c0_i32_1 = arith.constant 0 : i32
    return %c0_i32, %c0_i32_0 : i32, i32
  }
  func.func @transform_4(%arg0: i32) -> (i32, i32) {
    %c0_i32 = arith.constant 0 : i32
    %c0_i32_0 = arith.constant 0 : i32
    %c0_i32_1 = arith.constant 0 : i32
    return %c0_i32, %c0_i32_0 : i32, i32
  }
  func.func @transform_5(%arg0: i32) -> (i32, i32) {
    %c0_i32 = arith.constant 0 : i32
    %c0_i32_0 = arith.constant 0 : i32
    return %arg0, %c0_i32 : i32, i32
  }
}

</mosaic_0001>

<llo_original>
// kernel: micronet_m3_head.1
$region0: #{micronet_m3_head.1}
  #allocation0 [shape = 'u32[]', space=smem, size = 0x4, offset = 0x4, fixed_abs, tag = 'smem constant byte address 0x4 - core index']
  #allocation1 [shape = 'u32[144,128]{1,0:T(1,128)}', space=vmem, size = 0x12000, scoped, tag = 'internal scratch']
  %s0 = inlined_call_operand.vmem [shape: f32[2,1024], index: 0, kind: input, shape index: {}]
  %s1 = inlined_call_operand.hbm [shape: bf16[1024,1024], index: 1, kind: input, shape index: {}]
  %s2 = inlined_call_operand.hbm [shape: f32[1,1024], index: 2, kind: input, shape index: {}]
  %s3 = inlined_call_operand.hbm [shape: bf16[1024,128], index: 3, kind: input, shape index: {}]
  %s4 = inlined_call_operand.hbm [shape: f32[1,128], index: 4, kind: input, shape index: {}]
  %s5 = inlined_call_operand.hbm [shape: f32[2,128], index: 5, kind: output, shape index: {}]
  %s6 = sld [smem:[#allocation0]]
  $region46: #{micronet_m3_head.1} parent=0
    _
  %s8 = ssub.s32 1, %s6
  %s9 = scalar_select 0, %s8, %s6
  $region1: #{micronet_m3_head.1} parent=0
    #allocation2 [shape = 'u8[2097152]{0}', space=vmem, size = 0x200000, scoped, tag = 'input window, operand 1, single buffered']
    #allocation3 [shape = 's32[1]{0}', space=sflag, size = 0x4, scoped, tag = 'scoped memory for micronet_m3_head.1']
    #allocation4 [shape = 's32[1]{0}', space=sflag, size = 0x4, scoped, tag = 'scoped memory for micronet_m3_head.1']
    #allocation5 [shape = 'u8[4096]{0}', space=vmem, size = 0x1000, scoped, tag = 'input window, operand 2, single buffered']
    #allocation6 [shape = 's32[1]{0}', space=sflag, size = 0x4, scoped, tag = 'scoped memory for micronet_m3_head.1']
    #allocation7 [shape = 'u8[262144]{0}', space=vmem, size = 0x40000, scoped, tag = 'input window, operand 3, single buffered']
    #allocation8 [shape = 'u8[512]{0}', space=vmem, size = 0x400, scoped, tag = 'input window, operand 4, single buffered']
    #allocation9 [shape = 's32[1]{0}', space=sflag, size = 0x4, scoped, tag = 'scoped memory for micronet_m3_head.1']
    #allocation10 [shape = 'u8[1024]{0}', space=vmem, size = 0x400, scoped, tag = 'output window, operand 0, single buffered']
    %10 = vsyncpa [#allocation3], 0
    %11 = vsyncpa [#allocation6], 0
    %12 = vsyncpa [#allocation9], 0
    %13 = vsyncpa [#allocation4], 0
    // Predicated region
    $region2: #{micronet_m3_head.1} parent=1 // pred_check
      _
    $region3: #{micronet_m3_head.1} parent=1 // pred_check_branch
      %15 = sbr.rel (0) target = $region5
    $region4: #{micronet_m3_head.1} parent=1 // pred_region
      _
    $region5: #{micronet_m3_head.1} parent=1 // pred_fallthru
      _
    // Predicated region
    $region6: #{micronet_m3_head.1} parent=1 // pred_check
      _
    $region7: #{micronet_m3_head.1} parent=1 // pred_check_branch
      %17 = sbr.rel (0) target = $region9
    $region8: #{micronet_m3_head.1} parent=1 // pred_region
      %s19 = ssub.s32 65536, 65536
      %20 = vsyncadd [#allocation3], %s19
      %s21 = sshll.u32 [#allocation2], 4
      %s22 = int_to_ptr.vmem [resolvable:$true] %s21
      %27 = dma.hbm_to_vmem [thread:$0]  %s1, 65536, %s22, [#allocation3], 512, 512, 32
    $region9: #{micronet_m3_head.1} parent=1 // pred_fallthru
      _
    // Predicated region
    $region10: #{micronet_m3_head.1} parent=1 // pred_check
      _
    $region11: #{micronet_m3_head.1} parent=1 // pred_check_branch
      %29 = sbr.rel (0) target = $region13
    $region12: #{micronet_m3_head.1} parent=1 // pred_region
      %s31 = ssub.s32 128, 128
      %32 = vsyncadd [#allocation6], %s31
      %s34 = sshll.u32 [#allocation5], 4
      %s35 = int_to_ptr.vmem [resolvable:$true] %s34
      %37 = dma.hbm_to_vmem [thread:$0]  %s2, 128, %s35, [#allocation6]
    $region13: #{micronet_m3_head.1} parent=1 // pred_fallthru
      _
    // Predicated region
    $region14: #{micronet_m3_head.1} parent=1 // pred_check
      _
    $region15: #{micronet_m3_head.1} parent=1 // pred_check_branch
      %39 = sbr.rel (0) target = $region17
    $region16: #{micronet_m3_head.1} parent=1 // pred_region
      %s41 = ssub.s32 8192, 8192
      %42 = vsyncadd [#allocation6], %s41
      %s43 = sshll.u32 [#allocation7], 4
      %s44 = int_to_ptr.vmem [resolvable:$true] %s43
      %49 = dma.hbm_to_vmem [thread:$0]  %s3, 8192, %s44, [#allocation6], 64, 64, 4
    $region17: #{micronet_m3_head.1} parent=1 // pred_fallthru
      _
    // Predicated region
    $region18: #{micronet_m3_head.1} parent=1 // pred_check
      _
    $region19: #{micronet_m3_head.1} parent=1 // pred_check_branch
      %51 = sbr.rel (0) target = $region21
    $region20: #{micronet_m3_head.1} parent=1 // pred_region
      %s53 = ssub.s32 16, 16
      %54 = vsyncadd [#allocation9], %s53
      %s56 = sshll.u32 [#allocation8], 4
      %s57 = int_to_ptr.vmem [resolvable:$true] %s56
      %59 = dma.hbm_to_vmem [thread:$0]  %s4, 16, %s57, [#allocation9]
    $region21: #{micronet_m3_head.1} parent=1 // pred_fallthru
      _
    // Predicated region
    $region22: #{micronet_m3_head.1} parent=1 // pred_check
      _
    $region23: #{micronet_m3_head.1} parent=1 // pred_check_branch
      %61 = sbr.rel (0) target = $region25
    $region24: #{micronet_m3_head.1} parent=1 // pred_region
      %62 = dma.done [#allocation3], 65536
    $region25: #{micronet_m3_head.1} parent=1 // pred_fallthru
      _
    // Predicated region
    $region26: #{micronet_m3_head.1} parent=1 // pred_check
      _
    $region27: #{micronet_m3_head.1} parent=1 // pred_check_branch
      %64 = sbr.rel (0) target = $region29
    $region28: #{micronet_m3_head.1} parent=1 // pred_region
      %65 = dma.done [#allocation6], 128
    $region29: #{micronet_m3_head.1} parent=1 // pred_fallthru
      _
    // Predicated region
    $region30: #{micronet_m3_head.1} parent=1 // pred_check
      _
    $region31: #{micronet_m3_head.1} parent=1 // pred_check_branch
      %67 = sbr.rel (0) target = $region33
    $region32: #{micronet_m3_head.1} parent=1 // pred_region
      %68 = dma.done [#allocation6], 8192
    $region33: #{micronet_m3_head.1} parent=1 // pred_fallthru
      _
    // Predicated region
    $region34: #{micronet_m3_head.1} parent=1 // pred_check
      _
    $region35: #{micronet_m3_head.1} parent=1 // pred_check_branch
      %70 = sbr.rel (0) target = $region37
    $region36: #{micronet_m3_head.1} parent=1 // pred_region
      %71 = dma.done [#allocation9], 16
    $region37: #{micronet_m3_head.1} parent=1 // pred_fallthru
      _
    %v73 = vld [vmem:[%s0] sm:$0xff]
    %v74 = vld [vmem:[%s0 + $0x8] sm:$0xff]
    %v77 = vcombine.high %v73, %v73
    %v79 = vunpack.c.l.s4 1983009808
    %v80 = vunpack.c.0.s8 %v79
    %v81 = vlaneseq
    %v82 = vshrl.u32 %v81, 7
    %v83 = vsub.s32 %v80, %v82
    %v84 = vrot.slane %v73, %v83
    %v86 = vunpack.c.l.s4 1983009808
    %v87 = vunpack.c.0.s8 %v86
    %v88 = vlaneseq
    %v89 = vshrl.u32 %v88, 7
    %v90 = vsub.s32 %v87, %v89
    %v91 = vrot.slane %v77, %v90
    %v92 = vcombine.high %v84, %v84
    %v93 = vcombine.high %v91, %v91
    %v94 = vcombine.high %v74, %v74
    %v96 = vunpack.c.l.s4 1983009808
    %v97 = vunpack.c.0.s8 %v96
    %v98 = vlaneseq
    %v99 = vshrl.u32 %v98, 7
    %v100 = vsub.s32 %v97, %v99
    %v101 = vrot.slane %v74, %v100
    %v103 = vunpack.c.l.s4 1983009808
    %v104 = vunpack.c.0.s8 %v103
    %v105 = vlaneseq
    %v106 = vshrl.u32 %v105, 7
    %v107 = vsub.s32 %v104, %v106
    %v108 = vrot.slane %v94, %v107
    %v109 = vcombine.high %v101, %v101
    %v110 = vcombine.high %v108, %v108
    %v119 = vpack.c.bf16 %v84, %v84
    %v120 = vpack.c.bf16 %v92, %v92
    %v121 = vpack.c.bf16 %v91, %v91
    %v122 = vpack.c.bf16 %v93, %v93
    %v123 = vpack.c.bf16 %v101, %v101
    %v124 = vpack.c.bf16 %v109, %v109
    %v125 = vpack.c.bf16 %v108, %v108
    %v126 = vpack.c.bf16 %v110, %v110
    %v127 = vld [vmem:[#allocation2] sm:$0xff]
    %v128 = vld [vmem:[#allocation2 + $0x8] sm:$0xff]
    %v129 = vld [vmem:[#allocation2 + $0x10] sm:$0xff]
    %v130 = vld [vmem:[#allocation2 + $0x18] sm:$0xff]
    %v131 = vld [vmem:[#allocation2 + $0x20] sm:$0xff]
    %v132 = vld [vmem:[#allocation2 + $0x28] sm:$0xff]
    %v133 = vld [vmem:[#allocation2 + $0x30] sm:$0xff]
    %v134 = vld [vmem:[#allocation2 + $0x38] sm:$0xff]
    %v135 = vld [vmem:[#allocation2 + $0x40] sm:$0xff]
    %v136 = vld [vmem:[#allocation2 + $0x48] sm:$0xff]
    %v137 = vld [vmem:[#allocation2 + $0x50] sm:$0xff]
    %v138 = vld [vmem:[#allocation2 + $0x58] sm:$0xff]
    %v139 = vld [vmem:[#allocation2 + $0x60] sm:$0xff]
    %v140 = vld [vmem:[#allocation2 + $0x68] sm:$0xff]
    %v141 = vld [vmem:[#allocation2 + $0x70] sm:$0xff]
    %v142 = vld [vmem:[#allocation2 + $0x78] sm:$0xff]
    %v143 = vld [vmem:[#allocation2 + $0x80] sm:$0xff]
    %v144 = vld [vmem:[#allocation2 + $0x88] sm:$0xff]
    %v145 = vld [vmem:[#allocation2 + $0x90] sm:$0xff]
    %v146 = vld [vmem:[#allocation2 + $0x98] sm:$0xff]
    %v147 = vld [vmem:[#allocation2 + $0xa0] sm:$0xff]
    %v148 = vld [vmem:[#allocation2 + $0xa8] sm:$0xff]
    %v149 = vld [vmem:[#allocation2 + $0xb0] sm:$0xff]
    %v150 = vld [vmem:[#allocation2 + $0xb8] sm:$0xff]
    %v151 = vld [vmem:[#allocation2 + $0xc0] sm:$0xff]
    %v152 = vld [vmem:[#allocation2 + $0xc8] sm:$0xff]
    %v153 = vld [vmem:[#allocation2 + $0xd0] sm:$0xff]
    %v154 = vld [vmem:[#allocation2 + $0xd8] sm:$0xff]
    %v155 = vld [vmem:[#allocation2 + $0xe0] sm:$0xff]
    %v156 = vld [vmem:[#allocation2 + $0xe8] sm:$0xff]
    %v157 = vld [vmem:[#allocation2 + $0xf0] sm:$0xff]
    %v158 = vld [vmem:[#allocation2 + $0xf8] sm:$0xff]
    %v159 = vld [vmem:[#allocation2 + $0x100] sm:$0xff]
    %v160 = vld [vmem:[#allocation2 + $0x108] sm:$0xff]
    %v161 = vld [vmem:[#allocation2 + $0x110] sm:$0xff]
    %v162 = vld [vmem:[#allocation2 + $0x118] sm:$0xff]
    %v163 = vld [vmem:[#allocation2 + $0x120] sm:$0xff]
    %v164 = vld [vmem:[#allocation2 + $0x128] sm:$0xff]
    %v165 = vld [vmem:[#allocation2 + $0x130] sm:$0xff]
    %v166 = vld [vmem:[#allocation2 + $0x138] sm:$0xff]
    %v167 = vld [vmem:[#allocation2 + $0x140] sm:$0xff]
    %v168 = vld [vmem:[#allocation2 + $0x148] sm:$0xff]
    %v169 = vld [vmem:[#allocation2 + $0x150] sm:$0xff]
    %v170 = vld [vmem:[#allocation2 + $0x158] sm:$0xff]
    %v171 = vld [vmem:[#allocation2 + $0x160] sm:$0xff]
    %v172 = vld [vmem:[#allocation2 + $0x168] sm:$0xff]
    %v173 = vld [vmem:[#allocation2 + $0x170] sm:$0xff]
    %v174 = vld [vmem:[#allocation2 + $0x178] sm:$0xff]
    %v175 = vld [vmem:[#allocation2 + $0x180] sm:$0xff]
    %v176 = vld [vmem:[#allocation2 + $0x188] sm:$0xff]
    %v177 = vld [vmem:[#allocation2 + $0x190] sm:$0xff]
    %v178 = vld [vmem:[#allocation2 + $0x198] sm:$0xff]
    %v179 = vld [vmem:[#allocation2 + $0x1a0] sm:$0xff]
    %v180 = vld [vmem:[#allocation2 + $0x1a8] sm:$0xff]
    %v181 = vld [vmem:[#allocation2 + $0x1b0] sm:$0xff]
    %v182 = vld [vmem:[#allocation2 + $0x1b8] sm:$0xff]
    %v183 = vld [vmem:[#allocation2 + $0x1c0] sm:$0xff]
    %v184 = vld [vmem:[#allocation2 + $0x1c8] sm:$0xff]
    %v185 = vld [vmem:[#allocation2 + $0x1d0] sm:$0xff]
    %v186 = vld [vmem:[#allocation2 + $0x1d8] sm:$0xff]
    %v187 = vld [vmem:[#allocation2 + $0x1e0] sm:$0xff]
    %v188 = vld [vmem:[#allocation2 + $0x1e8] sm:$0xff]
    %v189 = vld [vmem:[#allocation2 + $0x1f0] sm:$0xff]
    %v190 = vld [vmem:[#allocation2 + $0x1f8] sm:$0xff]
    %v191 = vld [vmem:[#allocation2 + $0x200] sm:$0xff]
    %v192 = vld [vmem:[#allocation2 + $0x208] sm:$0xff]
    %v193 = vld [vmem:[#allocation2 + $0x210] sm:$0xff]
    %v194 = vld [vmem:[#allocation2 + $0x218] sm:$0xff]
    %v195 = vld [vmem:[#allocation2 + $0x220] sm:$0xff]
    %v196 = vld [vmem:[#allocation2 + $0x228] sm:$0xff]
    %v197 = vld [vmem:[#allocation2 + $0x230] sm:$0xff]
    %v198 = vld [vmem:[#allocation2 + $0x238] sm:$0xff]
    %v199 = vld [vmem:[#allocation2 + $0x240] sm:$0xff]
    %v200 = vld [vmem:[#allocation2 + $0x248] sm:$0xff]
    %v201 = vld [vmem:[#allocation2 + $0x250] sm:$0xff]
    %v202 = vld [vmem:[#allocation2 + $0x258] sm:$0xff]
    %v203 = vld [vmem:[#allocation2 + $0x260] sm:$0xff]
    %v204 = vld [vmem:[#allocation2 + $0x268] sm:$0xff]
    %v205 = vld [vmem:[#allocation2 + $0x270] sm:$0xff]
    %v206 = vld [vmem:[#allocation2 + $0x278] sm:$0xff]
    %v207 = vld [vmem:[#allocation2 + $0x280] sm:$0xff]
    %v208 = vld [vmem:[#allocation2 + $0x288] sm:$0xff]
    %v209 = vld [vmem:[#allocation2 + $0x290] sm:$0xff]
    %v210 = vld [vmem:[#allocation2 + $0x298] sm:$0xff]
    %v211 = vld [vmem:[#allocation2 + $0x2a0] sm:$0xff]
    %v212 = vld [vmem:[#allocation2 + $0x2a8] sm:$0xff]
    %v213 = vld [vmem:[#allocation2 + $0x2b0] sm:$0xff]
    %v214 = vld [vmem:[#allocation2 + $0x2b8] sm:$0xff]
    %v215 = vld [vmem:[#allocation2 + $0x2c0] sm:$0xff]
    %v216 = vld [vmem:[#allocation2 + $0x2c8] sm:$0xff]
    %v217 = vld [vmem:[#allocation2 + $0x2d0] sm:$0xff]
    %v218 = vld [vmem:[#allocation2 + $0x2d8] sm:$0xff]
    %v219 = vld [vmem:[#allocation2 + $0x2e0] sm:$0xff]
    %v220 = vld [vmem:[#allocation2 + $0x2e8] sm:$0xff]
    %v221 = vld [vmem:[#allocation2 + $0x2f0] sm:$0xff]
    %v222 = vld [vmem:[#allocation2 + $0x2f8] sm:$0xff]
    %v223 = vld [vmem:[#allocation2 + $0x300] sm:$0xff]
    %v224 = vld [vmem:[#allocation2 + $0x308] sm:$0xff]
    %v225 = vld [vmem:[#allocation2 + $0x310] sm:$0xff]
    %v226 = vld [vmem:[#allocation2 + $0x318] sm:$0xff]
    %v227 = vld [vmem:[#allocation2 + $0x320] sm:$0xff]
    %v228 = vld [vmem:[#allocation2 + $0x328] sm:$0xff]
    %v229 = vld [vmem:[#allocation2 + $0x330] sm:$0xff]
    %v230 = vld [vmem:[#allocation2 + $0x338] sm:$0xff]
    %v231 = vld [vmem:[#allocation2 + $0x340] sm:$0xff]
    %v232 = vld [vmem:[#allocation2 + $0x348] sm:$0xff]
    %v233 = vld [vmem:[#allocation2 + $0x350] sm:$0xff]
    %v234 = vld [vmem:[#allocation2 + $0x358] sm:$0xff]
    %v235 = vld [vmem:[#allocation2 + $0x360] sm:$0xff]
    %v236 = vld [vmem:[#allocation2 + $0x368] sm:$0xff]
    %v237 = vld [vmem:[#allocation2 + $0x370] sm:$0xff]
    %v238 = vld [vmem:[#allocation2 + $0x378] sm:$0xff]
    %v239 = vld [vmem:[#allocation2 + $0x380] sm:$0xff]
    %v240 = vld [vmem:[#allocation2 + $0x388] sm:$0xff]
    %v241 = vld [vmem:[#allocation2 + $0x390] sm:$0xff]
    %v242 = vld [vmem:[#allocation2 + $0x398] sm:$0xff]
    %v243 = vld [vmem:[#allocation2 + $0x3a0] sm:$0xff]
    %v244 = vld [vmem:[#allocation2 + $0x3a8] sm:$0xff]
    %v245 = vld [vmem:[#allocation2 + $0x3b0] sm:$0xff]
    %v246 = vld [vmem:[#allocation2 + $0x3b8] sm:$0xff]
    %v247 = vld [vmem:[#allocation2 + $0x3c0] sm:$0xff]
    %v248 = vld [vmem:[#allocation2 + $0x3c8] sm:$0xff]
    %v249 = vld [vmem:[#allocation2 + $0x3d0] sm:$0xff]
    %v250 = vld [vmem:[#allocation2 + $0x3d8] sm:$0xff]
    %v251 = vld [vmem:[#allocation2 + $0x3e0] sm:$0xff]
    %v252 = vld [vmem:[#allocation2 + $0x3e8] sm:$0xff]
    %v253 = vld [vmem:[#allocation2 + $0x3f0] sm:$0xff]
    %v254 = vld [vmem:[#allocation2 + $0x3f8] sm:$0xff]
    %v255 = vld [vmem:[#allocation2 + $0x400] sm:$0xff]
    %v256 = vld [vmem:[#allocation2 + $0x408] sm:$0xff]
    %v257 = vld [vmem:[#allocation2 + $0x410] sm:$0xff]
    %v258 = vld [vmem:[#allocation2 + $0x418] sm:$0xff]
    %v259 = vld [vmem:[#allocation2 + $0x420] sm:$0xff]
    %v260 = vld [vmem:[#allocation2 + $0x428] sm:$0xff]
    %v261 = vld [vmem:[#allocation2 + $0x430] sm:$0xff]
    %v262 = vld [vmem:[#allocation2 + $0x438] sm:$0xff]
    %v263 = vld [vmem:[#allocation2 + $0x440] sm:$0xff]
    %v264 = vld [vmem:[#allocation2 + $0x448] sm:$0xff]
    %v265 = vld [vmem:[#allocation2 + $0x450] sm:$0xff]
    %v266 = vld [vmem:[#allocation2 + $0x458] sm:$0xff]
    %v267 = vld [vmem:[#allocation2 + $0x460] sm:$0xff]
    %v268 = vld [vmem:[#allocation2 + $0x468] sm:$0xff]
    %v269 = vld [vmem:[#allocation2 + $0x470] sm:$0xff]
    %v270 = vld [vmem:[#allocation2 + $0x478] sm:$0xff]
    %v271 = vld [vmem:[#allocation2 + $0x480] sm:$0xff]
    %v272 = vld [vmem:[#allocation2 + $0x488] sm:$0xff]
    %v273 = vld [vmem:[#allocation2 + $0x490] sm:$0xff]
    %v274 = vld [vmem:[#allocation2 + $0x498] sm:$0xff]
    %v275 = vld [vmem:[#allocation2 + $0x4a0] sm:$0xff]
    %v276 = vld [vmem:[#allocation2 + $0x4a8] sm:$0xff]
    %v277 = vld [vmem:[#allocation2 + $0x4b0] sm:$0xff]
    %v278 = vld [vmem:[#allocation2 + $0x4b8] sm:$0xff]
    %v279 = vld [vmem:[#allocation2 + $0x4c0] sm:$0xff]
    %v280 = vld [vmem:[#allocation2 + $0x4c8] sm:$0xff]
    %v281 = vld [vmem:[#allocation2 + $0x4d0] sm:$0xff]
    %v282 = vld [vmem:[#allocation2 + $0x4d8] sm:$0xff]
    %v283 = vld [vmem:[#allocation2 + $0x4e0] sm:$0xff]
    %v284 = vld [vmem:[#allocation2 + $0x4e8] sm:$0xff]
    %v285 = vld [vmem:[#allocation2 + $0x4f0] sm:$0xff]
    %v286 = vld [vmem:[#allocation2 + $0x4f8] sm:$0xff]
    %v287 = vld [vmem:[#allocation2 + $0x500] sm:$0xff]
    %v288 = vld [vmem:[#allocation2 + $0x508] sm:$0xff]
    %v289 = vld [vmem:[#allocation2 + $0x510] sm:$0xff]
    %v290 = vld [vmem:[#allocation2 + $0x518] sm:$0xff]
    %v291 = vld [vmem:[#allocation2 + $0x520] sm:$0xff]
    %v292 = vld [vmem:[#allocation2 + $0x528] sm:$0xff]
    %v293 = vld [vmem:[#allocation2 + $0x530] sm:$0xff]
    %v294 = vld [vmem:[#allocation2 + $0x538] sm:$0xff]
    %v295 = vld [vmem:[#allocation2 + $0x540] sm:$0xff]
    %v296 = vld [vmem:[#allocation2 + $0x548] sm:$0xff]
    %v297 = vld [vmem:[#allocation2 + $0x550] sm:$0xff]
    %v298 = vld [vmem:[#allocation2 + $0x558] sm:$0xff]
    %v299 = vld [vmem:[#allocation2 + $0x560] sm:$0xff]
    %v300 = vld [vmem:[#allocation2 + $0x568] sm:$0xff]
    %v301 = vld [vmem:[#allocation2 + $0x570] sm:$0xff]
    %v302 = vld [vmem:[#allocation2 + $0x578] sm:$0xff]
    %v303 = vld [vmem:[#allocation2 + $0x580] sm:$0xff]
    %v304 = vld [vmem:[#allocation2 + $0x588] sm:$0xff]
    %v305 = vld [vmem:[#allocation2 + $0x590] sm:$0xff]
    %v306 = vld [vmem:[#allocation2 + $0x598] sm:$0xff]
    %v307 = vld [vmem:[#allocation2 + $0x5a0] sm:$0xff]
    %v308 = vld [vmem:[#allocation2 + $0x5a8] sm:$0xff]
    %v309 = vld [vmem:[#allocation2 + $0x5b0] sm:$0xff]
    %v310 = vld [vmem:[#allocation2 + $0x5b8] sm:$0xff]
    %v311 = vld [vmem:[#allocation2 + $0x5c0] sm:$0xff]
    %v312 = vld [vmem:[#allocation2 + $0x5c8] sm:$0xff]
    %v313 = vld [vmem:[#allocation2 + $0x5d0] sm:$0xff]
    %v314 = vld [vmem:[#allocation2 + $0x5d8] sm:$0xff]
    %v315 = vld [vmem:[#allocation2 + $0x5e0] sm:$0xff]
    %v316 = vld [vmem:[#allocation2 + $0x5e8] sm:$0xff]
    %v317 = vld [vmem:[#allocation2 + $0x5f0] sm:$0xff]
    %v318 = vld [vmem:[#allocation2 + $0x5f8] sm:$0xff]
    %v319 = vld [vmem:[#allocation2 + $0x600] sm:$0xff]
    %v320 = vld [vmem:[#allocation2 + $0x608] sm:$0xff]
    %v321 = vld [vmem:[#allocation2 + $0x610] sm:$0xff]
    %v322 = vld [vmem:[#allocation2 + $0x618] sm:$0xff]
    %v323 = vld [vmem:[#allocation2 + $0x620] sm:$0xff]
    %v324 = vld [vmem:[#allocation2 + $0x628] sm:$0xff]
    %v325 = vld [vmem:[#allocation2 + $0x630] sm:$0xff]
    %v326 = vld [vmem:[#allocation2 + $0x638] sm:$0xff]
    %v327 = vld [vmem:[#allocation2 + $0x640] sm:$0xff]
    %v328 = vld [vmem:[#allocation2 + $0x648] sm:$0xff]
    %v329 = vld [vmem:[#allocation2 + $0x650] sm:$0xff]
    %v330 = vld [vmem:[#allocation2 + $0x658] sm:$0xff]
    %v331 = vld [vmem:[#allocation2 + $0x660] sm:$0xff]
    %v332 = vld [vmem:[#allocation2 + $0x668] sm:$0xff]
    %v333 = vld [vmem:[#allocation2 + $0x670] sm:$0xff]
    %v334 = vld [vmem:[#allocation2 + $0x678] sm:$0xff]
    %v335 = vld [vmem:[#allocation2 + $0x680] sm:$0xff]
    %v336 = vld [vmem:[#allocation2 + $0x688] sm:$0xff]
    %v337 = vld [vmem:[#allocation2 + $0x690] sm:$0xff]
    %v338 = vld [vmem:[#allocation2 + $0x698] sm:$0xff]
    %v339 = vld [vmem:[#allocation2 + $0x6a0] sm:$0xff]
    %v340 = vld [vmem:[#allocation2 + $0x6a8] sm:$0xff]
    %v341 = vld [vmem:[#allocation2 + $0x6b0] sm:$0xff]
    %v342 = vld [vmem:[#allocation2 + $0x6b8] sm:$0xff]
    %v343 = vld [vmem:[#allocation2 + $0x6c0] sm:$0xff]
    %v344 = vld [vmem:[#allocation2 + $0x6c8] sm:$0xff]
    %v345 = vld [vmem:[#allocation2 + $0x6d0] sm:$0xff]
    %v346 = vld [vmem:[#allocation2 + $0x6d8] sm:$0xff]
    %v347 = vld [vmem:[#allocation2 + $0x6e0] sm:$0xff]
    %v348 = vld [vmem:[#allocation2 + $0x6e8] sm:$0xff]
    %v349 = vld [vmem:[#allocation2 + $0x6f0] sm:$0xff]
    %v350 = vld [vmem:[#allocation2 + $0x6f8] sm:$0xff]
    %v351 = vld [vmem:[#allocation2 + $0x700] sm:$0xff]
    %v352 = vld [vmem:[#allocation2 + $0x708] sm:$0xff]
    %v353 = vld [vmem:[#allocation2 + $0x710] sm:$0xff]
    %v354 = vld [vmem:[#allocation2 + $0x718] sm:$0xff]
    %v355 = vld [vmem:[#allocation2 + $0x720] sm:$0xff]
    %v356 = vld [vmem:[#allocation2 + $0x728] sm:$0xff]
    %v357 = vld [vmem:[#allocation2 + $0x730] sm:$0xff]
    %v358 = vld [vmem:[#allocation2 + $0x738] sm:$0xff]
    %v359 = vld [vmem:[#allocation2 + $0x740] sm:$0xff]
    %v360 = vld [vmem:[#allocation2 + $0x748] sm:$0xff]
    %v361 = vld [vmem:[#allocation2 + $0x750] sm:$0xff]
    %v362 = vld [vmem:[#allocation2 + $0x758] sm:$0xff]
    %v363 = vld [vmem:[#allocation2 + $0x760] sm:$0xff]
    %v364 = vld [vmem:[#allocation2 + $0x768] sm:$0xff]
    %v365 = vld [vmem:[#allocation2 + $0x770] sm:$0xff]
    %v366 = vld [vmem:[#allocation2 + $0x778] sm:$0xff]
    %v367 = vld [vmem:[#allocation2 + $0x780] sm:$0xff]
    %v368 = vld [vmem:[#allocation2 + $0x788] sm:$0xff]
    %v369 = vld [vmem:[#allocation2 + $0x790] sm:$0xff]
    %v370 = vld [vmem:[#allocation2 + $0x798] sm:$0xff]
    %v371 = vld [vmem:[#allocation2 + $0x7a0] sm:$0xff]
    %v372 = vld [vmem:[#allocation2 + $0x7a8] sm:$0xff]
    %v373 = vld [vmem:[#allocation2 + $0x7b0] sm:$0xff]
    %v374 = vld [vmem:[#allocation2 + $0x7b8] sm:$0xff]
    %v375 = vld [vmem:[#allocation2 + $0x7c0] sm:$0xff]
    %v376 = vld [vmem:[#allocation2 + $0x7c8] sm:$0xff]
    %v377 = vld [vmem:[#allocation2 + $0x7d0] sm:$0xff]
    %v378 = vld [vmem:[#allocation2 + $0x7d8] sm:$0xff]
    %v379 = vld [vmem:[#allocation2 + $0x7e0] sm:$0xff]
    %v380 = vld [vmem:[#allocation2 + $0x7e8] sm:$0xff]
    %v381 = vld [vmem:[#allocation2 + $0x7f0] sm:$0xff]
    %v382 = vld [vmem:[#allocation2 + $0x7f8] sm:$0xff]
    %v383 = vld [vmem:[#allocation2 + $0x800] sm:$0xff]
    %v384 = vld [vmem:[#allocation2 + $0x808] sm:$0xff]
    %v385 = vld [vmem:[#allocation2 + $0x810] sm:$0xff]
    %v386 = vld [vmem:[#allocation2 + $0x818] sm:$0xff]
    %v387 = vld [vmem:[#allocation2 + $0x820] sm:$0xff]
    %v388 = vld [vmem:[#allocation2 + $0x828] sm:$0xff]
    %v389 = vld [vmem:[#allocation2 + $0x830] sm:$0xff]
    %v390 = vld [vmem:[#allocation2 + $0x838] sm:$0xff]
    %v391 = vld [vmem:[#allocation2 + $0x840] sm:$0xff]
    %v392 = vld [vmem:[#allocation2 + $0x848] sm:$0xff]
    %v393 = vld [vmem:[#allocation2 + $0x850] sm:$0xff]
    %v394 = vld [vmem:[#allocation2 + $0x858] sm:$0xff]
    %v395 = vld [vmem:[#allocation2 + $0x860] sm:$0xff]
    %v396 = vld [vmem:[#allocation2 + $0x868] sm:$0xff]
    %v397 = vld [vmem:[#allocation2 + $0x870] sm:$0xff]
    %v398 = vld [vmem:[#allocation2 + $0x878] sm:$0xff]
    %v399 = vld [vmem:[#allocation2 + $0x880] sm:$0xff]
    %v400 = vld [vmem:[#allocation2 + $0x888] sm:$0xff]
    %v401 = vld [vmem:[#allocation2 + $0x890] sm:$0xff]
    %v402 = vld [vmem:[#allocation2 + $0x898] sm:$0xff]
    %v403 = vld [vmem:[#allocation2 + $0x8a0] sm:$0xff]
    %v404 = vld [vmem:[#allocation2 + $0x8a8] sm:$0xff]
    %v405 = vld [vmem:[#allocation2 + $0x8b0] sm:$0xff]
    %v406 = vld [vmem:[#allocation2 + $0x8b8] sm:$0xff]
    %v407 = vld [vmem:[#allocation2 + $0x8c0] sm:$0xff]
    %v408 = vld [vmem:[#allocation2 + $0x8c8] sm:$0xff]
    %v409 = vld [vmem:[#allocation2 + $0x8d0] sm:$0xff]
    %v410 = vld [vmem:[#allocation2 + $0x8d8] sm:$0xff]
    %v411 = vld [vmem:[#allocation2 + $0x8e0] sm:$0xff]
    %v412 = vld [vmem:[#allocation2 + $0x8e8] sm:$0xff]
    %v413 = vld [vmem:[#allocation2 + $0x8f0] sm:$0xff]
    %v414 = vld [vmem:[#allocation2 + $0x8f8] sm:$0xff]
    %v415 = vld [vmem:[#allocation2 + $0x900] sm:$0xff]
    %v416 = vld [vmem:[#allocation2 + $0x908] sm:$0xff]
    %v417 = vld [vmem:[#allocation2 + $0x910] sm:$0xff]
    %v418 = vld [vmem:[#allocation2 + $0x918] sm:$0xff]
    %v419 = vld [vmem:[#allocation2 + $0x920] sm:$0xff]
    %v420 = vld [vmem:[#allocation2 + $0x928] sm:$0xff]
    %v421 = vld [vmem:[#allocation2 + $0x930] sm:$0xff]
    %v422 = vld [vmem:[#allocation2 + $0x938] sm:$0xff]
    %v423 = vld [vmem:[#allocation2 + $0x940] sm:$0xff]
    %v424 = vld [vmem:[#allocation2 + $0x948] sm:$0xff]
    %v425 = vld [vmem:[#allocation2 + $0x950] sm:$0xff]
    %v426 = vld [vmem:[#allocation2 + $0x958] sm:$0xff]
    %v427 = vld [vmem:[#allocation2 + $0x960] sm:$0xff]
    %v428 = vld [vmem:[#allocation2 + $0x968] sm:$0xff]
    %v429 = vld [vmem:[#allocation2 + $0x970] sm:$0xff]
    %v430 = vld [vmem:[#allocation2 + $0x978] sm:$0xff]
    %v431 = vld [vmem:[#allocation2 + $0x980] sm:$0xff]
    %v432 = vld [vmem:[#allocation2 + $0x988] sm:$0xff]
    %v433 = vld [vmem:[#allocation2 + $0x990] sm:$0xff]
    %v434 = vld [vmem:[#allocation2 + $0x998] sm:$0xff]
    %v435 = vld [vmem:[#allocation2 + $0x9a0] sm:$0xff]
    %v436 = vld [vmem:[#allocation2 + $0x9a8] sm:$0xff]
    %v437 = vld [vmem:[#allocation2 + $0x9b0] sm:$0xff]
    %v438 = vld [vmem:[#allocation2 + $0x9b8] sm:$0xff]
    %v439 = vld [vmem:[#allocation2 + $0x9c0] sm:$0xff]
    %v440 = vld [vmem:[#allocation2 + $0x9c8] sm:$0xff]
    %v441 = vld [vmem:[#allocation2 + $0x9d0] sm:$0xff]
    %v442 = vld [vmem:[#allocation2 + $0x9d8] sm:$0xff]
    %v443 = vld [vmem:[#allocation2 + $0x9e0] sm:$0xff]
    %v444 = vld [vmem:[#allocation2 + $0x9e8] sm:$0xff]
    %v445 = vld [vmem:[#allocation2 + $0x9f0] sm:$0xff]
    %v446 = vld [vmem:[#allocation2 + $0x9f8] sm:$0xff]
    %v447 = vld [vmem:[#allocation2 + $0xa00] sm:$0xff]
    %v448 = vld [vmem:[#allocation2 + $0xa08] sm:$0xff]
    %v449 = vld [vmem:[#allocation2 + $0xa10] sm:$0xff]
    %v450 = vld [vmem:[#allocation2 + $0xa18] sm:$0xff]
    %v451 = vld [vmem:[#allocation2 + $0xa20] sm:$0xff]
    %v452 = vld [vmem:[#allocation2 + $0xa28] sm:$0xff]
    %v453 = vld [vmem:[#allocation2 + $0xa30] sm:$0xff]
    %v454 = vld [vmem:[#allocation2 + $0xa38] sm:$0xff]
    %v455 = vld [vmem:[#allocation2 + $0xa40] sm:$0xff]
    %v456 = vld [vmem:[#allocation2 + $0xa48] sm:$0xff]
    %v457 = vld [vmem:[#allocation2 + $0xa50] sm:$0xff]
    %v458 = vld [vmem:[#allocation2 + $0xa58] sm:$0xff]
    %v459 = vld [vmem:[#allocation2 + $0xa60] sm:$0xff]
    %v460 = vld [vmem:[#allocation2 + $0xa68] sm:$0xff]
    %v461 = vld [vmem:[#allocation2 + $0xa70] sm:$0xff]
    %v462 = vld [vmem:[#allocation2 + $0xa78] sm:$0xff]
    %v463 = vld [vmem:[#allocation2 + $0xa80] sm:$0xff]
    %v464 = vld [vmem:[#allocation2 + $0xa88] sm:$0xff]
    %v465 = vld [vmem:[#allocation2 + $0xa90] sm:$0xff]
    %v466 = vld [vmem:[#allocation2 + $0xa98] sm:$0xff]
    %v467 = vld [vmem:[#allocation2 + $0xaa0] sm:$0xff]
    %v468 = vld [vmem:[#allocation2 + $0xaa8] sm:$0xff]
    %v469 = vld [vmem:[#allocation2 + $0xab0] sm:$0xff]
    %v470 = vld [vmem:[#allocation2 + $0xab8] sm:$0xff]
    %v471 = vld [vmem:[#allocation2 + $0xac0] sm:$0xff]
    %v472 = vld [vmem:[#allocation2 + $0xac8] sm:$0xff]
    %v473 = vld [vmem:[#allocation2 + $0xad0] sm:$0xff]
    %v474 = vld [vmem:[#allocation2 + $0xad8] sm:$0xff]
    %v475 = vld [vmem:[#allocation2 + $0xae0] sm:$0xff]
    %v476 = vld [vmem:[#allocation2 + $0xae8] sm:$0xff]
    %v477 = vld [vmem:[#allocation2 + $0xaf0] sm:$0xff]
    %v478 = vld [vmem:[#allocation2 + $0xaf8] sm:$0xff]
    %v479 = vld [vmem:[#allocation2 + $0xb00] sm:$0xff]
    %v480 = vld [vmem:[#allocation2 + $0xb08] sm:$0xff]
    %v481 = vld [vmem:[#allocation2 + $0xb10] sm:$0xff]
    %v482 = vld [vmem:[#allocation2 + $0xb18] sm:$0xff]
    %v483 = vld [vmem:[#allocation2 + $0xb20] sm:$0xff]
    %v484 = vld [vmem:[#allocation2 + $0xb28] sm:$0xff]
    %v485 = vld [vmem:[#allocation2 + $0xb30] sm:$0xff]
    %v486 = vld [vmem:[#allocation2 + $0xb38] sm:$0xff]
    %v487 = vld [vmem:[#allocation2 + $0xb40] sm:$0xff]
    %v488 = vld [vmem:[#allocation2 + $0xb48] sm:$0xff]
    %v489 = vld [vmem:[#allocation2 + $0xb50] sm:$0xff]
    %v490 = vld [vmem:[#allocation2 + $0xb58] sm:$0xff]
    %v491 = vld [vmem:[#allocation2 + $0xb60] sm:$0xff]
    %v492 = vld [vmem:[#allocation2 + $0xb68] sm:$0xff]
    %v493 = vld [vmem:[#allocation2 + $0xb70] sm:$0xff]
    %v494 = vld [vmem:[#allocation2 + $0xb78] sm:$0xff]
    %v495 = vld [vmem:[#allocation2 + $0xb80] sm:$0xff]
    %v496 = vld [vmem:[#allocation2 + $0xb88] sm:$0xff]
    %v497 = vld [vmem:[#allocation2 + $0xb90] sm:$0xff]
    %v498 = vld [vmem:[#allocation2 + $0xb98] sm:$0xff]
    %v499 = vld [vmem:[#allocation2 + $0xba0] sm:$0xff]
    %v500 = vld [vmem:[#allocation2 + $0xba8] sm:$0xff]
    %v501 = vld [vmem:[#allocation2 + $0xbb0] sm:$0xff]
    %v502 = vld [vmem:[#allocation2 + $0xbb8] sm:$0xff]
    %v503 = vld [vmem:[#allocation2 + $0xbc0] sm:$0xff]
    %v504 = vld [vmem:[#allocation2 + $0xbc8] sm:$0xff]
    %v505 = vld [vmem:[#allocation2 + $0xbd0] sm:$0xff]
    %v506 = vld [vmem:[#allocation2 + $0xbd8] sm:$0xff]
    %v507 = vld [vmem:[#allocation2 + $0xbe0] sm:$0xff]
    %v508 = vld [vmem:[#allocation2 + $0xbe8] sm:$0xff]
    %v509 = vld [vmem:[#allocation2 + $0xbf0] sm:$0xff]
    %v510 = vld [vmem:[#allocation2 + $0xbf8] sm:$0xff]
    %v511 = vld [vmem:[#allocation2 + $0xc00] sm:$0xff]
    %v512 = vld [vmem:[#allocation2 + $0xc08] sm:$0xff]
    %v513 = vld [vmem:[#allocation2 + $0xc10] sm:$0xff]
    %v514 = vld [vmem:[#allocation2 + $0xc18] sm:$0xff]
    %v515 = vld [vmem:[#allocation2 + $0xc20] sm:$0xff]
    %v516 = vld [vmem:[#allocation2 + $0xc28] sm:$0xff]
    %v517 = vld [vmem:[#allocation2 + $0xc30] sm:$0xff]
    %v518 = vld [vmem:[#allocation2 + $0xc38] sm:$0xff]
    %v519 = vld [vmem:[#allocation2 + $0xc40] sm:$0xff]
    %v520 = vld [vmem:[#allocation2 + $0xc48] sm:$0xff]
    %v521 = vld [vmem:[#allocation2 + $0xc50] sm:$0xff]
    %v522 = vld [vmem:[#allocation2 + $0xc58] sm:$0xff]
    %v523 = vld [vmem:[#allocation2 + $0xc60] sm:$0xff]
    %v524 = vld [vmem:[#allocation2 + $0xc68] sm:$0xff]
    %v525 = vld [vmem:[#allocation2 + $0xc70] sm:$0xff]
    %v526 = vld [vmem:[#allocation2 + $0xc78] sm:$0xff]
    %v527 = vld [vmem:[#allocation2 + $0xc80] sm:$0xff]
    %v528 = vld [vmem:[#allocation2 + $0xc88] sm:$0xff]
    %v529 = vld [vmem:[#allocation2 + $0xc90] sm:$0xff]
    %v530 = vld [vmem:[#allocation2 + $0xc98] sm:$0xff]
    %v531 = vld [vmem:[#allocation2 + $0xca0] sm:$0xff]
    %v532 = vld [vmem:[#allocation2 + $0xca8] sm:$0xff]
    %v533 = vld [vmem:[#allocation2 + $0xcb0] sm:$0xff]
    %v534 = vld [vmem:[#allocation2 + $0xcb8] sm:$0xff]
    %v535 = vld [vmem:[#allocation2 + $0xcc0] sm:$0xff]
    %v536 = vld [vmem:[#allocation2 + $0xcc8] sm:$0xff]
    %v537 = vld [vmem:[#allocation2 + $0xcd0] sm:$0xff]
    %v538 = vld [vmem:[#allocation2 + $0xcd8] sm:$0xff]
    %v539 = vld [vmem:[#allocation2 + $0xce0] sm:$0xff]
    %v540 = vld [vmem:[#allocation2 + $0xce8] sm:$0xff]
    %v541 = vld [vmem:[#allocation2 + $0xcf0] sm:$0xff]
    %v542 = vld [vmem:[#allocation2 + $0xcf8] sm:$0xff]
    %v543 = vld [vmem:[#allocation2 + $0xd00] sm:$0xff]
    %v544 = vld [vmem:[#allocation2 + $0xd08] sm:$0xff]
    %v545 = vld [vmem:[#allocation2 + $0xd10] sm:$0xff]
    %v546 = vld [vmem:[#allocation2 + $0xd18] sm:$0xff]
    %v547 = vld [vmem:[#allocation2 + $0xd20] sm:$0xff]
    %v548 = vld [vmem:[#allocation2 + $0xd28] sm:$0xff]
    %v549 = vld [vmem:[#allocation2 + $0xd30] sm:$0xff]
    %v550 = vld [vmem:[#allocation2 + $0xd38] sm:$0xff]
    %v551 = vld [vmem:[#allocation2 + $0xd40] sm:$0xff]
    %v552 = vld [vmem:[#allocation2 + $0xd48] sm:$0xff]
    %v553 = vld [vmem:[#allocation2 + $0xd50] sm:$0xff]
    %v554 = vld [vmem:[#allocation2 + $0xd58] sm:$0xff]
    %v555 = vld [vmem:[#allocation2 + $0xd60] sm:$0xff]
    %v556 = vld [vmem:[#allocation2 + $0xd68] sm:$0xff]
    %v557 = vld [vmem:[#allocation2 + $0xd70] sm:$0xff]
    %v558 = vld [vmem:[#allocation2 + $0xd78] sm:$0xff]
    %v559 = vld [vmem:[#allocation2 + $0xd80] sm:$0xff]
    %v560 = vld [vmem:[#allocation2 + $0xd88] sm:$0xff]
    %v561 = vld [vmem:[#allocation2 + $0xd90] sm:$0xff]
    %v562 = vld [vmem:[#allocation2 + $0xd98] sm:$0xff]
    %v563 = vld [vmem:[#allocation2 + $0xda0] sm:$0xff]
    %v564 = vld [vmem:[#allocation2 + $0xda8] sm:$0xff]
    %v565 = vld [vmem:[#allocation2 + $0xdb0] sm:$0xff]
    %v566 = vld [vmem:[#allocation2 + $0xdb8] sm:$0xff]
    %v567 = vld [vmem:[#allocation2 + $0xdc0] sm:$0xff]
    %v568 = vld [vmem:[#allocation2 + $0xdc8] sm:$0xff]
    %v569 = vld [vmem:[#allocation2 + $0xdd0] sm:$0xff]
    %v570 = vld [vmem:[#allocation2 + $0xdd8] sm:$0xff]
    %v571 = vld [vmem:[#allocation2 + $0xde0] sm:$0xff]
    %v572 = vld [vmem:[#allocation2 + $0xde8] sm:$0xff]
    %v573 = vld [vmem:[#allocation2 + $0xdf0] sm:$0xff]
    %v574 = vld [vmem:[#allocation2 + $0xdf8] sm:$0xff]
    %v575 = vld [vmem:[#allocation2 + $0xe00] sm:$0xff]
    %v576 = vld [vmem:[#allocation2 + $0xe08] sm:$0xff]
    %v577 = vld [vmem:[#allocation2 + $0xe10] sm:$0xff]
    %v578 = vld [vmem:[#allocation2 + $0xe18] sm:$0xff]
    %v579 = vld [vmem:[#allocation2 + $0xe20] sm:$0xff]
    %v580 = vld [vmem:[#allocation2 + $0xe28] sm:$0xff]
    %v581 = vld [vmem:[#allocation2 + $0xe30] sm:$0xff]
    %v582 = vld [vmem:[#allocation2 + $0xe38] sm:$0xff]
    %v583 = vld [vmem:[#allocation2 + $0xe40] sm:$0xff]
    %v584 = vld [vmem:[#allocation2 + $0xe48] sm:$0xff]
    %v585 = vld [vmem:[#allocation2 + $0xe50] sm:$0xff]
    %v586 = vld [vmem:[#allocation2 + $0xe58] sm:$0xff]
    %v587 = vld [vmem:[#allocation2 + $0xe60] sm:$0xff]
    %v588 = vld [vmem:[#allocation2 + $0xe68] sm:$0xff]
    %v589 = vld [vmem:[#allocation2 + $0xe70] sm:$0xff]
    %v590 = vld [vmem:[#allocation2 + $0xe78] sm:$0xff]
    %v591 = vld [vmem:[#allocation2 + $0xe80] sm:$0xff]
    %v592 = vld [vmem:[#allocation2 + $0xe88] sm:$0xff]
    %v593 = vld [vmem:[#allocation2 + $0xe90] sm:$0xff]
    %v594 = vld [vmem:[#allocation2 + $0xe98] sm:$0xff]
    %v595 = vld [vmem:[#allocation2 + $0xea0] sm:$0xff]
    %v596 = vld [vmem:[#allocation2 + $0xea8] sm:$0xff]
    %v597 = vld [vmem:[#allocation2 + $0xeb0] sm:$0xff]
    %v598 = vld [vmem:[#allocation2 + $0xeb8] sm:$0xff]
    %v599 = vld [vmem:[#allocation2 + $0xec0] sm:$0xff]
    %v600 = vld [vmem:[#allocation2 + $0xec8] sm:$0xff]
    %v601 = vld [vmem:[#allocation2 + $0xed0] sm:$0xff]
    %v602 = vld [vmem:[#allocation2 + $0xed8] sm:$0xff]
    %v603 = vld [vmem:[#allocation2 + $0xee0] sm:$0xff]
    %v604 = vld [vmem:[#allocation2 + $0xee8] sm:$0xff]
    %v605 = vld [vmem:[#allocation2 + $0xef0] sm:$0xff]
    %v606 = vld [vmem:[#allocation2 + $0xef8] sm:$0xff]
    %v607 = vld [vmem:[#allocation2 + $0xf00] sm:$0xff]
    %v608 = vld [vmem:[#allocation2 + $0xf08] sm:$0xff]
    %v609 = vld [vmem:[#allocation2 + $0xf10] sm:$0xff]
    %v610 = vld [vmem:[#allocation2 + $0xf18] sm:$0xff]
    %v611 = vld [vmem:[#allocation2 + $0xf20] sm:$0xff]
    %v612 = vld [vmem:[#allocation2 + $0xf28] sm:$0xff]
    %v613 = vld [vmem:[#allocation2 + $0xf30] sm:$0xff]
    %v614 = vld [vmem:[#allocation2 + $0xf38] sm:$0xff]
    %v615 = vld [vmem:[#allocation2 + $0xf40] sm:$0xff]
    %v616 = vld [vmem:[#allocation2 + $0xf48] sm:$0xff]
    %v617 = vld [vmem:[#allocation2 + $0xf50] sm:$0xff]
    %v618 = vld [vmem:[#allocation2 + $0xf58] sm:$0xff]
    %v619 = vld [vmem:[#allocation2 + $0xf60] sm:$0xff]
    %v620 = vld [vmem:[#allocation2 + $0xf68] sm:$0xff]
    %v621 = vld [vmem:[#allocation2 + $0xf70] sm:$0xff]
    %v622 = vld [vmem:[#allocation2 + $0xf78] sm:$0xff]
    %v623 = vld [vmem:[#allocation2 + $0xf80] sm:$0xff]
    %v624 = vld [vmem:[#allocation2 + $0xf88] sm:$0xff]
    %v625 = vld [vmem:[#allocation2 + $0xf90] sm:$0xff]
    %v626 = vld [vmem:[#allocation2 + $0xf98] sm:$0xff]
    %v627 = vld [vmem:[#allocation2 + $0xfa0] sm:$0xff]
    %v628 = vld [vmem:[#allocation2 + $0xfa8] sm:$0xff]
    %v629 = vld [vmem:[#allocation2 + $0xfb0] sm:$0xff]
    %v630 = vld [vmem:[#allocation2 + $0xfb8] sm:$0xff]
    %v631 = vld [vmem:[#allocation2 + $0xfc0] sm:$0xff]
    %v632 = vld [vmem:[#allocation2 + $0xfc8] sm:$0xff]
    %v633 = vld [vmem:[#allocation2 + $0xfd0] sm:$0xff]
    %v634 = vld [vmem:[#allocation2 + $0xfd8] sm:$0xff]
    %v635 = vld [vmem:[#allocation2 + $0xfe0] sm:$0xff]
    %v636 = vld [vmem:[#allocation2 + $0xfe8] sm:$0xff]
    %v637 = vld [vmem:[#allocation2 + $0xff0] sm:$0xff]
    %v638 = vld [vmem:[#allocation2 + $0xff8] sm:$0xff]
    %v639 = vld [vmem:[#allocation5] sm:$0xff]
    %v641 = vlaneseq
    %v642 = vshrl.u32 %v641, 7
    %v643 = vsub.s32 0, %v642
    %v644 = vrot.slane %v639, %v643
    %v645 = vlaneseq
    %v646 = vshrl.u32 %v645, 7
    %v647 = vsub.s32 1, %v646
    %v648 = vrot.slane %v639, %v647
    %v649 = vlaneseq
    %v650 = vshrl.u32 %v649, 7
    %v651 = vsub.s32 2, %v650
    %v652 = vrot.slane %v639, %v651
    %v653 = vlaneseq
    %v654 = vshrl.u32 %v653, 7
    %v655 = vsub.s32 3, %v654
    %v656 = vrot.slane %v639, %v655
    %v657 = vlaneseq
    %v658 = vshrl.u32 %v657, 7
    %v659 = vsub.s32 4, %v658
    %v660 = vrot.slane %v639, %v659
    %v661 = vlaneseq
    %v662 = vshrl.u32 %v661, 7
    %v663 = vsub.s32 5, %v662
    %v664 = vrot.slane %v639, %v663
    %v665 = vlaneseq
    %v666 = vshrl.u32 %v665, 7
    %v667 = vsub.s32 6, %v666
    %v668 = vrot.slane %v639, %v667
    %v669 = vlaneseq
    %v670 = vshrl.u32 %v669, 7
    %v671 = vsub.s32 7, %v670
    %v672 = vrot.slane %v639, %v671
    %v1193 = vunpack.c.l.b16 %v127
    %v1194 = vunpack.c.h.b16 %v127
    %v1195 = vunpack.c.l.b16 %v128
    %v1196 = vunpack.c.h.b16 %v128
    %v1197 = vunpack.c.l.b16 %v129
    %v1198 = vunpack.c.h.b16 %v129
    %v1199 = vunpack.c.l.b16 %v130
    %v1200 = vunpack.c.h.b16 %v130
    %v1201 = vunpack.c.l.b16 %v131
    %v1202 = vunpack.c.h.b16 %v131
    %v1203 = vunpack.c.l.b16 %v132
    %v1204 = vunpack.c.h.b16 %v132
    %v1205 = vunpack.c.l.b16 %v133
    %v1206 = vunpack.c.h.b16 %v133
    %v1207 = vunpack.c.l.b16 %v134
    %v1208 = vunpack.c.h.b16 %v134
    %v1209 = vunpack.c.l.b16 %v135
    %v1210 = vunpack.c.h.b16 %v135
    %v1211 = vunpack.c.l.b16 %v136
    %v1212 = vunpack.c.h.b16 %v136
    %v1213 = vunpack.c.l.b16 %v137
    %v1214 = vunpack.c.h.b16 %v137
    %v1215 = vunpack.c.l.b16 %v138
    %v1216 = vunpack.c.h.b16 %v138
    %v1217 = vunpack.c.l.b16 %v139
    %v1218 = vunpack.c.h.b16 %v139
    %v1219 = vunpack.c.l.b16 %v140
    %v1220 = vunpack.c.h.b16 %v140
    %v1221 = vunpack.c.l.b16 %v141
    %v1222 = vunpack.c.h.b16 %v141
    %v1223 = vunpack.c.l.b16 %v142
    %v1224 = vunpack.c.h.b16 %v142
    %v1225 = vunpack.c.l.b16 %v143
    %v1226 = vunpack.c.h.b16 %v143
    %v1227 = vunpack.c.l.b16 %v144
    %v1228 = vunpack.c.h.b16 %v144
    %v1229 = vunpack.c.l.b16 %v145
    %v1230 = vunpack.c.h.b16 %v145
    %v1231 = vunpack.c.l.b16 %v146
    %v1232 = vunpack.c.h.b16 %v146
    %v1233 = vunpack.c.l.b16 %v147
    %v1234 = vunpack.c.h.b16 %v147
    %v1235 = vunpack.c.l.b16 %v148
    %v1236 = vunpack.c.h.b16 %v148
    %v1237 = vunpack.c.l.b16 %v149
    %v1238 = vunpack.c.h.b16 %v149
    %v1239 = vunpack.c.l.b16 %v150
    %v1240 = vunpack.c.h.b16 %v150
    %v1241 = vunpack.c.l.b16 %v151
    %v1242 = vunpack.c.h.b16 %v151
    %v1243 = vunpack.c.l.b16 %v152
    %v1244 = vunpack.c.h.b16 %v152
    %v1245 = vunpack.c.l.b16 %v153
    %v1246 = vunpack.c.h.b16 %v153
    %v1247 = vunpack.c.l.b16 %v154
    %v1248 = vunpack.c.h.b16 %v154
    %v1249 = vunpack.c.l.b16 %v155
    %v1250 = vunpack.c.h.b16 %v155
    %v1251 = vunpack.c.l.b16 %v156
    %v1252 = vunpack.c.h.b16 %v156
    %v1253 = vunpack.c.l.b16 %v157
    %v1254 = vunpack.c.h.b16 %v157
    %v1255 = vunpack.c.l.b16 %v158
    %v1256 = vunpack.c.h.b16 %v158
    %v1257 = vunpack.c.l.b16 %v159
    %v1258 = vunpack.c.h.b16 %v159
    %v1259 = vunpack.c.l.b16 %v160
    %v1260 = vunpack.c.h.b16 %v160
    %v1261 = vunpack.c.l.b16 %v161
    %v1262 = vunpack.c.h.b16 %v161
    %v1263 = vunpack.c.l.b16 %v162
    %v1264 = vunpack.c.h.b16 %v162
    %v1265 = vunpack.c.l.b16 %v163
    %v1266 = vunpack.c.h.b16 %v163
    %v1267 = vunpack.c.l.b16 %v164
    %v1268 = vunpack.c.h.b16 %v164
    %v1269 = vunpack.c.l.b16 %v165
    %v1270 = vunpack.c.h.b16 %v165
    %v1271 = vunpack.c.l.b16 %v166
    %v1272 = vunpack.c.h.b16 %v166
    %v1273 = vunpack.c.l.b16 %v167
    %v1274 = vunpack.c.h.b16 %v167
    %v1275 = vunpack.c.l.b16 %v168
    %v1276 = vunpack.c.h.b16 %v168
    %v1277 = vunpack.c.l.b16 %v169
    %v1278 = vunpack.c.h.b16 %v169
    %v1279 = vunpack.c.l.b16 %v170
    %v1280 = vunpack.c.h.b16 %v170
    %v1281 = vunpack.c.l.b16 %v171
    %v1282 = vunpack.c.h.b16 %v171
    %v1283 = vunpack.c.l.b16 %v172
    %v1284 = vunpack.c.h.b16 %v172
    %v1285 = vunpack.c.l.b16 %v173
    %v1286 = vunpack.c.h.b16 %v173
    %v1287 = vunpack.c.l.b16 %v174
    %v1288 = vunpack.c.h.b16 %v174
    %v1289 = vunpack.c.l.b16 %v175
    %v1290 = vunpack.c.h.b16 %v175
    %v1291 = vunpack.c.l.b16 %v176
    %v1292 = vunpack.c.h.b16 %v176
    %v1293 = vunpack.c.l.b16 %v177
    %v1294 = vunpack.c.h.b16 %v177
    %v1295 = vunpack.c.l.b16 %v178
    %v1296 = vunpack.c.h.b16 %v178
    %v1297 = vunpack.c.l.b16 %v179
    %v1298 = vunpack.c.h.b16 %v179
    %v1299 = vunpack.c.l.b16 %v180
    %v1300 = vunpack.c.h.b16 %v180
    %v1301 = vunpack.c.l.b16 %v181
    %v1302 = vunpack.c.h.b16 %v181
    %v1303 = vunpack.c.l.b16 %v182
    %v1304 = vunpack.c.h.b16 %v182
    %v1305 = vunpack.c.l.b16 %v183
    %v1306 = vunpack.c.h.b16 %v183
    %v1307 = vunpack.c.l.b16 %v184
    %v1308 = vunpack.c.h.b16 %v184
    %v1309 = vunpack.c.l.b16 %v185
    %v1310 = vunpack.c.h.b16 %v185
    %v1311 = vunpack.c.l.b16 %v186
    %v1312 = vunpack.c.h.b16 %v186
    %v1313 = vunpack.c.l.b16 %v187
    %v1314 = vunpack.c.h.b16 %v187
    %v1315 = vunpack.c.l.b16 %v188
    %v1316 = vunpack.c.h.b16 %v188
    %v1317 = vunpack.c.l.b16 %v189
    %v1318 = vunpack.c.h.b16 %v189
    %v1319 = vunpack.c.l.b16 %v190
    %v1320 = vunpack.c.h.b16 %v190
    %v1321 = vunpack.c.l.b16 %v191
    %v1322 = vunpack.c.h.b16 %v191
    %v1323 = vunpack.c.l.b16 %v192
    %v1324 = vunpack.c.h.b16 %v192
    %v1325 = vunpack.c.l.b16 %v193
    %v1326 = vunpack.c.h.b16 %v193
    %v1327 = vunpack.c.l.b16 %v194
    %v1328 = vunpack.c.h.b16 %v194
    %v1329 = vunpack.c.l.b16 %v195
    %v1330 = vunpack.c.h.b16 %v195
    %v1331 = vunpack.c.l.b16 %v196
    %v1332 = vunpack.c.h.b16 %v196
    %v1333 = vunpack.c.l.b16 %v197
    %v1334 = vunpack.c.h.b16 %v197
    %v1335 = vunpack.c.l.b16 %v198
    %v1336 = vunpack.c.h.b16 %v198
    %v1337 = vunpack.c.l.b16 %v199
    %v1338 = vunpack.c.h.b16 %v199
    %v1339 = vunpack.c.l.b16 %v200
    %v1340 = vunpack.c.h.b16 %v200
    %v1341 = vunpack.c.l.b16 %v201
    %v1342 = vunpack.c.h.b16 %v201
    %v1343 = vunpack.c.l.b16 %v202
    %v1344 = vunpack.c.h.b16 %v202
    %v1345 = vunpack.c.l.b16 %v203
    %v1346 = vunpack.c.h.b16 %v203
    %v1347 = vunpack.c.l.b16 %v204
    %v1348 = vunpack.c.h.b16 %v204
    %v1349 = vunpack.c.l.b16 %v205
    %v1350 = vunpack.c.h.b16 %v205
    %v1351 = vunpack.c.l.b16 %v206
    %v1352 = vunpack.c.h.b16 %v206
    %v1353 = vunpack.c.l.b16 %v207
    %v1354 = vunpack.c.h.b16 %v207
    %v1355 = vunpack.c.l.b16 %v208
    %v1356 = vunpack.c.h.b16 %v208
    %v1357 = vunpack.c.l.b16 %v209
    %v1358 = vunpack.c.h.b16 %v209
    %v1359 = vunpack.c.l.b16 %v210
    %v1360 = vunpack.c.h.b16 %v210
    %v1361 = vunpack.c.l.b16 %v211
    %v1362 = vunpack.c.h.b16 %v211
    %v1363 = vunpack.c.l.b16 %v212
    %v1364 = vunpack.c.h.b16 %v212
    %v1365 = vunpack.c.l.b16 %v213
    %v1366 = vunpack.c.h.b16 %v213
    %v1367 = vunpack.c.l.b16 %v214
    %v1368 = vunpack.c.h.b16 %v214
    %v1369 = vunpack.c.l.b16 %v215
    %v1370 = vunpack.c.h.b16 %v215
    %v1371 = vunpack.c.l.b16 %v216
    %v1372 = vunpack.c.h.b16 %v216
    %v1373 = vunpack.c.l.b16 %v217
    %v1374 = vunpack.c.h.b16 %v217
    %v1375 = vunpack.c.l.b16 %v218
    %v1376 = vunpack.c.h.b16 %v218
    %v1377 = vunpack.c.l.b16 %v219
    %v1378 = vunpack.c.h.b16 %v219
    %v1379 = vunpack.c.l.b16 %v220
    %v1380 = vunpack.c.h.b16 %v220
    %v1381 = vunpack.c.l.b16 %v221
    %v1382 = vunpack.c.h.b16 %v221
    %v1383 = vunpack.c.l.b16 %v222
    %v1384 = vunpack.c.h.b16 %v222
    %v1385 = vunpack.c.l.b16 %v223
    %v1386 = vunpack.c.h.b16 %v223
    %v1387 = vunpack.c.l.b16 %v224
    %v1388 = vunpack.c.h.b16 %v224
    %v1389 = vunpack.c.l.b16 %v225
    %v1390 = vunpack.c.h.b16 %v225
    %v1391 = vunpack.c.l.b16 %v226
    %v1392 = vunpack.c.h.b16 %v226
    %v1393 = vunpack.c.l.b16 %v227
    %v1394 = vunpack.c.h.b16 %v227
    %v1395 = vunpack.c.l.b16 %v228
    %v1396 = vunpack.c.h.b16 %v228
    %v1397 = vunpack.c.l.b16 %v229
    %v1398 = vunpack.c.h.b16 %v229
    %v1399 = vunpack.c.l.b16 %v230
    %v1400 = vunpack.c.h.b16 %v230
    %v1401 = vunpack.c.l.b16 %v231
    %v1402 = vunpack.c.h.b16 %v231
    %v1403 = vunpack.c.l.b16 %v232
    %v1404 = vunpack.c.h.b16 %v232
    %v1405 = vunpack.c.l.b16 %v233
    %v1406 = vunpack.c.h.b16 %v233
    %v1407 = vunpack.c.l.b16 %v234
    %v1408 = vunpack.c.h.b16 %v234
    %v1409 = vunpack.c.l.b16 %v235
    %v1410 = vunpack.c.h.b16 %v235
    %v1411 = vunpack.c.l.b16 %v236
    %v1412 = vunpack.c.h.b16 %v236
    %v1413 = vunpack.c.l.b16 %v237
    %v1414 = vunpack.c.h.b16 %v237
    %v1415 = vunpack.c.l.b16 %v238
    %v1416 = vunpack.c.h.b16 %v238
    %v1417 = vunpack.c.l.b16 %v239
    %v1418 = vunpack.c.h.b16 %v239
    %v1419 = vunpack.c.l.b16 %v240
    %v1420 = vunpack.c.h.b16 %v240
    %v1421 = vunpack.c.l.b16 %v241
    %v1422 = vunpack.c.h.b16 %v241
    %v1423 = vunpack.c.l.b16 %v242
    %v1424 = vunpack.c.h.b16 %v242
    %v1425 = vunpack.c.l.b16 %v243
    %v1426 = vunpack.c.h.b16 %v243
    %v1427 = vunpack.c.l.b16 %v244
    %v1428 = vunpack.c.h.b16 %v244
    %v1429 = vunpack.c.l.b16 %v245
    %v1430 = vunpack.c.h.b16 %v245
    %v1431 = vunpack.c.l.b16 %v246
    %v1432 = vunpack.c.h.b16 %v246
    %v1433 = vunpack.c.l.b16 %v247
    %v1434 = vunpack.c.h.b16 %v247
    %v1435 = vunpack.c.l.b16 %v248
    %v1436 = vunpack.c.h.b16 %v248
    %v1437 = vunpack.c.l.b16 %v249
    %v1438 = vunpack.c.h.b16 %v249
    %v1439 = vunpack.c.l.b16 %v250
    %v1440 = vunpack.c.h.b16 %v250
    %v1441 = vunpack.c.l.b16 %v251
    %v1442 = vunpack.c.h.b16 %v251
    %v1443 = vunpack.c.l.b16 %v252
    %v1444 = vunpack.c.h.b16 %v252
    %v1445 = vunpack.c.l.b16 %v253
    %v1446 = vunpack.c.h.b16 %v253
    %v1447 = vunpack.c.l.b16 %v254
    %v1448 = vunpack.c.h.b16 %v254
    %v1449 = vunpack.c.l.b16 %v255
    %v1450 = vunpack.c.h.b16 %v255
    %v1451 = vunpack.c.l.b16 %v256
    %v1452 = vunpack.c.h.b16 %v256
    %v1453 = vunpack.c.l.b16 %v257
    %v1454 = vunpack.c.h.b16 %v257
    %v1455 = vunpack.c.l.b16 %v258
    %v1456 = vunpack.c.h.b16 %v258
    %v1457 = vunpack.c.l.b16 %v259
    %v1458 = vunpack.c.h.b16 %v259
    %v1459 = vunpack.c.l.b16 %v260
    %v1460 = vunpack.c.h.b16 %v260
    %v1461 = vunpack.c.l.b16 %v261
    %v1462 = vunpack.c.h.b16 %v261
    %v1463 = vunpack.c.l.b16 %v262
    %v1464 = vunpack.c.h.b16 %v262
    %v1465 = vunpack.c.l.b16 %v263
    %v1466 = vunpack.c.h.b16 %v263
    %v1467 = vunpack.c.l.b16 %v264
    %v1468 = vunpack.c.h.b16 %v264
    %v1469 = vunpack.c.l.b16 %v265
    %v1470 = vunpack.c.h.b16 %v265
    %v1471 = vunpack.c.l.b16 %v266
    %v1472 = vunpack.c.h.b16 %v266
    %v1473 = vunpack.c.l.b16 %v267
    %v1474 = vunpack.c.h.b16 %v267
    %v1475 = vunpack.c.l.b16 %v268
    %v1476 = vunpack.c.h.b16 %v268
    %v1477 = vunpack.c.l.b16 %v269
    %v1478 = vunpack.c.h.b16 %v269
    %v1479 = vunpack.c.l.b16 %v270
    %v1480 = vunpack.c.h.b16 %v270
    %v1481 = vunpack.c.l.b16 %v271
    %v1482 = vunpack.c.h.b16 %v271
    %v1483 = vunpack.c.l.b16 %v272
    %v1484 = vunpack.c.h.b16 %v272
    %v1485 = vunpack.c.l.b16 %v273
    %v1486 = vunpack.c.h.b16 %v273
    %v1487 = vunpack.c.l.b16 %v274
    %v1488 = vunpack.c.h.b16 %v274
    %v1489 = vunpack.c.l.b16 %v275
    %v1490 = vunpack.c.h.b16 %v275
    %v1491 = vunpack.c.l.b16 %v276
    %v1492 = vunpack.c.h.b16 %v276
    %v1493 = vunpack.c.l.b16 %v277
    %v1494 = vunpack.c.h.b16 %v277
    %v1495 = vunpack.c.l.b16 %v278
    %v1496 = vunpack.c.h.b16 %v278
    %v1497 = vunpack.c.l.b16 %v279
    %v1498 = vunpack.c.h.b16 %v279
    %v1499 = vunpack.c.l.b16 %v280
    %v1500 = vunpack.c.h.b16 %v280
    %v1501 = vunpack.c.l.b16 %v281
    %v1502 = vunpack.c.h.b16 %v281
    %v1503 = vunpack.c.l.b16 %v282
    %v1504 = vunpack.c.h.b16 %v282
    %v1505 = vunpack.c.l.b16 %v283
    %v1506 = vunpack.c.h.b16 %v283
    %v1507 = vunpack.c.l.b16 %v284
    %v1508 = vunpack.c.h.b16 %v284
    %v1509 = vunpack.c.l.b16 %v285
    %v1510 = vunpack.c.h.b16 %v285
    %v1511 = vunpack.c.l.b16 %v286
    %v1512 = vunpack.c.h.b16 %v286
    %v1513 = vunpack.c.l.b16 %v287
    %v1514 = vunpack.c.h.b16 %v287
    %v1515 = vunpack.c.l.b16 %v288
    %v1516 = vunpack.c.h.b16 %v288
    %v1517 = vunpack.c.l.b16 %v289
    %v1518 = vunpack.c.h.b16 %v289
    %v1519 = vunpack.c.l.b16 %v290
    %v1520 = vunpack.c.h.b16 %v290
    %v1521 = vunpack.c.l.b16 %v291
    %v1522 = vunpack.c.h.b16 %v291
    %v1523 = vunpack.c.l.b16 %v292
    %v1524 = vunpack.c.h.b16 %v292
    %v1525 = vunpack.c.l.b16 %v293
    %v1526 = vunpack.c.h.b16 %v293
    %v1527 = vunpack.c.l.b16 %v294
    %v1528 = vunpack.c.h.b16 %v294
    %v1529 = vunpack.c.l.b16 %v295
    %v1530 = vunpack.c.h.b16 %v295
    %v1531 = vunpack.c.l.b16 %v296
    %v1532 = vunpack.c.h.b16 %v296
    %v1533 = vunpack.c.l.b16 %v297
    %v1534 = vunpack.c.h.b16 %v297
    %v1535 = vunpack.c.l.b16 %v298
    %v1536 = vunpack.c.h.b16 %v298
    %v1537 = vunpack.c.l.b16 %v299
    %v1538 = vunpack.c.h.b16 %v299
    %v1539 = vunpack.c.l.b16 %v300
    %v1540 = vunpack.c.h.b16 %v300
    %v1541 = vunpack.c.l.b16 %v301
    %v1542 = vunpack.c.h.b16 %v301
    %v1543 = vunpack.c.l.b16 %v302
    %v1544 = vunpack.c.h.b16 %v302
    %v1545 = vunpack.c.l.b16 %v303
    %v1546 = vunpack.c.h.b16 %v303
    %v1547 = vunpack.c.l.b16 %v304
    %v1548 = vunpack.c.h.b16 %v304
    %v1549 = vunpack.c.l.b16 %v305
    %v1550 = vunpack.c.h.b16 %v305
    %v1551 = vunpack.c.l.b16 %v306
    %v1552 = vunpack.c.h.b16 %v306
    %v1553 = vunpack.c.l.b16 %v307
    %v1554 = vunpack.c.h.b16 %v307
    %v1555 = vunpack.c.l.b16 %v308
    %v1556 = vunpack.c.h.b16 %v308
    %v1557 = vunpack.c.l.b16 %v309
    %v1558 = vunpack.c.h.b16 %v309
    %v1559 = vunpack.c.l.b16 %v310
    %v1560 = vunpack.c.h.b16 %v310
    %v1561 = vunpack.c.l.b16 %v311
    %v1562 = vunpack.c.h.b16 %v311
    %v1563 = vunpack.c.l.b16 %v312
    %v1564 = vunpack.c.h.b16 %v312
    %v1565 = vunpack.c.l.b16 %v313
    %v1566 = vunpack.c.h.b16 %v313
    %v1567 = vunpack.c.l.b16 %v314
    %v1568 = vunpack.c.h.b16 %v314
    %v1569 = vunpack.c.l.b16 %v315
    %v1570 = vunpack.c.h.b16 %v315
    %v1571 = vunpack.c.l.b16 %v316
    %v1572 = vunpack.c.h.b16 %v316
    %v1573 = vunpack.c.l.b16 %v317
    %v1574 = vunpack.c.h.b16 %v317
    %v1575 = vunpack.c.l.b16 %v318
    %v1576 = vunpack.c.h.b16 %v318
    %v1577 = vunpack.c.l.b16 %v319
    %v1578 = vunpack.c.h.b16 %v319
    %v1579 = vunpack.c.l.b16 %v320
    %v1580 = vunpack.c.h.b16 %v320
    %v1581 = vunpack.c.l.b16 %v321
    %v1582 = vunpack.c.h.b16 %v321
    %v1583 = vunpack.c.l.b16 %v322
    %v1584 = vunpack.c.h.b16 %v322
    %v1585 = vunpack.c.l.b16 %v323
    %v1586 = vunpack.c.h.b16 %v323
    %v1587 = vunpack.c.l.b16 %v324
    %v1588 = vunpack.c.h.b16 %v324
    %v1589 = vunpack.c.l.b16 %v325
    %v1590 = vunpack.c.h.b16 %v325
    %v1591 = vunpack.c.l.b16 %v326
    %v1592 = vunpack.c.h.b16 %v326
    %v1593 = vunpack.c.l.b16 %v327
    %v1594 = vunpack.c.h.b16 %v327
    %v1595 = vunpack.c.l.b16 %v328
    %v1596 = vunpack.c.h.b16 %v328
    %v1597 = vunpack.c.l.b16 %v329
    %v1598 = vunpack.c.h.b16 %v329
    %v1599 = vunpack.c.l.b16 %v330
    %v1600 = vunpack.c.h.b16 %v330
    %v1601 = vunpack.c.l.b16 %v331
    %v1602 = vunpack.c.h.b16 %v331
    %v1603 = vunpack.c.l.b16 %v332
    %v1604 = vunpack.c.h.b16 %v332
    %v1605 = vunpack.c.l.b16 %v333
    %v1606 = vunpack.c.h.b16 %v333
    %v1607 = vunpack.c.l.b16 %v334
    %v1608 = vunpack.c.h.b16 %v334
    %v1609 = vunpack.c.l.b16 %v335
    %v1610 = vunpack.c.h.b16 %v335
    %v1611 = vunpack.c.l.b16 %v336
    %v1612 = vunpack.c.h.b16 %v336
    %v1613 = vunpack.c.l.b16 %v337
    %v1614 = vunpack.c.h.b16 %v337
    %v1615 = vunpack.c.l.b16 %v338
    %v1616 = vunpack.c.h.b16 %v338
    %v1617 = vunpack.c.l.b16 %v339
    %v1618 = vunpack.c.h.b16 %v339
    %v1619 = vunpack.c.l.b16 %v340
    %v1620 = vunpack.c.h.b16 %v340
    %v1621 = vunpack.c.l.b16 %v341
    %v1622 = vunpack.c.h.b16 %v341
    %v1623 = vunpack.c.l.b16 %v342
    %v1624 = vunpack.c.h.b16 %v342
    %v1625 = vunpack.c.l.b16 %v343
    %v1626 = vunpack.c.h.b16 %v343
    %v1627 = vunpack.c.l.b16 %v344
    %v1628 = vunpack.c.h.b16 %v344
    %v1629 = vunpack.c.l.b16 %v345
    %v1630 = vunpack.c.h.b16 %v345
    %v1631 = vunpack.c.l.b16 %v346
    %v1632 = vunpack.c.h.b16 %v346
    %v1633 = vunpack.c.l.b16 %v347
    %v1634 = vunpack.c.h.b16 %v347
    %v1635 = vunpack.c.l.b16 %v348
    %v1636 = vunpack.c.h.b16 %v348
    %v1637 = vunpack.c.l.b16 %v349
    %v1638 = vunpack.c.h.b16 %v349
    %v1639 = vunpack.c.l.b16 %v350
    %v1640 = vunpack.c.h.b16 %v350
    %v1641 = vunpack.c.l.b16 %v351
    %v1642 = vunpack.c.h.b16 %v351
    %v1643 = vunpack.c.l.b16 %v352
    %v1644 = vunpack.c.h.b16 %v352
    %v1645 = vunpack.c.l.b16 %v353
    %v1646 = vunpack.c.h.b16 %v353
    %v1647 = vunpack.c.l.b16 %v354
    %v1648 = vunpack.c.h.b16 %v354
    %v1649 = vunpack.c.l.b16 %v355
    %v1650 = vunpack.c.h.b16 %v355
    %v1651 = vunpack.c.l.b16 %v356
    %v1652 = vunpack.c.h.b16 %v356
    %v1653 = vunpack.c.l.b16 %v357
    %v1654 = vunpack.c.h.b16 %v357
    %v1655 = vunpack.c.l.b16 %v358
    %v1656 = vunpack.c.h.b16 %v358
    %v1657 = vunpack.c.l.b16 %v359
    %v1658 = vunpack.c.h.b16 %v359
    %v1659 = vunpack.c.l.b16 %v360
    %v1660 = vunpack.c.h.b16 %v360
    %v1661 = vunpack.c.l.b16 %v361
    %v1662 = vunpack.c.h.b16 %v361
    %v1663 = vunpack.c.l.b16 %v362
    %v1664 = vunpack.c.h.b16 %v362
    %v1665 = vunpack.c.l.b16 %v363
    %v1666 = vunpack.c.h.b16 %v363
    %v1667 = vunpack.c.l.b16 %v364
    %v1668 = vunpack.c.h.b16 %v364
    %v1669 = vunpack.c.l.b16 %v365
    %v1670 = vunpack.c.h.b16 %v365
    %v1671 = vunpack.c.l.b16 %v366
    %v1672 = vunpack.c.h.b16 %v366
    %v1673 = vunpack.c.l.b16 %v367
    %v1674 = vunpack.c.h.b16 %v367
    %v1675 = vunpack.c.l.b16 %v368
    %v1676 = vunpack.c.h.b16 %v368
    %v1677 = vunpack.c.l.b16 %v369
    %v1678 = vunpack.c.h.b16 %v369
    %v1679 = vunpack.c.l.b16 %v370
    %v1680 = vunpack.c.h.b16 %v370
    %v1681 = vunpack.c.l.b16 %v371
    %v1682 = vunpack.c.h.b16 %v371
    %v1683 = vunpack.c.l.b16 %v372
    %v1684 = vunpack.c.h.b16 %v372
    %v1685 = vunpack.c.l.b16 %v373
    %v1686 = vunpack.c.h.b16 %v373
    %v1687 = vunpack.c.l.b16 %v374
    %v1688 = vunpack.c.h.b16 %v374
    %v1689 = vunpack.c.l.b16 %v375
    %v1690 = vunpack.c.h.b16 %v375
    %v1691 = vunpack.c.l.b16 %v376
    %v1692 = vunpack.c.h.b16 %v376
    %v1693 = vunpack.c.l.b16 %v377
    %v1694 = vunpack.c.h.b16 %v377
    %v1695 = vunpack.c.l.b16 %v378
    %v1696 = vunpack.c.h.b16 %v378
    %v1697 = vunpack.c.l.b16 %v379
    %v1698 = vunpack.c.h.b16 %v379
    %v1699 = vunpack.c.l.b16 %v380
    %v1700 = vunpack.c.h.b16 %v380
    %v1701 = vunpack.c.l.b16 %v381
    %v1702 = vunpack.c.h.b16 %v381
    %v1703 = vunpack.c.l.b16 %v382
    %v1704 = vunpack.c.h.b16 %v382
    %v1705 = vunpack.c.l.b16 %v383
    %v1706 = vunpack.c.h.b16 %v383
    %v1707 = vunpack.c.l.b16 %v384
    %v1708 = vunpack.c.h.b16 %v384
    %v1709 = vunpack.c.l.b16 %v385
    %v1710 = vunpack.c.h.b16 %v385
    %v1711 = vunpack.c.l.b16 %v386
    %v1712 = vunpack.c.h.b16 %v386
    %v1713 = vunpack.c.l.b16 %v387
    %v1714 = vunpack.c.h.b16 %v387
    %v1715 = vunpack.c.l.b16 %v388
    %v1716 = vunpack.c.h.b16 %v388
    %v1717 = vunpack.c.l.b16 %v389
    %v1718 = vunpack.c.h.b16 %v389
    %v1719 = vunpack.c.l.b16 %v390
    %v1720 = vunpack.c.h.b16 %v390
    %v1721 = vunpack.c.l.b16 %v391
    %v1722 = vunpack.c.h.b16 %v391
    %v1723 = vunpack.c.l.b16 %v392
    %v1724 = vunpack.c.h.b16 %v392
    %v1725 = vunpack.c.l.b16 %v393
    %v1726 = vunpack.c.h.b16 %v393
    %v1727 = vunpack.c.l.b16 %v394
    %v1728 = vunpack.c.h.b16 %v394
    %v1729 = vunpack.c.l.b16 %v395
    %v1730 = vunpack.c.h.b16 %v395
    %v1731 = vunpack.c.l.b16 %v396
    %v1732 = vunpack.c.h.b16 %v396
    %v1733 = vunpack.c.l.b16 %v397
    %v1734 = vunpack.c.h.b16 %v397
    %v1735 = vunpack.c.l.b16 %v398
    %v1736 = vunpack.c.h.b16 %v398
    %v1737 = vunpack.c.l.b16 %v399
    %v1738 = vunpack.c.h.b16 %v399
    %v1739 = vunpack.c.l.b16 %v400
    %v1740 = vunpack.c.h.b16 %v400
    %v1741 = vunpack.c.l.b16 %v401
    %v1742 = vunpack.c.h.b16 %v401
    %v1743 = vunpack.c.l.b16 %v402
    %v1744 = vunpack.c.h.b16 %v402
    %v1745 = vunpack.c.l.b16 %v403
    %v1746 = vunpack.c.h.b16 %v403
    %v1747 = vunpack.c.l.b16 %v404
    %v1748 = vunpack.c.h.b16 %v404
    %v1749 = vunpack.c.l.b16 %v405
    %v1750 = vunpack.c.h.b16 %v405
    %v1751 = vunpack.c.l.b16 %v406
    %v1752 = vunpack.c.h.b16 %v406
    %v1753 = vunpack.c.l.b16 %v407
    %v1754 = vunpack.c.h.b16 %v407
    %v1755 = vunpack.c.l.b16 %v408
    %v1756 = vunpack.c.h.b16 %v408
    %v1757 = vunpack.c.l.b16 %v409
    %v1758 = vunpack.c.h.b16 %v409
    %v1759 = vunpack.c.l.b16 %v410
    %v1760 = vunpack.c.h.b16 %v410
    %v1761 = vunpack.c.l.b16 %v411
    %v1762 = vunpack.c.h.b16 %v411
    %v1763 = vunpack.c.l.b16 %v412
    %v1764 = vunpack.c.h.b16 %v412
    %v1765 = vunpack.c.l.b16 %v413
    %v1766 = vunpack.c.h.b16 %v413
    %v1767 = vunpack.c.l.b16 %v414
    %v1768 = vunpack.c.h.b16 %v414
    %v1769 = vunpack.c.l.b16 %v415
    %v1770 = vunpack.c.h.b16 %v415
    %v1771 = vunpack.c.l.b16 %v416
    %v1772 = vunpack.c.h.b16 %v416
    %v1773 = vunpack.c.l.b16 %v417
    %v1774 = vunpack.c.h.b16 %v417
    %v1775 = vunpack.c.l.b16 %v418
    %v1776 = vunpack.c.h.b16 %v418
    %v1777 = vunpack.c.l.b16 %v419
    %v1778 = vunpack.c.h.b16 %v419
    %v1779 = vunpack.c.l.b16 %v420
    %v1780 = vunpack.c.h.b16 %v420
    %v1781 = vunpack.c.l.b16 %v421
    %v1782 = vunpack.c.h.b16 %v421
    %v1783 = vunpack.c.l.b16 %v422
    %v1784 = vunpack.c.h.b16 %v422
    %v1785 = vunpack.c.l.b16 %v423
    %v1786 = vunpack.c.h.b16 %v423
    %v1787 = vunpack.c.l.b16 %v424
    %v1788 = vunpack.c.h.b16 %v424
    %v1789 = vunpack.c.l.b16 %v425
    %v1790 = vunpack.c.h.b16 %v425
    %v1791 = vunpack.c.l.b16 %v426
    %v1792 = vunpack.c.h.b16 %v426
    %v1793 = vunpack.c.l.b16 %v427
    %v1794 = vunpack.c.h.b16 %v427
    %v1795 = vunpack.c.l.b16 %v428
    %v1796 = vunpack.c.h.b16 %v428
    %v1797 = vunpack.c.l.b16 %v429
    %v1798 = vunpack.c.h.b16 %v429
    %v1799 = vunpack.c.l.b16 %v430
    %v1800 = vunpack.c.h.b16 %v430
    %v1801 = vunpack.c.l.b16 %v431
    %v1802 = vunpack.c.h.b16 %v431
    %v1803 = vunpack.c.l.b16 %v432
    %v1804 = vunpack.c.h.b16 %v432
    %v1805 = vunpack.c.l.b16 %v433
    %v1806 = vunpack.c.h.b16 %v433
    %v1807 = vunpack.c.l.b16 %v434
    %v1808 = vunpack.c.h.b16 %v434
    %v1809 = vunpack.c.l.b16 %v435
    %v1810 = vunpack.c.h.b16 %v435
    %v1811 = vunpack.c.l.b16 %v436
    %v1812 = vunpack.c.h.b16 %v436
    %v1813 = vunpack.c.l.b16 %v437
    %v1814 = vunpack.c.h.b16 %v437
    %v1815 = vunpack.c.l.b16 %v438
    %v1816 = vunpack.c.h.b16 %v438
    %v1817 = vunpack.c.l.b16 %v439
    %v1818 = vunpack.c.h.b16 %v439
    %v1819 = vunpack.c.l.b16 %v440
    %v1820 = vunpack.c.h.b16 %v440
    %v1821 = vunpack.c.l.b16 %v441
    %v1822 = vunpack.c.h.b16 %v441
    %v1823 = vunpack.c.l.b16 %v442
    %v1824 = vunpack.c.h.b16 %v442
    %v1825 = vunpack.c.l.b16 %v443
    %v1826 = vunpack.c.h.b16 %v443
    %v1827 = vunpack.c.l.b16 %v444
    %v1828 = vunpack.c.h.b16 %v444
    %v1829 = vunpack.c.l.b16 %v445
    %v1830 = vunpack.c.h.b16 %v445
    %v1831 = vunpack.c.l.b16 %v446
    %v1832 = vunpack.c.h.b16 %v446
    %v1833 = vunpack.c.l.b16 %v447
    %v1834 = vunpack.c.h.b16 %v447
    %v1835 = vunpack.c.l.b16 %v448
    %v1836 = vunpack.c.h.b16 %v448
    %v1837 = vunpack.c.l.b16 %v449
    %v1838 = vunpack.c.h.b16 %v449
    %v1839 = vunpack.c.l.b16 %v450
    %v1840 = vunpack.c.h.b16 %v450
    %v1841 = vunpack.c.l.b16 %v451
    %v1842 = vunpack.c.h.b16 %v451
    %v1843 = vunpack.c.l.b16 %v452
    %v1844 = vunpack.c.h.b16 %v452
    %v1845 = vunpack.c.l.b16 %v453
    %v1846 = vunpack.c.h.b16 %v453
    %v1847 = vunpack.c.l.b16 %v454
    %v1848 = vunpack.c.h.b16 %v454
    %v1849 = vunpack.c.l.b16 %v455
    %v1850 = vunpack.c.h.b16 %v455
    %v1851 = vunpack.c.l.b16 %v456
    %v1852 = vunpack.c.h.b16 %v456
    %v1853 = vunpack.c.l.b16 %v457
    %v1854 = vunpack.c.h.b16 %v457
    %v1855 = vunpack.c.l.b16 %v458
    %v1856 = vunpack.c.h.b16 %v458
    %v1857 = vunpack.c.l.b16 %v459
    %v1858 = vunpack.c.h.b16 %v459
    %v1859 = vunpack.c.l.b16 %v460
    %v1860 = vunpack.c.h.b16 %v460
    %v1861 = vunpack.c.l.b16 %v461
    %v1862 = vunpack.c.h.b16 %v461
    %v1863 = vunpack.c.l.b16 %v462
    %v1864 = vunpack.c.h.b16 %v462
    %v1865 = vunpack.c.l.b16 %v463
    %v1866 = vunpack.c.h.b16 %v463
    %v1867 = vunpack.c.l.b16 %v464
    %v1868 = vunpack.c.h.b16 %v464
    %v1869 = vunpack.c.l.b16 %v465
    %v1870 = vunpack.c.h.b16 %v465
    %v1871 = vunpack.c.l.b16 %v466
    %v1872 = vunpack.c.h.b16 %v466
    %v1873 = vunpack.c.l.b16 %v467
    %v1874 = vunpack.c.h.b16 %v467
    %v1875 = vunpack.c.l.b16 %v468
    %v1876 = vunpack.c.h.b16 %v468
    %v1877 = vunpack.c.l.b16 %v469
    %v1878 = vunpack.c.h.b16 %v469
    %v1879 = vunpack.c.l.b16 %v470
    %v1880 = vunpack.c.h.b16 %v470
    %v1881 = vunpack.c.l.b16 %v471
    %v1882 = vunpack.c.h.b16 %v471
    %v1883 = vunpack.c.l.b16 %v472
    %v1884 = vunpack.c.h.b16 %v472
    %v1885 = vunpack.c.l.b16 %v473
    %v1886 = vunpack.c.h.b16 %v473
    %v1887 = vunpack.c.l.b16 %v474
    %v1888 = vunpack.c.h.b16 %v474
    %v1889 = vunpack.c.l.b16 %v475
    %v1890 = vunpack.c.h.b16 %v475
    %v1891 = vunpack.c.l.b16 %v476
    %v1892 = vunpack.c.h.b16 %v476
    %v1893 = vunpack.c.l.b16 %v477
    %v1894 = vunpack.c.h.b16 %v477
    %v1895 = vunpack.c.l.b16 %v478
    %v1896 = vunpack.c.h.b16 %v478
    %v1897 = vunpack.c.l.b16 %v479
    %v1898 = vunpack.c.h.b16 %v479
    %v1899 = vunpack.c.l.b16 %v480
    %v1900 = vunpack.c.h.b16 %v480
    %v1901 = vunpack.c.l.b16 %v481
    %v1902 = vunpack.c.h.b16 %v481
    %v1903 = vunpack.c.l.b16 %v482
    %v1904 = vunpack.c.h.b16 %v482
    %v1905 = vunpack.c.l.b16 %v483
    %v1906 = vunpack.c.h.b16 %v483
    %v1907 = vunpack.c.l.b16 %v484
    %v1908 = vunpack.c.h.b16 %v484
    %v1909 = vunpack.c.l.b16 %v485
    %v1910 = vunpack.c.h.b16 %v485
    %v1911 = vunpack.c.l.b16 %v486
    %v1912 = vunpack.c.h.b16 %v486
    %v1913 = vunpack.c.l.b16 %v487
    %v1914 = vunpack.c.h.b16 %v487
    %v1915 = vunpack.c.l.b16 %v488
    %v1916 = vunpack.c.h.b16 %v488
    %v1917 = vunpack.c.l.b16 %v489
    %v1918 = vunpack.c.h.b16 %v489
    %v1919 = vunpack.c.l.b16 %v490
    %v1920 = vunpack.c.h.b16 %v490
    %v1921 = vunpack.c.l.b16 %v491
    %v1922 = vunpack.c.h.b16 %v491
    %v1923 = vunpack.c.l.b16 %v492
    %v1924 = vunpack.c.h.b16 %v492
    %v1925 = vunpack.c.l.b16 %v493
    %v1926 = vunpack.c.h.b16 %v493
    %v1927 = vunpack.c.l.b16 %v494
    %v1928 = vunpack.c.h.b16 %v494
    %v1929 = vunpack.c.l.b16 %v495
    %v1930 = vunpack.c.h.b16 %v495
    %v1931 = vunpack.c.l.b16 %v496
    %v1932 = vunpack.c.h.b16 %v496
    %v1933 = vunpack.c.l.b16 %v497
    %v1934 = vunpack.c.h.b16 %v497
    %v1935 = vunpack.c.l.b16 %v498
    %v1936 = vunpack.c.h.b16 %v498
    %v1937 = vunpack.c.l.b16 %v499
    %v1938 = vunpack.c.h.b16 %v499
    %v1939 = vunpack.c.l.b16 %v500
    %v1940 = vunpack.c.h.b16 %v500
    %v1941 = vunpack.c.l.b16 %v501
    %v1942 = vunpack.c.h.b16 %v501
    %v1943 = vunpack.c.l.b16 %v502
    %v1944 = vunpack.c.h.b16 %v502
    %v1945 = vunpack.c.l.b16 %v503
    %v1946 = vunpack.c.h.b16 %v503
    %v1947 = vunpack.c.l.b16 %v504
    %v1948 = vunpack.c.h.b16 %v504
    %v1949 = vunpack.c.l.b16 %v505
    %v1950 = vunpack.c.h.b16 %v505
    %v1951 = vunpack.c.l.b16 %v506
    %v1952 = vunpack.c.h.b16 %v506
    %v1953 = vunpack.c.l.b16 %v507
    %v1954 = vunpack.c.h.b16 %v507
    %v1955 = vunpack.c.l.b16 %v508
    %v1956 = vunpack.c.h.b16 %v508
    %v1957 = vunpack.c.l.b16 %v509
    %v1958 = vunpack.c.h.b16 %v509
    %v1959 = vunpack.c.l.b16 %v510
    %v1960 = vunpack.c.h.b16 %v510
    %v1961 = vunpack.c.l.b16 %v511
    %v1962 = vunpack.c.h.b16 %v511
    %v1963 = vunpack.c.l.b16 %v512
    %v1964 = vunpack.c.h.b16 %v512
    %v1965 = vunpack.c.l.b16 %v513
    %v1966 = vunpack.c.h.b16 %v513
    %v1967 = vunpack.c.l.b16 %v514
    %v1968 = vunpack.c.h.b16 %v514
    %v1969 = vunpack.c.l.b16 %v515
    %v1970 = vunpack.c.h.b16 %v515
    %v1971 = vunpack.c.l.b16 %v516
    %v1972 = vunpack.c.h.b16 %v516
    %v1973 = vunpack.c.l.b16 %v517
    %v1974 = vunpack.c.h.b16 %v517
    %v1975 = vunpack.c.l.b16 %v518
    %v1976 = vunpack.c.h.b16 %v518
    %v1977 = vunpack.c.l.b16 %v519
    %v1978 = vunpack.c.h.b16 %v519
    %v1979 = vunpack.c.l.b16 %v520
    %v1980 = vunpack.c.h.b16 %v520
    %v1981 = vunpack.c.l.b16 %v521
    %v1982 = vunpack.c.h.b16 %v521
    %v1983 = vunpack.c.l.b16 %v522
    %v1984 = vunpack.c.h.b16 %v522
    %v1985 = vunpack.c.l.b16 %v523
    %v1986 = vunpack.c.h.b16 %v523
    %v1987 = vunpack.c.l.b16 %v524
    %v1988 = vunpack.c.h.b16 %v524
    %v1989 = vunpack.c.l.b16 %v525
    %v1990 = vunpack.c.h.b16 %v525
    %v1991 = vunpack.c.l.b16 %v526
    %v1992 = vunpack.c.h.b16 %v526
    %v1993 = vunpack.c.l.b16 %v527
    %v1994 = vunpack.c.h.b16 %v527
    %v1995 = vunpack.c.l.b16 %v528
    %v1996 = vunpack.c.h.b16 %v528
    %v1997 = vunpack.c.l.b16 %v529
    %v1998 = vunpack.c.h.b16 %v529
    %v1999 = vunpack.c.l.b16 %v530
    %v2000 = vunpack.c.h.b16 %v530
    %v2001 = vunpack.c.l.b16 %v531
    %v2002 = vunpack.c.h.b16 %v531
    %v2003 = vunpack.c.l.b16 %v532
    %v2004 = vunpack.c.h.b16 %v532
    %v2005 = vunpack.c.l.b16 %v533
    %v2006 = vunpack.c.h.b16 %v533
    %v2007 = vunpack.c.l.b16 %v534
    %v2008 = vunpack.c.h.b16 %v534
    %v2009 = vunpack.c.l.b16 %v535
    %v2010 = vunpack.c.h.b16 %v535
    %v2011 = vunpack.c.l.b16 %v536
    %v2012 = vunpack.c.h.b16 %v536
    %v2013 = vunpack.c.l.b16 %v537
    %v2014 = vunpack.c.h.b16 %v537
    %v2015 = vunpack.c.l.b16 %v538
    %v2016 = vunpack.c.h.b16 %v538
    %v2017 = vunpack.c.l.b16 %v539
    %v2018 = vunpack.c.h.b16 %v539
    %v2019 = vunpack.c.l.b16 %v540
    %v2020 = vunpack.c.h.b16 %v540
    %v2021 = vunpack.c.l.b16 %v541
    %v2022 = vunpack.c.h.b16 %v541
    %v2023 = vunpack.c.l.b16 %v542
    %v2024 = vunpack.c.h.b16 %v542
    %v2025 = vunpack.c.l.b16 %v543
    %v2026 = vunpack.c.h.b16 %v543
    %v2027 = vunpack.c.l.b16 %v544
    %v2028 = vunpack.c.h.b16 %v544
    %v2029 = vunpack.c.l.b16 %v545
    %v2030 = vunpack.c.h.b16 %v545
    %v2031 = vunpack.c.l.b16 %v546
    %v2032 = vunpack.c.h.b16 %v546
    %v2033 = vunpack.c.l.b16 %v547
    %v2034 = vunpack.c.h.b16 %v547
    %v2035 = vunpack.c.l.b16 %v548
    %v2036 = vunpack.c.h.b16 %v548
    %v2037 = vunpack.c.l.b16 %v549
    %v2038 = vunpack.c.h.b16 %v549
    %v2039 = vunpack.c.l.b16 %v550
    %v2040 = vunpack.c.h.b16 %v550
    %v2041 = vunpack.c.l.b16 %v551
    %v2042 = vunpack.c.h.b16 %v551
    %v2043 = vunpack.c.l.b16 %v552
    %v2044 = vunpack.c.h.b16 %v552
    %v2045 = vunpack.c.l.b16 %v553
    %v2046 = vunpack.c.h.b16 %v553
    %v2047 = vunpack.c.l.b16 %v554
    %v2048 = vunpack.c.h.b16 %v554
    %v2049 = vunpack.c.l.b16 %v555
    %v2050 = vunpack.c.h.b16 %v555
    %v2051 = vunpack.c.l.b16 %v556
    %v2052 = vunpack.c.h.b16 %v556
    %v2053 = vunpack.c.l.b16 %v557
    %v2054 = vunpack.c.h.b16 %v557
    %v2055 = vunpack.c.l.b16 %v558
    %v2056 = vunpack.c.h.b16 %v558
    %v2057 = vunpack.c.l.b16 %v559
    %v2058 = vunpack.c.h.b16 %v559
    %v2059 = vunpack.c.l.b16 %v560
    %v2060 = vunpack.c.h.b16 %v560
    %v2061 = vunpack.c.l.b16 %v561
    %v2062 = vunpack.c.h.b16 %v561
    %v2063 = vunpack.c.l.b16 %v562
    %v2064 = vunpack.c.h.b16 %v562
    %v2065 = vunpack.c.l.b16 %v563
    %v2066 = vunpack.c.h.b16 %v563
    %v2067 = vunpack.c.l.b16 %v564
    %v2068 = vunpack.c.h.b16 %v564
    %v2069 = vunpack.c.l.b16 %v565
    %v2070 = vunpack.c.h.b16 %v565
    %v2071 = vunpack.c.l.b16 %v566
    %v2072 = vunpack.c.h.b16 %v566
    %v2073 = vunpack.c.l.b16 %v567
    %v2074 = vunpack.c.h.b16 %v567
    %v2075 = vunpack.c.l.b16 %v568
    %v2076 = vunpack.c.h.b16 %v568
    %v2077 = vunpack.c.l.b16 %v569
    %v2078 = vunpack.c.h.b16 %v569
    %v2079 = vunpack.c.l.b16 %v570
    %v2080 = vunpack.c.h.b16 %v570
    %v2081 = vunpack.c.l.b16 %v571
    %v2082 = vunpack.c.h.b16 %v571
    %v2083 = vunpack.c.l.b16 %v572
    %v2084 = vunpack.c.h.b16 %v572
    %v2085 = vunpack.c.l.b16 %v573
    %v2086 = vunpack.c.h.b16 %v573
    %v2087 = vunpack.c.l.b16 %v574
    %v2088 = vunpack.c.h.b16 %v574
    %v2089 = vunpack.c.l.b16 %v575
    %v2090 = vunpack.c.h.b16 %v575
    %v2091 = vunpack.c.l.b16 %v576
    %v2092 = vunpack.c.h.b16 %v576
    %v2093 = vunpack.c.l.b16 %v577
    %v2094 = vunpack.c.h.b16 %v577
    %v2095 = vunpack.c.l.b16 %v578
    %v2096 = vunpack.c.h.b16 %v578
    %v2097 = vunpack.c.l.b16 %v579
    %v2098 = vunpack.c.h.b16 %v579
    %v2099 = vunpack.c.l.b16 %v580
    %v2100 = vunpack.c.h.b16 %v580
    %v2101 = vunpack.c.l.b16 %v581
    %v2102 = vunpack.c.h.b16 %v581
    %v2103 = vunpack.c.l.b16 %v582
    %v2104 = vunpack.c.h.b16 %v582
    %v2105 = vunpack.c.l.b16 %v583
    %v2106 = vunpack.c.h.b16 %v583
    %v2107 = vunpack.c.l.b16 %v584
    %v2108 = vunpack.c.h.b16 %v584
    %v2109 = vunpack.c.l.b16 %v585
    %v2110 = vunpack.c.h.b16 %v585
    %v2111 = vunpack.c.l.b16 %v586
    %v2112 = vunpack.c.h.b16 %v586
    %v2113 = vunpack.c.l.b16 %v587
    %v2114 = vunpack.c.h.b16 %v587
    %v2115 = vunpack.c.l.b16 %v588
    %v2116 = vunpack.c.h.b16 %v588
    %v2117 = vunpack.c.l.b16 %v589
    %v2118 = vunpack.c.h.b16 %v589
    %v2119 = vunpack.c.l.b16 %v590
    %v2120 = vunpack.c.h.b16 %v590
    %v2121 = vunpack.c.l.b16 %v591
    %v2122 = vunpack.c.h.b16 %v591
    %v2123 = vunpack.c.l.b16 %v592
    %v2124 = vunpack.c.h.b16 %v592
    %v2125 = vunpack.c.l.b16 %v593
    %v2126 = vunpack.c.h.b16 %v593
    %v2127 = vunpack.c.l.b16 %v594
    %v2128 = vunpack.c.h.b16 %v594
    %v2129 = vunpack.c.l.b16 %v595
    %v2130 = vunpack.c.h.b16 %v595
    %v2131 = vunpack.c.l.b16 %v596
    %v2132 = vunpack.c.h.b16 %v596
    %v2133 = vunpack.c.l.b16 %v597
    %v2134 = vunpack.c.h.b16 %v597
    %v2135 = vunpack.c.l.b16 %v598
    %v2136 = vunpack.c.h.b16 %v598
    %v2137 = vunpack.c.l.b16 %v599
    %v2138 = vunpack.c.h.b16 %v599
    %v2139 = vunpack.c.l.b16 %v600
    %v2140 = vunpack.c.h.b16 %v600
    %v2141 = vunpack.c.l.b16 %v601
    %v2142 = vunpack.c.h.b16 %v601
    %v2143 = vunpack.c.l.b16 %v602
    %v2144 = vunpack.c.h.b16 %v602
    %v2145 = vunpack.c.l.b16 %v603
    %v2146 = vunpack.c.h.b16 %v603
    %v2147 = vunpack.c.l.b16 %v604
    %v2148 = vunpack.c.h.b16 %v604
    %v2149 = vunpack.c.l.b16 %v605
    %v2150 = vunpack.c.h.b16 %v605
    %v2151 = vunpack.c.l.b16 %v606
    %v2152 = vunpack.c.h.b16 %v606
    %v2153 = vunpack.c.l.b16 %v607
    %v2154 = vunpack.c.h.b16 %v607
    %v2155 = vunpack.c.l.b16 %v608
    %v2156 = vunpack.c.h.b16 %v608
    %v2157 = vunpack.c.l.b16 %v609
    %v2158 = vunpack.c.h.b16 %v609
    %v2159 = vunpack.c.l.b16 %v610
    %v2160 = vunpack.c.h.b16 %v610
    %v2161 = vunpack.c.l.b16 %v611
    %v2162 = vunpack.c.h.b16 %v611
    %v2163 = vunpack.c.l.b16 %v612
    %v2164 = vunpack.c.h.b16 %v612
    %v2165 = vunpack.c.l.b16 %v613
    %v2166 = vunpack.c.h.b16 %v613
    %v2167 = vunpack.c.l.b16 %v614
    %v2168 = vunpack.c.h.b16 %v614
    %v2169 = vunpack.c.l.b16 %v615
    %v2170 = vunpack.c.h.b16 %v615
    %v2171 = vunpack.c.l.b16 %v616
    %v2172 = vunpack.c.h.b16 %v616
    %v2173 = vunpack.c.l.b16 %v617
    %v2174 = vunpack.c.h.b16 %v617
    %v2175 = vunpack.c.l.b16 %v618
    %v2176 = vunpack.c.h.b16 %v618
    %v2177 = vunpack.c.l.b16 %v619
    %v2178 = vunpack.c.h.b16 %v619
    %v2179 = vunpack.c.l.b16 %v620
    %v2180 = vunpack.c.h.b16 %v620
    %v2181 = vunpack.c.l.b16 %v621
    %v2182 = vunpack.c.h.b16 %v621
    %v2183 = vunpack.c.l.b16 %v622
    %v2184 = vunpack.c.h.b16 %v622
    %v2185 = vunpack.c.l.b16 %v623
    %v2186 = vunpack.c.h.b16 %v623
    %v2187 = vunpack.c.l.b16 %v624
    %v2188 = vunpack.c.h.b16 %v624
    %v2189 = vunpack.c.l.b16 %v625
    %v2190 = vunpack.c.h.b16 %v625
    %v2191 = vunpack.c.l.b16 %v626
    %v2192 = vunpack.c.h.b16 %v626
    %v2193 = vunpack.c.l.b16 %v627
    %v2194 = vunpack.c.h.b16 %v627
    %v2195 = vunpack.c.l.b16 %v628
    %v2196 = vunpack.c.h.b16 %v628
    %v2197 = vunpack.c.l.b16 %v629
    %v2198 = vunpack.c.h.b16 %v629
    %v2199 = vunpack.c.l.b16 %v630
    %v2200 = vunpack.c.h.b16 %v630
    %v2201 = vunpack.c.l.b16 %v631
    %v2202 = vunpack.c.h.b16 %v631
    %v2203 = vunpack.c.l.b16 %v632
    %v2204 = vunpack.c.h.b16 %v632
    %v2205 = vunpack.c.l.b16 %v633
    %v2206 = vunpack.c.h.b16 %v633
    %v2207 = vunpack.c.l.b16 %v634
    %v2208 = vunpack.c.h.b16 %v634
    %v2209 = vunpack.c.l.b16 %v635
    %v2210 = vunpack.c.h.b16 %v635
    %v2211 = vunpack.c.l.b16 %v636
    %v2212 = vunpack.c.h.b16 %v636
    %v2213 = vunpack.c.l.b16 %v637
    %v2214 = vunpack.c.h.b16 %v637
    %v2215 = vunpack.c.l.b16 %v638
    %v2216 = vunpack.c.h.b16 %v638
    %v2217 = vpack.c.b16 %v1201, %v1193
    %v2218 = vpack.c.b16 %v1202, %v1194
    %v2219 = vpack.c.b16 %v1203, %v1195
    %v2220 = vpack.c.b16 %v1204, %v1196
    %v2221 = vpack.c.b16 %v1205, %v1197
    %v2222 = vpack.c.b16 %v1206, %v1198
    %v2223 = vpack.c.b16 %v1207, %v1199
    %v2224 = vpack.c.b16 %v1208, %v1200
    %v2225 = vpack.c.b16 %v1217, %v1209
    %v2226 = vpack.c.b16 %v1218, %v1210
    %v2227 = vpack.c.b16 %v1219, %v1211
    %v2228 = vpack.c.b16 %v1220, %v1212
    %v2229 = vpack.c.b16 %v1221, %v1213
    %v2230 = vpack.c.b16 %v1222, %v1214
    %v2231 = vpack.c.b16 %v1223, %v1215
    %v2232 = vpack.c.b16 %v1224, %v1216
    %v2233 = vpack.c.b16 %v1233, %v1225
    %v2234 = vpack.c.b16 %v1234, %v1226
    %v2235 = vpack.c.b16 %v1235, %v1227
    %v2236 = vpack.c.b16 %v1236, %v1228
    %v2237 = vpack.c.b16 %v1237, %v1229
    %v2238 = vpack.c.b16 %v1238, %v1230
    %v2239 = vpack.c.b16 %v1239, %v1231
    %v2240 = vpack.c.b16 %v1240, %v1232
    %v2241 = vpack.c.b16 %v1249, %v1241
    %v2242 = vpack.c.b16 %v1250, %v1242
    %v2243 = vpack.c.b16 %v1251, %v1243
    %v2244 = vpack.c.b16 %v1252, %v1244
    %v2245 = vpack.c.b16 %v1253, %v1245
    %v2246 = vpack.c.b16 %v1254, %v1246
    %v2247 = vpack.c.b16 %v1255, %v1247
    %v2248 = vpack.c.b16 %v1256, %v1248
    %v2249 = vpack.c.b16 %v1265, %v1257
    %v2250 = vpack.c.b16 %v1266, %v1258
    %v2251 = vpack.c.b16 %v1267, %v1259
    %v2252 = vpack.c.b16 %v1268, %v1260
    %v2253 = vpack.c.b16 %v1269, %v1261
    %v2254 = vpack.c.b16 %v1270, %v1262
    %v2255 = vpack.c.b16 %v1271, %v1263
    %v2256 = vpack.c.b16 %v1272, %v1264
    %v2257 = vpack.c.b16 %v1281, %v1273
    %v2258 = vpack.c.b16 %v1282, %v1274
    %v2259 = vpack.c.b16 %v1283, %v1275
    %v2260 = vpack.c.b16 %v1284, %v1276
    %v2261 = vpack.c.b16 %v1285, %v1277
    %v2262 = vpack.c.b16 %v1286, %v1278
    %v2263 = vpack.c.b16 %v1287, %v1279
    %v2264 = vpack.c.b16 %v1288, %v1280
    %v2265 = vpack.c.b16 %v1297, %v1289
    %v2266 = vpack.c.b16 %v1298, %v1290
    %v2267 = vpack.c.b16 %v1299, %v1291
    %v2268 = vpack.c.b16 %v1300, %v1292
    %v2269 = vpack.c.b16 %v1301, %v1293
    %v2270 = vpack.c.b16 %v1302, %v1294
    %v2271 = vpack.c.b16 %v1303, %v1295
    %v2272 = vpack.c.b16 %v1304, %v1296
    %v2273 = vpack.c.b16 %v1313, %v1305
    %v2274 = vpack.c.b16 %v1314, %v1306
    %v2275 = vpack.c.b16 %v1315, %v1307
    %v2276 = vpack.c.b16 %v1316, %v1308
    %v2277 = vpack.c.b16 %v1317, %v1309
    %v2278 = vpack.c.b16 %v1318, %v1310
    %v2279 = vpack.c.b16 %v1319, %v1311
    %v2280 = vpack.c.b16 %v1320, %v1312
    %v2281 = vpack.c.b16 %v1329, %v1321
    %v2282 = vpack.c.b16 %v1330, %v1322
    %v2283 = vpack.c.b16 %v1331, %v1323
    %v2284 = vpack.c.b16 %v1332, %v1324
    %v2285 = vpack.c.b16 %v1333, %v1325
    %v2286 = vpack.c.b16 %v1334, %v1326
    %v2287 = vpack.c.b16 %v1335, %v1327
    %v2288 = vpack.c.b16 %v1336, %v1328
    %v2289 = vpack.c.b16 %v1345, %v1337
    %v2290 = vpack.c.b16 %v1346, %v1338
    %v2291 = vpack.c.b16 %v1347, %v1339
    %v2292 = vpack.c.b16 %v1348, %v1340
    %v2293 = vpack.c.b16 %v1349, %v1341
    %v2294 = vpack.c.b16 %v1350, %v1342
    %v2295 = vpack.c.b16 %v1351, %v1343
    %v2296 = vpack.c.b16 %v1352, %v1344
    %v2297 = vpack.c.b16 %v1361, %v1353
    %v2298 = vpack.c.b16 %v1362, %v1354
    %v2299 = vpack.c.b16 %v1363, %v1355
    %v2300 = vpack.c.b16 %v1364, %v1356
    %v2301 = vpack.c.b16 %v1365, %v1357
    %v2302 = vpack.c.b16 %v1366, %v1358
    %v2303 = vpack.c.b16 %v1367, %v1359
    %v2304 = vpack.c.b16 %v1368, %v1360
    %v2305 = vpack.c.b16 %v1377, %v1369
    %v2306 = vpack.c.b16 %v1378, %v1370
    %v2307 = vpack.c.b16 %v1379, %v1371
    %v2308 = vpack.c.b16 %v1380, %v1372
    %v2309 = vpack.c.b16 %v1381, %v1373
    %v2310 = vpack.c.b16 %v1382, %v1374
    %v2311 = vpack.c.b16 %v1383, %v1375
    %v2312 = vpack.c.b16 %v1384, %v1376
    %v2313 = vpack.c.b16 %v1393, %v1385
    %v2314 = vpack.c.b16 %v1394, %v1386
    %v2315 = vpack.c.b16 %v1395, %v1387
    %v2316 = vpack.c.b16 %v1396, %v1388
    %v2317 = vpack.c.b16 %v1397, %v1389
    %v2318 = vpack.c.b16 %v1398, %v1390
    %v2319 = vpack.c.b16 %v1399, %v1391
    %v2320 = vpack.c.b16 %v1400, %v1392
    %v2321 = vpack.c.b16 %v1409, %v1401
    %v2322 = vpack.c.b16 %v1410, %v1402
    %v2323 = vpack.c.b16 %v1411, %v1403
    %v2324 = vpack.c.b16 %v1412, %v1404
    %v2325 = vpack.c.b16 %v1413, %v1405
    %v2326 = vpack.c.b16 %v1414, %v1406
    %v2327 = vpack.c.b16 %v1415, %v1407
    %v2328 = vpack.c.b16 %v1416, %v1408
    %v2329 = vpack.c.b16 %v1425, %v1417
    %v2330 = vpack.c.b16 %v1426, %v1418
    %v2331 = vpack.c.b16 %v1427, %v1419
    %v2332 = vpack.c.b16 %v1428, %v1420
    %v2333 = vpack.c.b16 %v1429, %v1421
    %v2334 = vpack.c.b16 %v1430, %v1422
    %v2335 = vpack.c.b16 %v1431, %v1423
    %v2336 = vpack.c.b16 %v1432, %v1424
    %v2337 = vpack.c.b16 %v1441, %v1433
    %v2338 = vpack.c.b16 %v1442, %v1434
    %v2339 = vpack.c.b16 %v1443, %v1435
    %v2340 = vpack.c.b16 %v1444, %v1436
    %v2341 = vpack.c.b16 %v1445, %v1437
    %v2342 = vpack.c.b16 %v1446, %v1438
    %v2343 = vpack.c.b16 %v1447, %v1439
    %v2344 = vpack.c.b16 %v1448, %v1440
    %v2345 = vpack.c.b16 %v1457, %v1449
    %v2346 = vpack.c.b16 %v1458, %v1450
    %v2347 = vpack.c.b16 %v1459, %v1451
    %v2348 = vpack.c.b16 %v1460, %v1452
    %v2349 = vpack.c.b16 %v1461, %v1453
    %v2350 = vpack.c.b16 %v1462, %v1454
    %v2351 = vpack.c.b16 %v1463, %v1455
    %v2352 = vpack.c.b16 %v1464, %v1456
    %v2353 = vpack.c.b16 %v1473, %v1465
    %v2354 = vpack.c.b16 %v1474, %v1466
    %v2355 = vpack.c.b16 %v1475, %v1467
    %v2356 = vpack.c.b16 %v1476, %v1468
    %v2357 = vpack.c.b16 %v1477, %v1469
    %v2358 = vpack.c.b16 %v1478, %v1470
    %v2359 = vpack.c.b16 %v1479, %v1471
    %v2360 = vpack.c.b16 %v1480, %v1472
    %v2361 = vpack.c.b16 %v1489, %v1481
    %v2362 = vpack.c.b16 %v1490, %v1482
    %v2363 = vpack.c.b16 %v1491, %v1483
    %v2364 = vpack.c.b16 %v1492, %v1484
    %v2365 = vpack.c.b16 %v1493, %v1485
    %v2366 = vpack.c.b16 %v1494, %v1486
    %v2367 = vpack.c.b16 %v1495, %v1487
    %v2368 = vpack.c.b16 %v1496, %v1488
    %v2369 = vpack.c.b16 %v1505, %v1497
    %v2370 = vpack.c.b16 %v1506, %v1498
    %v2371 = vpack.c.b16 %v1507, %v1499
    %v2372 = vpack.c.b16 %v1508, %v1500
    %v2373 = vpack.c.b16 %v1509, %v1501
    %v2374 = vpack.c.b16 %v1510, %v1502
    %v2375 = vpack.c.b16 %v1511, %v1503
    %v2376 = vpack.c.b16 %v1512, %v1504
    %v2377 = vpack.c.b16 %v1521, %v1513
    %v2378 = vpack.c.b16 %v1522, %v1514
    %v2379 = vpack.c.b16 %v1523, %v1515
    %v2380 = vpack.c.b16 %v1524, %v1516
    %v2381 = vpack.c.b16 %v1525, %v1517
    %v2382 = vpack.c.b16 %v1526, %v1518
    %v2383 = vpack.c.b16 %v1527, %v1519
    %v2384 = vpack.c.b16 %v1528, %v1520
    %v2385 = vpack.c.b16 %v1537, %v1529
    %v2386 = vpack.c.b16 %v1538, %v1530
    %v2387 = vpack.c.b16 %v1539, %v1531
    %v2388 = vpack.c.b16 %v1540, %v1532
    %v2389 = vpack.c.b16 %v1541, %v1533
    %v2390 = vpack.c.b16 %v1542, %v1534
    %v2391 = vpack.c.b16 %v1543, %v1535
    %v2392 = vpack.c.b16 %v1544, %v1536
    %v2393 = vpack.c.b16 %v1553, %v1545
    %v2394 = vpack.c.b16 %v1554, %v1546
    %v2395 = vpack.c.b16 %v1555, %v1547
    %v2396 = vpack.c.b16 %v1556, %v1548
    %v2397 = vpack.c.b16 %v1557, %v1549
    %v2398 = vpack.c.b16 %v1558, %v1550
    %v2399 = vpack.c.b16 %v1559, %v1551
    %v2400 = vpack.c.b16 %v1560, %v1552
    %v2401 = vpack.c.b16 %v1569, %v1561
    %v2402 = vpack.c.b16 %v1570, %v1562
    %v2403 = vpack.c.b16 %v1571, %v1563
    %v2404 = vpack.c.b16 %v1572, %v1564
    %v2405 = vpack.c.b16 %v1573, %v1565
    %v2406 = vpack.c.b16 %v1574, %v1566
    %v2407 = vpack.c.b16 %v1575, %v1567
    %v2408 = vpack.c.b16 %v1576, %v1568
    %v2409 = vpack.c.b16 %v1585, %v1577
    %v2410 = vpack.c.b16 %v1586, %v1578
    %v2411 = vpack.c.b16 %v1587, %v1579
    %v2412 = vpack.c.b16 %v1588, %v1580
    %v2413 = vpack.c.b16 %v1589, %v1581
    %v2414 = vpack.c.b16 %v1590, %v1582
    %v2415 = vpack.c.b16 %v1591, %v1583
    %v2416 = vpack.c.b16 %v1592, %v1584
    %v2417 = vpack.c.b16 %v1601, %v1593
    %v2418 = vpack.c.b16 %v1602, %v1594
    %v2419 = vpack.c.b16 %v1603, %v1595
    %v2420 = vpack.c.b16 %v1604, %v1596
    %v2421 = vpack.c.b16 %v1605, %v1597
    %v2422 = vpack.c.b16 %v1606, %v1598
    %v2423 = vpack.c.b16 %v1607, %v1599
    %v2424 = vpack.c.b16 %v1608, %v1600
    %v2425 = vpack.c.b16 %v1617, %v1609
    %v2426 = vpack.c.b16 %v1618, %v1610
    %v2427 = vpack.c.b16 %v1619, %v1611
    %v2428 = vpack.c.b16 %v1620, %v1612
    %v2429 = vpack.c.b16 %v1621, %v1613
    %v2430 = vpack.c.b16 %v1622, %v1614
    %v2431 = vpack.c.b16 %v1623, %v1615
    %v2432 = vpack.c.b16 %v1624, %v1616
    %v2433 = vpack.c.b16 %v1633, %v1625
    %v2434 = vpack.c.b16 %v1634, %v1626
    %v2435 = vpack.c.b16 %v1635, %v1627
    %v2436 = vpack.c.b16 %v1636, %v1628
    %v2437 = vpack.c.b16 %v1637, %v1629
    %v2438 = vpack.c.b16 %v1638, %v1630
    %v2439 = vpack.c.b16 %v1639, %v1631
    %v2440 = vpack.c.b16 %v1640, %v1632
    %v2441 = vpack.c.b16 %v1649, %v1641
    %v2442 = vpack.c.b16 %v1650, %v1642
    %v2443 = vpack.c.b16 %v1651, %v1643
    %v2444 = vpack.c.b16 %v1652, %v1644
    %v2445 = vpack.c.b16 %v1653, %v1645
    %v2446 = vpack.c.b16 %v1654, %v1646
    %v2447 = vpack.c.b16 %v1655, %v1647
    %v2448 = vpack.c.b16 %v1656, %v1648
    %v2449 = vpack.c.b16 %v1665, %v1657
    %v2450 = vpack.c.b16 %v1666, %v1658
    %v2451 = vpack.c.b16 %v1667, %v1659
    %v2452 = vpack.c.b16 %v1668, %v1660
    %v2453 = vpack.c.b16 %v1669, %v1661
    %v2454 = vpack.c.b16 %v1670, %v1662
    %v2455 = vpack.c.b16 %v1671, %v1663
    %v2456 = vpack.c.b16 %v1672, %v1664
    %v2457 = vpack.c.b16 %v1681, %v1673
    %v2458 = vpack.c.b16 %v1682, %v1674
    %v2459 = vpack.c.b16 %v1683, %v1675
    %v2460 = vpack.c.b16 %v1684, %v1676
    %v2461 = vpack.c.b16 %v1685, %v1677
    %v2462 = vpack.c.b16 %v1686, %v1678
    %v2463 = vpack.c.b16 %v1687, %v1679
    %v2464 = vpack.c.b16 %v1688, %v1680
    %v2465 = vpack.c.b16 %v1697, %v1689
    %v2466 = vpack.c.b16 %v1698, %v1690
    %v2467 = vpack.c.b16 %v1699, %v1691
    %v2468 = vpack.c.b16 %v1700, %v1692
    %v2469 = vpack.c.b16 %v1701, %v1693
    %v2470 = vpack.c.b16 %v1702, %v1694
    %v2471 = vpack.c.b16 %v1703, %v1695
    %v2472 = vpack.c.b16 %v1704, %v1696
    %v2473 = vpack.c.b16 %v1713, %v1705
    %v2474 = vpack.c.b16 %v1714, %v1706
    %v2475 = vpack.c.b16 %v1715, %v1707
    %v2476 = vpack.c.b16 %v1716, %v1708
    %v2477 = vpack.c.b16 %v1717, %v1709
    %v2478 = vpack.c.b16 %v1718, %v1710
    %v2479 = vpack.c.b16 %v1719, %v1711
    %v2480 = vpack.c.b16 %v1720, %v1712
    %v2481 = vpack.c.b16 %v1729, %v1721
    %v2482 = vpack.c.b16 %v1730, %v1722
    %v2483 = vpack.c.b16 %v1731, %v1723
    %v2484 = vpack.c.b16 %v1732, %v1724
    %v2485 = vpack.c.b16 %v1733, %v1725
    %v2486 = vpack.c.b16 %v1734, %v1726
    %v2487 = vpack.c.b16 %v1735, %v1727
    %v2488 = vpack.c.b16 %v1736, %v1728
    %v2489 = vpack.c.b16 %v1745, %v1737
    %v2490 = vpack.c.b16 %v1746, %v1738
    %v2491 = vpack.c.b16 %v1747, %v1739
    %v2492 = vpack.c.b16 %v1748, %v1740
    %v2493 = vpack.c.b16 %v1749, %v1741
    %v2494 = vpack.c.b16 %v1750, %v1742
    %v2495 = vpack.c.b16 %v1751, %v1743
    %v2496 = vpack.c.b16 %v1752, %v1744
    %v2497 = vpack.c.b16 %v1761, %v1753
    %v2498 = vpack.c.b16 %v1762, %v1754
    %v2499 = vpack.c.b16 %v1763, %v1755
    %v2500 = vpack.c.b16 %v1764, %v1756
    %v2501 = vpack.c.b16 %v1765, %v1757
    %v2502 = vpack.c.b16 %v1766, %v1758
    %v2503 = vpack.c.b16 %v1767, %v1759
    %v2504 = vpack.c.b16 %v1768, %v1760
    %v2505 = vpack.c.b16 %v1777, %v1769
    %v2506 = vpack.c.b16 %v1778, %v1770
    %v2507 = vpack.c.b16 %v1779, %v1771
    %v2508 = vpack.c.b16 %v1780, %v1772
    %v2509 = vpack.c.b16 %v1781, %v1773
    %v2510 = vpack.c.b16 %v1782, %v1774
    %v2511 = vpack.c.b16 %v1783, %v1775
    %v2512 = vpack.c.b16 %v1784, %v1776
    %v2513 = vpack.c.b16 %v1793, %v1785
    %v2514 = vpack.c.b16 %v1794, %v1786
    %v2515 = vpack.c.b16 %v1795, %v1787
    %v2516 = vpack.c.b16 %v1796, %v1788
    %v2517 = vpack.c.b16 %v1797, %v1789
    %v2518 = vpack.c.b16 %v1798, %v1790
    %v2519 = vpack.c.b16 %v1799, %v1791
    %v2520 = vpack.c.b16 %v1800, %v1792
    %v2521 = vpack.c.b16 %v1809, %v1801
    %v2522 = vpack.c.b16 %v1810, %v1802
    %v2523 = vpack.c.b16 %v1811, %v1803
    %v2524 = vpack.c.b16 %v1812, %v1804
    %v2525 = vpack.c.b16 %v1813, %v1805
    %v2526 = vpack.c.b16 %v1814, %v1806
    %v2527 = vpack.c.b16 %v1815, %v1807
    %v2528 = vpack.c.b16 %v1816, %v1808
    %v2529 = vpack.c.b16 %v1825, %v1817
    %v2530 = vpack.c.b16 %v1826, %v1818
    %v2531 = vpack.c.b16 %v1827, %v1819
    %v2532 = vpack.c.b16 %v1828, %v1820
    %v2533 = vpack.c.b16 %v1829, %v1821
    %v2534 = vpack.c.b16 %v1830, %v1822
    %v2535 = vpack.c.b16 %v1831, %v1823
    %v2536 = vpack.c.b16 %v1832, %v1824
    %v2537 = vpack.c.b16 %v1841, %v1833
    %v2538 = vpack.c.b16 %v1842, %v1834
    %v2539 = vpack.c.b16 %v1843, %v1835
    %v2540 = vpack.c.b16 %v1844, %v1836
    %v2541 = vpack.c.b16 %v1845, %v1837
    %v2542 = vpack.c.b16 %v1846, %v1838
    %v2543 = vpack.c.b16 %v1847, %v1839
    %v2544 = vpack.c.b16 %v1848, %v1840
    %v2545 = vpack.c.b16 %v1857, %v1849
    %v2546 = vpack.c.b16 %v1858, %v1850
    %v2547 = vpack.c.b16 %v1859, %v1851
    %v2548 = vpack.c.b16 %v1860, %v1852
    %v2549 = vpack.c.b16 %v1861, %v1853
    %v2550 = vpack.c.b16 %v1862, %v1854
    %v2551 = vpack.c.b16 %v1863, %v1855
    %v2552 = vpack.c.b16 %v1864, %v1856
    %v2553 = vpack.c.b16 %v1873, %v1865
    %v2554 = vpack.c.b16 %v1874, %v1866
    %v2555 = vpack.c.b16 %v1875, %v1867
    %v2556 = vpack.c.b16 %v1876, %v1868
    %v2557 = vpack.c.b16 %v1877, %v1869
    %v2558 = vpack.c.b16 %v1878, %v1870
    %v2559 = vpack.c.b16 %v1879, %v1871
    %v2560 = vpack.c.b16 %v1880, %v1872
    %v2561 = vpack.c.b16 %v1889, %v1881
    %v2562 = vpack.c.b16 %v1890, %v1882
    %v2563 = vpack.c.b16 %v1891, %v1883
    %v2564 = vpack.c.b16 %v1892, %v1884
    %v2565 = vpack.c.b16 %v1893, %v1885
    %v2566 = vpack.c.b16 %v1894, %v1886
    %v2567 = vpack.c.b16 %v1895, %v1887
    %v2568 = vpack.c.b16 %v1896, %v1888
    %v2569 = vpack.c.b16 %v1905, %v1897
    %v2570 = vpack.c.b16 %v1906, %v1898
    %v2571 = vpack.c.b16 %v1907, %v1899
    %v2572 = vpack.c.b16 %v1908, %v1900
    %v2573 = vpack.c.b16 %v1909, %v1901
    %v2574 = vpack.c.b16 %v1910, %v1902
    %v2575 = vpack.c.b16 %v1911, %v1903
    %v2576 = vpack.c.b16 %v1912, %v1904
    %v2577 = vpack.c.b16 %v1921, %v1913
    %v2578 = vpack.c.b16 %v1922, %v1914
    %v2579 = vpack.c.b16 %v1923, %v1915
    %v2580 = vpack.c.b16 %v1924, %v1916
    %v2581 = vpack.c.b16 %v1925, %v1917
    %v2582 = vpack.c.b16 %v1926, %v1918
    %v2583 = vpack.c.b16 %v1927, %v1919
    %v2584 = vpack.c.b16 %v1928, %v1920
    %v2585 = vpack.c.b16 %v1937, %v1929
    %v2586 = vpack.c.b16 %v1938, %v1930
    %v2587 = vpack.c.b16 %v1939, %v1931
    %v2588 = vpack.c.b16 %v1940, %v1932
    %v2589 = vpack.c.b16 %v1941, %v1933
    %v2590 = vpack.c.b16 %v1942, %v1934
    %v2591 = vpack.c.b16 %v1943, %v1935
    %v2592 = vpack.c.b16 %v1944, %v1936
    %v2593 = vpack.c.b16 %v1953, %v1945
    %v2594 = vpack.c.b16 %v1954, %v1946
    %v2595 = vpack.c.b16 %v1955, %v1947
    %v2596 = vpack.c.b16 %v1956, %v1948
    %v2597 = vpack.c.b16 %v1957, %v1949
    %v2598 = vpack.c.b16 %v1958, %v1950
    %v2599 = vpack.c.b16 %v1959, %v1951
    %v2600 = vpack.c.b16 %v1960, %v1952
    %v2601 = vpack.c.b16 %v1969, %v1961
    %v2602 = vpack.c.b16 %v1970, %v1962
    %v2603 = vpack.c.b16 %v1971, %v1963
    %v2604 = vpack.c.b16 %v1972, %v1964
    %v2605 = vpack.c.b16 %v1973, %v1965
    %v2606 = vpack.c.b16 %v1974, %v1966
    %v2607 = vpack.c.b16 %v1975, %v1967
    %v2608 = vpack.c.b16 %v1976, %v1968
    %v2609 = vpack.c.b16 %v1985, %v1977
    %v2610 = vpack.c.b16 %v1986, %v1978
    %v2611 = vpack.c.b16 %v1987, %v1979
    %v2612 = vpack.c.b16 %v1988, %v1980
    %v2613 = vpack.c.b16 %v1989, %v1981
    %v2614 = vpack.c.b16 %v1990, %v1982
    %v2615 = vpack.c.b16 %v1991, %v1983
    %v2616 = vpack.c.b16 %v1992, %v1984
    %v2617 = vpack.c.b16 %v2001, %v1993
    %v2618 = vpack.c.b16 %v2002, %v1994
    %v2619 = vpack.c.b16 %v2003, %v1995
    %v2620 = vpack.c.b16 %v2004, %v1996
    %v2621 = vpack.c.b16 %v2005, %v1997
    %v2622 = vpack.c.b16 %v2006, %v1998
    %v2623 = vpack.c.b16 %v2007, %v1999
    %v2624 = vpack.c.b16 %v2008, %v2000
    %v2625 = vpack.c.b16 %v2017, %v2009
    %v2626 = vpack.c.b16 %v2018, %v2010
    %v2627 = vpack.c.b16 %v2019, %v2011
    %v2628 = vpack.c.b16 %v2020, %v2012
    %v2629 = vpack.c.b16 %v2021, %v2013
    %v2630 = vpack.c.b16 %v2022, %v2014
    %v2631 = vpack.c.b16 %v2023, %v2015
    %v2632 = vpack.c.b16 %v2024, %v2016
    %v2633 = vpack.c.b16 %v2033, %v2025
    %v2634 = vpack.c.b16 %v2034, %v2026
    %v2635 = vpack.c.b16 %v2035, %v2027
    %v2636 = vpack.c.b16 %v2036, %v2028
    %v2637 = vpack.c.b16 %v2037, %v2029
    %v2638 = vpack.c.b16 %v2038, %v2030
    %v2639 = vpack.c.b16 %v2039, %v2031
    %v2640 = vpack.c.b16 %v2040, %v2032
    %v2641 = vpack.c.b16 %v2049, %v2041
    %v2642 = vpack.c.b16 %v2050, %v2042
    %v2643 = vpack.c.b16 %v2051, %v2043
    %v2644 = vpack.c.b16 %v2052, %v2044
    %v2645 = vpack.c.b16 %v2053, %v2045
    %v2646 = vpack.c.b16 %v2054, %v2046
    %v2647 = vpack.c.b16 %v2055, %v2047
    %v2648 = vpack.c.b16 %v2056, %v2048
    %v2649 = vpack.c.b16 %v2065, %v2057
    %v2650 = vpack.c.b16 %v2066, %v2058
    %v2651 = vpack.c.b16 %v2067, %v2059
    %v2652 = vpack.c.b16 %v2068, %v2060
    %v2653 = vpack.c.b16 %v2069, %v2061
    %v2654 = vpack.c.b16 %v2070, %v2062
    %v2655 = vpack.c.b16 %v2071, %v2063
    %v2656 = vpack.c.b16 %v2072, %v2064
    %v2657 = vpack.c.b16 %v2081, %v2073
    %v2658 = vpack.c.b16 %v2082, %v2074
    %v2659 = vpack.c.b16 %v2083, %v2075
    %v2660 = vpack.c.b16 %v2084, %v2076
    %v2661 = vpack.c.b16 %v2085, %v2077
    %v2662 = vpack.c.b16 %v2086, %v2078
    %v2663 = vpack.c.b16 %v2087, %v2079
    %v2664 = vpack.c.b16 %v2088, %v2080
    %v2665 = vpack.c.b16 %v2097, %v2089
    %v2666 = vpack.c.b16 %v2098, %v2090
    %v2667 = vpack.c.b16 %v2099, %v2091
    %v2668 = vpack.c.b16 %v2100, %v2092
    %v2669 = vpack.c.b16 %v2101, %v2093
    %v2670 = vpack.c.b16 %v2102, %v2094
    %v2671 = vpack.c.b16 %v2103, %v2095
    %v2672 = vpack.c.b16 %v2104, %v2096
    %v2673 = vpack.c.b16 %v2113, %v2105
    %v2674 = vpack.c.b16 %v2114, %v2106
    %v2675 = vpack.c.b16 %v2115, %v2107
    %v2676 = vpack.c.b16 %v2116, %v2108
    %v2677 = vpack.c.b16 %v2117, %v2109
    %v2678 = vpack.c.b16 %v2118, %v2110
    %v2679 = vpack.c.b16 %v2119, %v2111
    %v2680 = vpack.c.b16 %v2120, %v2112
    %v2681 = vpack.c.b16 %v2129, %v2121
    %v2682 = vpack.c.b16 %v2130, %v2122
    %v2683 = vpack.c.b16 %v2131, %v2123
    %v2684 = vpack.c.b16 %v2132, %v2124
    %v2685 = vpack.c.b16 %v2133, %v2125
    %v2686 = vpack.c.b16 %v2134, %v2126
    %v2687 = vpack.c.b16 %v2135, %v2127
    %v2688 = vpack.c.b16 %v2136, %v2128
    %v2689 = vpack.c.b16 %v2145, %v2137
    %v2690 = vpack.c.b16 %v2146, %v2138
    %v2691 = vpack.c.b16 %v2147, %v2139
    %v2692 = vpack.c.b16 %v2148, %v2140
    %v2693 = vpack.c.b16 %v2149, %v2141
    %v2694 = vpack.c.b16 %v2150, %v2142
    %v2695 = vpack.c.b16 %v2151, %v2143
    %v2696 = vpack.c.b16 %v2152, %v2144
    %v2697 = vpack.c.b16 %v2161, %v2153
    %v2698 = vpack.c.b16 %v2162, %v2154
    %v2699 = vpack.c.b16 %v2163, %v2155
    %v2700 = vpack.c.b16 %v2164, %v2156
    %v2701 = vpack.c.b16 %v2165, %v2157
    %v2702 = vpack.c.b16 %v2166, %v2158
    %v2703 = vpack.c.b16 %v2167, %v2159
    %v2704 = vpack.c.b16 %v2168, %v2160
    %v2705 = vpack.c.b16 %v2177, %v2169
    %v2706 = vpack.c.b16 %v2178, %v2170
    %v2707 = vpack.c.b16 %v2179, %v2171
    %v2708 = vpack.c.b16 %v2180, %v2172
    %v2709 = vpack.c.b16 %v2181, %v2173
    %v2710 = vpack.c.b16 %v2182, %v2174
    %v2711 = vpack.c.b16 %v2183, %v2175
    %v2712 = vpack.c.b16 %v2184, %v2176
    %v2713 = vpack.c.b16 %v2193, %v2185
    %v2714 = vpack.c.b16 %v2194, %v2186
    %v2715 = vpack.c.b16 %v2195, %v2187
    %v2716 = vpack.c.b16 %v2196, %v2188
    %v2717 = vpack.c.b16 %v2197, %v2189
    %v2718 = vpack.c.b16 %v2198, %v2190
    %v2719 = vpack.c.b16 %v2199, %v2191
    %v2720 = vpack.c.b16 %v2200, %v2192
    %v2721 = vpack.c.b16 %v2209, %v2201
    %v2722 = vpack.c.b16 %v2210, %v2202
    %v2723 = vpack.c.b16 %v2211, %v2203
    %v2724 = vpack.c.b16 %v2212, %v2204
    %v2725 = vpack.c.b16 %v2213, %v2205
    %v2726 = vpack.c.b16 %v2214, %v2206
    %v2727 = vpack.c.b16 %v2215, %v2207
    %v2728 = vpack.c.b16 %v2216, %v2208
    %3241 = vmatprep.subr.bf16.mxu0 %v2218
    %3242 = vmatpush1.bf16.msra.mxu0 %v2217
    %3243 = vmatprep.subr.bf16.mxu0 %v2226
    %3244 = vmatpush1.bf16.msra.mxu0 %v2225
    %3245 = vmatprep.subr.bf16.mxu0 %v2234
    %3246 = vmatpush1.bf16.msra.mxu0 %v2233
    %3247 = vmatprep.subr.bf16.mxu0 %v2242
    %3248 = vmatpush1.bf16.msra.mxu0 %v2241
    %3249 = vmatprep.subr.bf16.mxu0 %v2250
    %3250 = vmatpush1.bf16.msra.mxu0 %v2249
    %3251 = vmatprep.subr.bf16.mxu0 %v2258
    %3252 = vmatpush1.bf16.msra.mxu0 %v2257
    %3253 = vmatprep.subr.bf16.mxu0 %v2266
    %3254 = vmatpush1.bf16.msra.mxu0 %v2265
    %3255 = vmatprep.subr.bf16.mxu0 %v2274
    %3256 = vmatpush1.bf16.msra.mxu0 %v2273
    %3257 = vmatprep.subr.bf16.mxu0 %v2282
    %3258 = vmatpush1.bf16.msra.mxu0 %v2281
    %3259 = vmatprep.subr.bf16.mxu0 %v2290
    %3260 = vmatpush1.bf16.msra.mxu0 %v2289
    %3261 = vmatprep.subr.bf16.mxu0 %v2298
    %3262 = vmatpush1.bf16.msra.mxu0 %v2297
    %3263 = vmatprep.subr.bf16.mxu0 %v2306
    %3264 = vmatpush1.bf16.msra.mxu0 %v2305
    %3265 = vmatprep.subr.bf16.mxu0 %v2314
    %3266 = vmatpush1.bf16.msra.mxu0 %v2313
    %3267 = vmatprep.subr.bf16.mxu0 %v2322
    %3268 = vmatpush1.bf16.msra.mxu0 %v2321
    %3269 = vmatprep.subr.bf16.mxu0 %v2330
    %3270 = vmatpush1.bf16.msra.mxu0 %v2329
    %3271 = vmatprep.subr.bf16.mxu0 %v2338
    %3272 = vmatpush1.bf16.msra.mxu0 %v2337
    %3273 = vmatprep.mubr.bf16.mxu0 %v120
    %3274 = vmatmul.mubr.bf16.gmra.mrb[0].mxu0 %v119
    %v3275 = vpop.f32.mrb[0].mxu0
    %v3276 = vadd.f32 %v644, %v3275
    %v3277 = vpop.f32.mrb[0].mxu0
    %v3278 = vadd.f32 %v648, %v3277
    %v3279 = vpop.f32.mrb[0].mxu0
    %v3280 = vpop.f32.mrb[0].mxu0
    %3281 = vdwg.mxu0
    %3282 = vmatprep.subr.bf16.mxu0 %v2346
    %3283 = vmatpush1.bf16.msra.mxu0 %v2345
    %3284 = vmatprep.subr.bf16.mxu0 %v2354
    %3285 = vmatpush1.bf16.msra.mxu0 %v2353
    %3286 = vmatprep.subr.bf16.mxu0 %v2362
    %3287 = vmatpush1.bf16.msra.mxu0 %v2361
    %3288 = vmatprep.subr.bf16.mxu0 %v2370
    %3289 = vmatpush1.bf16.msra.mxu0 %v2369
    %3290 = vmatprep.subr.bf16.mxu0 %v2378
    %3291 = vmatpush1.bf16.msra.mxu0 %v2377
    %3292 = vmatprep.subr.bf16.mxu0 %v2386
    %3293 = vmatpush1.bf16.msra.mxu0 %v2385
    %3294 = vmatprep.subr.bf16.mxu0 %v2394
    %3295 = vmatpush1.bf16.msra.mxu0 %v2393
    %3296 = vmatprep.subr.bf16.mxu0 %v2402
    %3297 = vmatpush1.bf16.msra.mxu0 %v2401
    %3298 = vmatprep.subr.bf16.mxu0 %v2410
    %3299 = vmatpush1.bf16.msra.mxu0 %v2409
    %3300 = vmatprep.subr.bf16.mxu0 %v2418
    %3301 = vmatpush1.bf16.msra.mxu0 %v2417
    %3302 = vmatprep.subr.bf16.mxu0 %v2426
    %3303 = vmatpush1.bf16.msra.mxu0 %v2425
    %3304 = vmatprep.subr.bf16.mxu0 %v2434
    %3305 = vmatpush1.bf16.msra.mxu0 %v2433
    %3306 = vmatprep.subr.bf16.mxu0 %v2442
    %3307 = vmatpush1.bf16.msra.mxu0 %v2441
    %3308 = vmatprep.subr.bf16.mxu0 %v2450
    %3309 = vmatpush1.bf16.msra.mxu0 %v2449
    %3310 = vmatprep.subr.bf16.mxu0 %v2458
    %3311 = vmatpush1.bf16.msra.mxu0 %v2457
    %3312 = vmatprep.subr.bf16.mxu0 %v2466
    %3313 = vmatpush1.bf16.msra.mxu0 %v2465
    %3314 = vmatprep.mubr.bf16.mxu0 %v122
    %3315 = vmatmul.mubr.bf16.gmra.mrb[0].mxu0 %v121
    %v3316 = vpop.f32.mrb[0].mxu0
    %v3317 = vadd.f32 %v3276, %v3316
    %v3318 = vpop.f32.mrb[0].mxu0
    %v3319 = vadd.f32 %v3278, %v3318
    %v3320 = vpop.f32.mrb[0].mxu0
    %v3321 = vpop.f32.mrb[0].mxu0
    %3322 = vdwg.mxu0
    %3323 = vmatprep.subr.bf16.mxu0 %v2474
    %3324 = vmatpush1.bf16.msra.mxu0 %v2473
    %3325 = vmatprep.subr.bf16.mxu0 %v2482
    %3326 = vmatpush1.bf16.msra.mxu0 %v2481
    %3327 = vmatprep.subr.bf16.mxu0 %v2490
    %3328 = vmatpush1.bf16.msra.mxu0 %v2489
    %3329 = vmatprep.subr.bf16.mxu0 %v2498
    %3330 = vmatpush1.bf16.msra.mxu0 %v2497
    %3331 = vmatprep.subr.bf16.mxu0 %v2506
    %3332 = vmatpush1.bf16.msra.mxu0 %v2505
    %3333 = vmatprep.subr.bf16.mxu0 %v2514
    %3334 = vmatpush1.bf16.msra.mxu0 %v2513
    %3335 = vmatprep.subr.bf16.mxu0 %v2522
    %3336 = vmatpush1.bf16.msra.mxu0 %v2521
    %3337 = vmatprep.subr.bf16.mxu0 %v2530
    %3338 = vmatpush1.bf16.msra.mxu0 %v2529
    %3339 = vmatprep.subr.bf16.mxu0 %v2538
    %3340 = vmatpush1.bf16.msra.mxu0 %v2537
    %3341 = vmatprep.subr.bf16.mxu0 %v2546
    %3342 = vmatpush1.bf16.msra.mxu0 %v2545
    %3343 = vmatprep.subr.bf16.mxu0 %v2554
    %3344 = vmatpush1.bf16.msra.mxu0 %v2553
    %3345 = vmatprep.subr.bf16.mxu0 %v2562
    %3346 = vmatpush1.bf16.msra.mxu0 %v2561
    %3347 = vmatprep.subr.bf16.mxu0 %v2570
    %3348 = vmatpush1.bf16.msra.mxu0 %v2569
    %3349 = vmatprep.subr.bf16.mxu0 %v2578
    %3350 = vmatpush1.bf16.msra.mxu0 %v2577
    %3351 = vmatprep.subr.bf16.mxu0 %v2586
    %3352 = vmatpush1.bf16.msra.mxu0 %v2585
    %3353 = vmatprep.subr.bf16.mxu0 %v2594
    %3354 = vmatpush1.bf16.msra.mxu0 %v2593
    %3355 = vmatprep.mubr.bf16.mxu0 %v124
    %3356 = vmatmul.mubr.bf16.gmra.mrb[0].mxu0 %v123
    %v3357 = vpop.f32.mrb[0].mxu0
    %v3358 = vadd.f32 %v3317, %v3357
    %v3359 = vpop.f32.mrb[0].mxu0
    %v3360 = vadd.f32 %v3319, %v3359
    %v3361 = vpop.f32.mrb[0].mxu0
    %v3362 = vpop.f32.mrb[0].mxu0
    %3363 = vdwg.mxu0
    %3364 = vmatprep.subr.bf16.mxu0 %v2602
    %3365 = vmatpush1.bf16.msra.mxu0 %v2601
    %3366 = vmatprep.subr.bf16.mxu0 %v2610
    %3367 = vmatpush1.bf16.msra.mxu0 %v2609
    %3368 = vmatprep.subr.bf16.mxu0 %v2618
    %3369 = vmatpush1.bf16.msra.mxu0 %v2617
    %3370 = vmatprep.subr.bf16.mxu0 %v2626
    %3371 = vmatpush1.bf16.msra.mxu0 %v2625
    %3372 = vmatprep.subr.bf16.mxu0 %v2634
    %3373 = vmatpush1.bf16.msra.mxu0 %v2633
    %3374 = vmatprep.subr.bf16.mxu0 %v2642
    %3375 = vmatpush1.bf16.msra.mxu0 %v2641
    %3376 = vmatprep.subr.bf16.mxu0 %v2650
    %3377 = vmatpush1.bf16.msra.mxu0 %v2649
    %3378 = vmatprep.subr.bf16.mxu0 %v2658
    %3379 = vmatpush1.bf16.msra.mxu0 %v2657
    %3380 = vmatprep.subr.bf16.mxu0 %v2666
    %3381 = vmatpush1.bf16.msra.mxu0 %v2665
    %3382 = vmatprep.subr.bf16.mxu0 %v2674
    %3383 = vmatpush1.bf16.msra.mxu0 %v2673
    %3384 = vmatprep.subr.bf16.mxu0 %v2682
    %3385 = vmatpush1.bf16.msra.mxu0 %v2681
    %3386 = vmatprep.subr.bf16.mxu0 %v2690
    %3387 = vmatpush1.bf16.msra.mxu0 %v2689
    %3388 = vmatprep.subr.bf16.mxu0 %v2698
    %3389 = vmatpush1.bf16.msra.mxu0 %v2697
    %3390 = vmatprep.subr.bf16.mxu0 %v2706
    %3391 = vmatpush1.bf16.msra.mxu0 %v2705
    %3392 = vmatprep.subr.bf16.mxu0 %v2714
    %3393 = vmatpush1.bf16.msra.mxu0 %v2713
    %3394 = vmatprep.subr.bf16.mxu0 %v2722
    %3395 = vmatpush1.bf16.msra.mxu0 %v2721
    %3396 = vmatprep.mubr.bf16.mxu0 %v126
    %3397 = vmatmul.mubr.bf16.gmra.mrb[0].mxu0 %v125
    %v3398 = vpop.f32.mrb[0].mxu0
    %v3399 = vadd.f32 %v3358, %v3398
    %v3400 = vpop.f32.mrb[0].mxu0
    %v3401 = vadd.f32 %v3360, %v3400
    %v3402 = vpop.f32.mrb[0].mxu0
    %v3403 = vpop.f32.mrb[0].mxu0
    %3404 = vdwg.mxu0
    %3405 = vmatprep.subr.bf16.mxu0 %v2220
    %3406 = vmatpush1.bf16.msra.mxu0 %v2219
    %3407 = vmatprep.subr.bf16.mxu0 %v2228
    %3408 = vmatpush1.bf16.msra.mxu0 %v2227
    %3409 = vmatprep.subr.bf16.mxu0 %v2236
    %3410 = vmatpush1.bf16.msra.mxu0 %v2235
    %3411 = vmatprep.subr.bf16.mxu0 %v2244
    %3412 = vmatpush1.bf16.msra.mxu0 %v2243
    %3413 = vmatprep.subr.bf16.mxu0 %v2252
    %3414 = vmatpush1.bf16.msra.mxu0 %v2251
    %3415 = vmatprep.subr.bf16.mxu0 %v2260
    %3416 = vmatpush1.bf16.msra.mxu0 %v2259
    %3417 = vmatprep.subr.bf16.mxu0 %v2268
    %3418 = vmatpush1.bf16.msra.mxu0 %v2267
    %3419 = vmatprep.subr.bf16.mxu0 %v2276
    %3420 = vmatpush1.bf16.msra.mxu0 %v2275
    %3421 = vmatprep.subr.bf16.mxu0 %v2284
    %3422 = vmatpush1.bf16.msra.mxu0 %v2283
    %3423 = vmatprep.subr.bf16.mxu0 %v2292
    %3424 = vmatpush1.bf16.msra.mxu0 %v2291
    %3425 = vmatprep.subr.bf16.mxu0 %v2300
    %3426 = vmatpush1.bf16.msra.mxu0 %v2299
    %3427 = vmatprep.subr.bf16.mxu0 %v2308
    %3428 = vmatpush1.bf16.msra.mxu0 %v2307
    %3429 = vmatprep.subr.bf16.mxu0 %v2316
    %3430 = vmatpush1.bf16.msra.mxu0 %v2315
    %3431 = vmatprep.subr.bf16.mxu0 %v2324
    %3432 = vmatpush1.bf16.msra.mxu0 %v2323
    %3433 = vmatprep.subr.bf16.mxu0 %v2332
    %3434 = vmatpush1.bf16.msra.mxu0 %v2331
    %3435 = vmatprep.subr.bf16.mxu0 %v2340
    %3436 = vmatpush1.bf16.msra.mxu0 %v2339
    %3437 = vmatprep.mubr.bf16.mxu0 %v120
    %3438 = vmatmul.mubr.bf16.gmra.mrb[0].mxu0 %v119
    %v3439 = vpop.f32.mrb[0].mxu0
    %v3440 = vadd.f32 %v652, %v3439
    %v3441 = vpop.f32.mrb[0].mxu0
    %v3442 = vadd.f32 %v656, %v3441
    %v3443 = vpop.f32.mrb[0].mxu0
    %v3444 = vpop.f32.mrb[0].mxu0
    %3445 = vdwg.mxu0
    %3446 = vmatprep.subr.bf16.mxu0 %v2348
    %3447 = vmatpush1.bf16.msra.mxu0 %v2347
    %3448 = vmatprep.subr.bf16.mxu0 %v2356
    %3449 = vmatpush1.bf16.msra.mxu0 %v2355
    %3450 = vmatprep.subr.bf16.mxu0 %v2364
    %3451 = vmatpush1.bf16.msra.mxu0 %v2363
    %3452 = vmatprep.subr.bf16.mxu0 %v2372
    %3453 = vmatpush1.bf16.msra.mxu0 %v2371
    %3454 = vmatprep.subr.bf16.mxu0 %v2380
    %3455 = vmatpush1.bf16.msra.mxu0 %v2379
    %3456 = vmatprep.subr.bf16.mxu0 %v2388
    %3457 = vmatpush1.bf16.msra.mxu0 %v2387
    %3458 = vmatprep.subr.bf16.mxu0 %v2396
    %3459 = vmatpush1.bf16.msra.mxu0 %v2395
    %3460 = vmatprep.subr.bf16.mxu0 %v2404
    %3461 = vmatpush1.bf16.msra.mxu0 %v2403
    %3462 = vmatprep.subr.bf16.mxu0 %v2412
    %3463 = vmatpush1.bf16.msra.mxu0 %v2411
    %3464 = vmatprep.subr.bf16.mxu0 %v2420
    %3465 = vmatpush1.bf16.msra.mxu0 %v2419
    %3466 = vmatprep.subr.bf16.mxu0 %v2428
    %3467 = vmatpush1.bf16.msra.mxu0 %v2427
    %3468 = vmatprep.subr.bf16.mxu0 %v2436
    %3469 = vmatpush1.bf16.msra.mxu0 %v2435
    %3470 = vmatprep.subr.bf16.mxu0 %v2444
    %3471 = vmatpush1.bf16.msra.mxu0 %v2443
    %3472 = vmatprep.subr.bf16.mxu0 %v2452
    %3473 = vmatpush1.bf16.msra.mxu0 %v2451
    %3474 = vmatprep.subr.bf16.mxu0 %v2460
    %3475 = vmatpush1.bf16.msra.mxu0 %v2459
    %3476 = vmatprep.subr.bf16.mxu0 %v2468
    %3477 = vmatpush1.bf16.msra.mxu0 %v2467
    %3478 = vmatprep.mubr.bf16.mxu0 %v122
    %3479 = vmatmul.mubr.bf16.gmra.mrb[0].mxu0 %v121
    %v3480 = vpop.f32.mrb[0].mxu0
    %v3481 = vadd.f32 %v3440, %v3480
    %v3482 = vpop.f32.mrb[0].mxu0
    %v3483 = vadd.f32 %v3442, %v3482
    %v3484 = vpop.f32.mrb[0].mxu0
    %v3485 = vpop.f32.mrb[0].mxu0
    %3486 = vdwg.mxu0
    %3487 = vmatprep.subr.bf16.mxu0 %v2476
    %3488 = vmatpush1.bf16.msra.mxu0 %v2475
    %3489 = vmatprep.subr.bf16.mxu0 %v2484
    %3490 = vmatpush1.bf16.msra.mxu0 %v2483
    %3491 = vmatprep.subr.bf16.mxu0 %v2492
    %3492 = vmatpush1.bf16.msra.mxu0 %v2491
    %3493 = vmatprep.subr.bf16.mxu0 %v2500
    %3494 = vmatpush1.bf16.msra.mxu0 %v2499
    %3495 = vmatprep.subr.bf16.mxu0 %v2508
    %3496 = vmatpush1.bf16.msra.mxu0 %v2507
    %3497 = vmatprep.subr.bf16.mxu0 %v2516
    %3498 = vmatpush1.bf16.msra.mxu0 %v2515
    %3499 = vmatprep.subr.bf16.mxu0 %v2524
    %3500 = vmatpush1.bf16.msra.mxu0 %v2523
    %3501 = vmatprep.subr.bf16.mxu0 %v2532
    %3502 = vmatpush1.bf16.msra.mxu0 %v2531
    %3503 = vmatprep.subr.bf16.mxu0 %v2540
    %3504 = vmatpush1.bf16.msra.mxu0 %v2539
    %3505 = vmatprep.subr.bf16.mxu0 %v2548
    %3506 = vmatpush1.bf16.msra.mxu0 %v2547
    %3507 = vmatprep.subr.bf16.mxu0 %v2556
    %3508 = vmatpush1.bf16.msra.mxu0 %v2555
    %3509 = vmatprep.subr.bf16.mxu0 %v2564
    %3510 = vmatpush1.bf16.msra.mxu0 %v2563
    %3511 = vmatprep.subr.bf16.mxu0 %v2572
    %3512 = vmatpush1.bf16.msra.mxu0 %v2571
    %3513 = vmatprep.subr.bf16.mxu0 %v2580
    %3514 = vmatpush1.bf16.msra.mxu0 %v2579
    %3515 = vmatprep.subr.bf16.mxu0 %v2588
    %3516 = vmatpush1.bf16.msra.mxu0 %v2587
    %3517 = vmatprep.subr.bf16.mxu0 %v2596
    %3518 = vmatpush1.bf16.msra.mxu0 %v2595
    %3519 = vmatprep.mubr.bf16.mxu0 %v124
    %3520 = vmatmul.mubr.bf16.gmra.mrb[0].mxu0 %v123
    %v3521 = vpop.f32.mrb[0].mxu0
    %v3522 = vadd.f32 %v3481, %v3521
    %v3523 = vpop.f32.mrb[0].mxu0
    %v3524 = vadd.f32 %v3483, %v3523
    %v3525 = vpop.f32.mrb[0].mxu0
    %v3526 = vpop.f32.mrb[0].mxu0
    %3527 = vdwg.mxu0
    %3528 = vmatprep.subr.bf16.mxu0 %v2604
    %3529 = vmatpush1.bf16.msra.mxu0 %v2603
    %3530 = vmatprep.subr.bf16.mxu0 %v2612
    %3531 = vmatpush1.bf16.msra.mxu0 %v2611
    %3532 = vmatprep.subr.bf16.mxu0 %v2620
    %3533 = vmatpush1.bf16.msra.mxu0 %v2619
    %3534 = vmatprep.subr.bf16.mxu0 %v2628
    %3535 = vmatpush1.bf16.msra.mxu0 %v2627
    %3536 = vmatprep.subr.bf16.mxu0 %v2636
    %3537 = vmatpush1.bf16.msra.mxu0 %v2635
    %3538 = vmatprep.subr.bf16.mxu0 %v2644
    %3539 = vmatpush1.bf16.msra.mxu0 %v2643
    %3540 = vmatprep.subr.bf16.mxu0 %v2652
    %3541 = vmatpush1.bf16.msra.mxu0 %v2651
    %3542 = vmatprep.subr.bf16.mxu0 %v2660
    %3543 = vmatpush1.bf16.msra.mxu0 %v2659
    %3544 = vmatprep.subr.bf16.mxu0 %v2668
    %3545 = vmatpush1.bf16.msra.mxu0 %v2667
    %3546 = vmatprep.subr.bf16.mxu0 %v2676
    %3547 = vmatpush1.bf16.msra.mxu0 %v2675
    %3548 = vmatprep.subr.bf16.mxu0 %v2684
    %3549 = vmatpush1.bf16.msra.mxu0 %v2683
    %3550 = vmatprep.subr.bf16.mxu0 %v2692
    %3551 = vmatpush1.bf16.msra.mxu0 %v2691
    %3552 = vmatprep.subr.bf16.mxu0 %v2700
    %3553 = vmatpush1.bf16.msra.mxu0 %v2699
    %3554 = vmatprep.subr.bf16.mxu0 %v2708
    %3555 = vmatpush1.bf16.msra.mxu0 %v2707
    %3556 = vmatprep.subr.bf16.mxu0 %v2716
    %3557 = vmatpush1.bf16.msra.mxu0 %v2715
    %3558 = vmatprep.subr.bf16.mxu0 %v2724
    %3559 = vmatpush1.bf16.msra.mxu0 %v2723
    %3560 = vmatprep.mubr.bf16.mxu0 %v126
    %3561 = vmatmul.mubr.bf16.gmra.mrb[0].mxu0 %v125
    %v3562 = vpop.f32.mrb[0].mxu0
    %v3563 = vadd.f32 %v3522, %v3562
    %v3564 = vpop.f32.mrb[0].mxu0
    %v3565 = vadd.f32 %v3524, %v3564
    %v3566 = vpop.f32.mrb[0].mxu0
    %v3567 = vpop.f32.mrb[0].mxu0
    %3568 = vdwg.mxu0
    %3569 = vmatprep.subr.bf16.mxu0 %v2222
    %3570 = vmatpush1.bf16.msra.mxu0 %v2221
    %3571 = vmatprep.subr.bf16.mxu0 %v2230
    %3572 = vmatpush1.bf16.msra.mxu0 %v2229
    %3573 = vmatprep.subr.bf16.mxu0 %v2238
    %3574 = vmatpush1.bf16.msra.mxu0 %v2237
    %3575 = vmatprep.subr.bf16.mxu0 %v2246
    %3576 = vmatpush1.bf16.msra.mxu0 %v2245
    %3577 = vmatprep.subr.bf16.mxu0 %v2254
    %3578 = vmatpush1.bf16.msra.mxu0 %v2253
    %3579 = vmatprep.subr.bf16.mxu0 %v2262
    %3580 = vmatpush1.bf16.msra.mxu0 %v2261
    %3581 = vmatprep.subr.bf16.mxu0 %v2270
    %3582 = vmatpush1.bf16.msra.mxu0 %v2269
    %3583 = vmatprep.subr.bf16.mxu0 %v2278
    %3584 = vmatpush1.bf16.msra.mxu0 %v2277
    %3585 = vmatprep.subr.bf16.mxu0 %v2286
    %3586 = vmatpush1.bf16.msra.mxu0 %v2285
    %3587 = vmatprep.subr.bf16.mxu0 %v2294
    %3588 = vmatpush1.bf16.msra.mxu0 %v2293
    %3589 = vmatprep.subr.bf16.mxu0 %v2302
    %3590 = vmatpush1.bf16.msra.mxu0 %v2301
    %3591 = vmatprep.subr.bf16.mxu0 %v2310
    %3592 = vmatpush1.bf16.msra.mxu0 %v2309
    %3593 = vmatprep.subr.bf16.mxu0 %v2318
    %3594 = vmatpush1.bf16.msra.mxu0 %v2317
    %3595 = vmatprep.subr.bf16.mxu0 %v2326
    %3596 = vmatpush1.bf16.msra.mxu0 %v2325
    %3597 = vmatprep.subr.bf16.mxu0 %v2334
    %3598 = vmatpush1.bf16.msra.mxu0 %v2333
    %3599 = vmatprep.subr.bf16.mxu0 %v2342
    %3600 = vmatpush1.bf16.msra.mxu0 %v2341
    %3601 = vmatprep.mubr.bf16.mxu0 %v120
    %3602 = vmatmul.mubr.bf16.gmra.mrb[0].mxu0 %v119
    %v3603 = vpop.f32.mrb[0].mxu0
    %v3604 = vadd.f32 %v660, %v3603
    %v3605 = vpop.f32.mrb[0].mxu0
    %v3606 = vadd.f32 %v664, %v3605
    %v3607 = vpop.f32.mrb[0].mxu0
    %v3608 = vpop.f32.mrb[0].mxu0
    %3609 = vdwg.mxu0
    %3610 = vmatprep.subr.bf16.mxu0 %v2350
    %3611 = vmatpush1.bf16.msra.mxu0 %v2349
    %3612 = vmatprep.subr.bf16.mxu0 %v2358
    %3613 = vmatpush1.bf16.msra.mxu0 %v2357
    %3614 = vmatprep.subr.bf16.mxu0 %v2366
    %3615 = vmatpush1.bf16.msra.mxu0 %v2365
    %3616 = vmatprep.subr.bf16.mxu0 %v2374
    %3617 = vmatpush1.bf16.msra.mxu0 %v2373
    %3618 = vmatprep.subr.bf16.mxu0 %v2382
    %3619 = vmatpush1.bf16.msra.mxu0 %v2381
    %3620 = vmatprep.subr.bf16.mxu0 %v2390
    %3621 = vmatpush1.bf16.msra.mxu0 %v2389
    %3622 = vmatprep.subr.bf16.mxu0 %v2398
    %3623 = vmatpush1.bf16.msra.mxu0 %v2397
    %3624 = vmatprep.subr.bf16.mxu0 %v2406
    %3625 = vmatpush1.bf16.msra.mxu0 %v2405
    %3626 = vmatprep.subr.bf16.mxu0 %v2414
    %3627 = vmatpush1.bf16.msra.mxu0 %v2413
    %3628 = vmatprep.subr.bf16.mxu0 %v2422
    %3629 = vmatpush1.bf16.msra.mxu0 %v2421
    %3630 = vmatprep.subr.bf16.mxu0 %v2430
    %3631 = vmatpush1.bf16.msra.mxu0 %v2429
    %3632 = vmatprep.subr.bf16.mxu0 %v2438
    %3633 = vmatpush1.bf16.msra.mxu0 %v2437
    %3634 = vmatprep.subr.bf16.mxu0 %v2446
    %3635 = vmatpush1.bf16.msra.mxu0 %v2445
    %3636 = vmatprep.subr.bf16.mxu0 %v2454
    %3637 = vmatpush1.bf16.msra.mxu0 %v2453
    %3638 = vmatprep.subr.bf16.mxu0 %v2462
    %3639 = vmatpush1.bf16.msra.mxu0 %v2461
    %3640 = vmatprep.subr.bf16.mxu0 %v2470
    %3641 = vmatpush1.bf16.msra.mxu0 %v2469
    %3642 = vmatprep.mubr.bf16.mxu0 %v122
    %3643 = vmatmul.mubr.bf16.gmra.mrb[0].mxu0 %v121
    %v3644 = vpop.f32.mrb[0].mxu0
    %v3645 = vadd.f32 %v3604, %v3644
    %v3646 = vpop.f32.mrb[0].mxu0
    %v3647 = vadd.f32 %v3606, %v3646
    %v3648 = vpop.f32.mrb[0].mxu0
    %v3649 = vpop.f32.mrb[0].mxu0
    %3650 = vdwg.mxu0
    %3651 = vmatprep.subr.bf16.mxu0 %v2478
    %3652 = vmatpush1.bf16.msra.mxu0 %v2477
    %3653 = vmatprep.subr.bf16.mxu0 %v2486
    %3654 = vmatpush1.bf16.msra.mxu0 %v2485
    %3655 = vmatprep.subr.bf16.mxu0 %v2494
    %3656 = vmatpush1.bf16.msra.mxu0 %v2493
    %3657 = vmatprep.subr.bf16.mxu0 %v2502
    %3658 = vmatpush1.bf16.msra.mxu0 %v2501
    %3659 = vmatprep.subr.bf16.mxu0 %v2510
    %3660 = vmatpush1.bf16.msra.mxu0 %v2509
    %3661 = vmatprep.subr.bf16.mxu0 %v2518
    %3662 = vmatpush1.bf16.msra.mxu0 %v2517
    %3663 = vmatprep.subr.bf16.mxu0 %v2526
    %3664 = vmatpush1.bf16.msra.mxu0 %v2525
    %3665 = vmatprep.subr.bf16.mxu0 %v2534
    %3666 = vmatpush1.bf16.msra.mxu0 %v2533
    %3667 = vmatprep.subr.bf16.mxu0 %v2542
    %3668 = vmatpush1.bf16.msra.mxu0 %v2541
    %3669 = vmatprep.subr.bf16.mxu0 %v2550
    %3670 = vmatpush1.bf16.msra.mxu0 %v2549
    %3671 = vmatprep.subr.bf16.mxu0 %v2558
    %3672 = vmatpush1.bf16.msra.mxu0 %v2557
    %3673 = vmatprep.subr.bf16.mxu0 %v2566
    %3674 = vmatpush1.bf16.msra.mxu0 %v2565
    %3675 = vmatprep.subr.bf16.mxu0 %v2574
    %3676 = vmatpush1.bf16.msra.mxu0 %v2573
    %3677 = vmatprep.subr.bf16.mxu0 %v2582
    %3678 = vmatpush1.bf16.msra.mxu0 %v2581
    %3679 = vmatprep.subr.bf16.mxu0 %v2590
    %3680 = vmatpush1.bf16.msra.mxu0 %v2589
    %3681 = vmatprep.subr.bf16.mxu0 %v2598
    %3682 = vmatpush1.bf16.msra.mxu0 %v2597
    %3683 = vmatprep.mubr.bf16.mxu0 %v124
    %3684 = vmatmul.mubr.bf16.gmra.mrb[0].mxu0 %v123
    %v3685 = vpop.f32.mrb[0].mxu0
    %v3686 = vadd.f32 %v3645, %v3685
    %v3687 = vpop.f32.mrb[0].mxu0
    %v3688 = vadd.f32 %v3647, %v3687
    %v3689 = vpop.f32.mrb[0].mxu0
    %v3690 = vpop.f32.mrb[0].mxu0
    %3691 = vdwg.mxu0
    %3692 = vmatprep.subr.bf16.mxu0 %v2606
    %3693 = vmatpush1.bf16.msra.mxu0 %v2605
    %3694 = vmatprep.subr.bf16.mxu0 %v2614
    %3695 = vmatpush1.bf16.msra.mxu0 %v2613
    %3696 = vmatprep.subr.bf16.mxu0 %v2622
    %3697 = vmatpush1.bf16.msra.mxu0 %v2621
    %3698 = vmatprep.subr.bf16.mxu0 %v2630
    %3699 = vmatpush1.bf16.msra.mxu0 %v2629
    %3700 = vmatprep.subr.bf16.mxu0 %v2638
    %3701 = vmatpush1.bf16.msra.mxu0 %v2637
    %3702 = vmatprep.subr.bf16.mxu0 %v2646
    %3703 = vmatpush1.bf16.msra.mxu0 %v2645
    %3704 = vmatprep.subr.bf16.mxu0 %v2654
    %3705 = vmatpush1.bf16.msra.mxu0 %v2653
    %3706 = vmatprep.subr.bf16.mxu0 %v2662
    %3707 = vmatpush1.bf16.msra.mxu0 %v2661
    %3708 = vmatprep.subr.bf16.mxu0 %v2670
    %3709 = vmatpush1.bf16.msra.mxu0 %v2669
    %3710 = vmatprep.subr.bf16.mxu0 %v2678
    %3711 = vmatpush1.bf16.msra.mxu0 %v2677
    %3712 = vmatprep.subr.bf16.mxu0 %v2686
    %3713 = vmatpush1.bf16.msra.mxu0 %v2685
    %3714 = vmatprep.subr.bf16.mxu0 %v2694
    %3715 = vmatpush1.bf16.msra.mxu0 %v2693
    %3716 = vmatprep.subr.bf16.mxu0 %v2702
    %3717 = vmatpush1.bf16.msra.mxu0 %v2701
    %3718 = vmatprep.subr.bf16.mxu0 %v2710
    %3719 = vmatpush1.bf16.msra.mxu0 %v2709
    %3720 = vmatprep.subr.bf16.mxu0 %v2718
    %3721 = vmatpush1.bf16.msra.mxu0 %v2717
    %3722 = vmatprep.subr.bf16.mxu0 %v2726
    %3723 = vmatpush1.bf16.msra.mxu0 %v2725
    %3724 = vmatprep.mubr.bf16.mxu0 %v126
    %3725 = vmatmul.mubr.bf16.gmra.mrb[0].mxu0 %v125
    %v3726 = vpop.f32.mrb[0].mxu0
    %v3727 = vadd.f32 %v3686, %v3726
    %v3728 = vpop.f32.mrb[0].mxu0
    %v3729 = vadd.f32 %v3688, %v3728
    %v3730 = vpop.f32.mrb[0].mxu0
    %v3731 = vpop.f32.mrb[0].mxu0
    %3732 = vdwg.mxu0
    %3733 = vmatprep.subr.bf16.mxu0 %v2224
    %3734 = vmatpush1.bf16.msra.mxu0 %v2223
    %3735 = vmatprep.subr.bf16.mxu0 %v2232
    %3736 = vmatpush1.bf16.msra.mxu0 %v2231
    %3737 = vmatprep.subr.bf16.mxu0 %v2240
    %3738 = vmatpush1.bf16.msra.mxu0 %v2239
    %3739 = vmatprep.subr.bf16.mxu0 %v2248
    %3740 = vmatpush1.bf16.msra.mxu0 %v2247
    %3741 = vmatprep.subr.bf16.mxu0 %v2256
    %3742 = vmatpush1.bf16.msra.mxu0 %v2255
    %3743 = vmatprep.subr.bf16.mxu0 %v2264
    %3744 = vmatpush1.bf16.msra.mxu0 %v2263
    %3745 = vmatprep.subr.bf16.mxu0 %v2272
    %3746 = vmatpush1.bf16.msra.mxu0 %v2271
    %3747 = vmatprep.subr.bf16.mxu0 %v2280
    %3748 = vmatpush1.bf16.msra.mxu0 %v2279
    %3749 = vmatprep.subr.bf16.mxu0 %v2288
    %3750 = vmatpush1.bf16.msra.mxu0 %v2287
    %3751 = vmatprep.subr.bf16.mxu0 %v2296
    %3752 = vmatpush1.bf16.msra.mxu0 %v2295
    %3753 = vmatprep.subr.bf16.mxu0 %v2304
    %3754 = vmatpush1.bf16.msra.mxu0 %v2303
    %3755 = vmatprep.subr.bf16.mxu0 %v2312
    %3756 = vmatpush1.bf16.msra.mxu0 %v2311
    %3757 = vmatprep.subr.bf16.mxu0 %v2320
    %3758 = vmatpush1.bf16.msra.mxu0 %v2319
    %3759 = vmatprep.subr.bf16.mxu0 %v2328
    %3760 = vmatpush1.bf16.msra.mxu0 %v2327
    %3761 = vmatprep.subr.bf16.mxu0 %v2336
    %3762 = vmatpush1.bf16.msra.mxu0 %v2335
    %3763 = vmatprep.subr.bf16.mxu0 %v2344
    %3764 = vmatpush1.bf16.msra.mxu0 %v2343
    %3765 = vmatprep.mubr.bf16.mxu0 %v120
    %3766 = vmatmul.mubr.bf16.gmra.mrb[0].mxu0 %v119
    %v3767 = vpop.f32.mrb[0].mxu0
    %v3768 = vadd.f32 %v668, %v3767
    %v3769 = vpop.f32.mrb[0].mxu0
    %v3770 = vadd.f32 %v672, %v3769
    %v3771 = vpop.f32.mrb[0].mxu0
    %v3772 = vpop.f32.mrb[0].mxu0
    %3773 = vdwg.mxu0
    %3774 = vmatprep.subr.bf16.mxu0 %v2352
    %3775 = vmatpush1.bf16.msra.mxu0 %v2351
    %3776 = vmatprep.subr.bf16.mxu0 %v2360
    %3777 = vmatpush1.bf16.msra.mxu0 %v2359
    %3778 = vmatprep.subr.bf16.mxu0 %v2368
    %3779 = vmatpush1.bf16.msra.mxu0 %v2367
    %3780 = vmatprep.subr.bf16.mxu0 %v2376
    %3781 = vmatpush1.bf16.msra.mxu0 %v2375
    %3782 = vmatprep.subr.bf16.mxu0 %v2384
    %3783 = vmatpush1.bf16.msra.mxu0 %v2383
    %3784 = vmatprep.subr.bf16.mxu0 %v2392
    %3785 = vmatpush1.bf16.msra.mxu0 %v2391
    %3786 = vmatprep.subr.bf16.mxu0 %v2400
    %3787 = vmatpush1.bf16.msra.mxu0 %v2399
    %3788 = vmatprep.subr.bf16.mxu0 %v2408
    %3789 = vmatpush1.bf16.msra.mxu0 %v2407
    %3790 = vmatprep.subr.bf16.mxu0 %v2416
    %3791 = vmatpush1.bf16.msra.mxu0 %v2415
    %3792 = vmatprep.subr.bf16.mxu0 %v2424
    %3793 = vmatpush1.bf16.msra.mxu0 %v2423
    %3794 = vmatprep.subr.bf16.mxu0 %v2432
    %3795 = vmatpush1.bf16.msra.mxu0 %v2431
    %3796 = vmatprep.subr.bf16.mxu0 %v2440
    %3797 = vmatpush1.bf16.msra.mxu0 %v2439
    %3798 = vmatprep.subr.bf16.mxu0 %v2448
    %3799 = vmatpush1.bf16.msra.mxu0 %v2447
    %3800 = vmatprep.subr.bf16.mxu0 %v2456
    %3801 = vmatpush1.bf16.msra.mxu0 %v2455
    %3802 = vmatprep.subr.bf16.mxu0 %v2464
    %3803 = vmatpush1.bf16.msra.mxu0 %v2463
    %3804 = vmatprep.subr.bf16.mxu0 %v2472
    %3805 = vmatpush1.bf16.msra.mxu0 %v2471
    %3806 = vmatprep.mubr.bf16.mxu0 %v122
    %3807 = vmatmul.mubr.bf16.gmra.mrb[0].mxu0 %v121
    %v3808 = vpop.f32.mrb[0].mxu0
    %v3809 = vadd.f32 %v3768, %v3808
    %v3810 = vpop.f32.mrb[0].mxu0
    %v3811 = vadd.f32 %v3770, %v3810
    %v3812 = vpop.f32.mrb[0].mxu0
    %v3813 = vpop.f32.mrb[0].mxu0
    %3814 = vdwg.mxu0
    %3815 = vmatprep.subr.bf16.mxu0 %v2480
    %3816 = vmatpush1.bf16.msra.mxu0 %v2479
    %3817 = vmatprep.subr.bf16.mxu0 %v2488
    %3818 = vmatpush1.bf16.msra.mxu0 %v2487
    %3819 = vmatprep.subr.bf16.mxu0 %v2496
    %3820 = vmatpush1.bf16.msra.mxu0 %v2495
    %3821 = vmatprep.subr.bf16.mxu0 %v2504
    %3822 = vmatpush1.bf16.msra.mxu0 %v2503
    %3823 = vmatprep.subr.bf16.mxu0 %v2512
    %3824 = vmatpush1.bf16.msra.mxu0 %v2511
    %3825 = vmatprep.subr.bf16.mxu0 %v2520
    %3826 = vmatpush1.bf16.msra.mxu0 %v2519
    %3827 = vmatprep.subr.bf16.mxu0 %v2528
    %3828 = vmatpush1.bf16.msra.mxu0 %v2527
    %3829 = vmatprep.subr.bf16.mxu0 %v2536
    %3830 = vmatpush1.bf16.msra.mxu0 %v2535
    %3831 = vmatprep.subr.bf16.mxu0 %v2544
    %3832 = vmatpush1.bf16.msra.mxu0 %v2543
    %3833 = vmatprep.subr.bf16.mxu0 %v2552
    %3834 = vmatpush1.bf16.msra.mxu0 %v2551
    %3835 = vmatprep.subr.bf16.mxu0 %v2560
    %3836 = vmatpush1.bf16.msra.mxu0 %v2559
    %3837 = vmatprep.subr.bf16.mxu0 %v2568
    %3838 = vmatpush1.bf16.msra.mxu0 %v2567
    %3839 = vmatprep.subr.bf16.mxu0 %v2576
    %3840 = vmatpush1.bf16.msra.mxu0 %v2575
    %3841 = vmatprep.subr.bf16.mxu0 %v2584
    %3842 = vmatpush1.bf16.msra.mxu0 %v2583
    %3843 = vmatprep.subr.bf16.mxu0 %v2592
    %3844 = vmatpush1.bf16.msra.mxu0 %v2591
    %3845 = vmatprep.subr.bf16.mxu0 %v2600
    %3846 = vmatpush1.bf16.msra.mxu0 %v2599
    %3847 = vmatprep.mubr.bf16.mxu0 %v124
    %3848 = vmatmul.mubr.bf16.gmra.mrb[0].mxu0 %v123
    %v3849 = vpop.f32.mrb[0].mxu0
    %v3850 = vadd.f32 %v3809, %v3849
    %v3851 = vpop.f32.mrb[0].mxu0
    %v3852 = vadd.f32 %v3811, %v3851
    %v3853 = vpop.f32.mrb[0].mxu0
    %v3854 = vpop.f32.mrb[0].mxu0
    %3855 = vdwg.mxu0
    %3856 = vmatprep.subr.bf16.mxu0 %v2608
    %3857 = vmatpush1.bf16.msra.mxu0 %v2607
    %3858 = vmatprep.subr.bf16.mxu0 %v2616
    %3859 = vmatpush1.bf16.msra.mxu0 %v2615
    %3860 = vmatprep.subr.bf16.mxu0 %v2624
    %3861 = vmatpush1.bf16.msra.mxu0 %v2623
    %3862 = vmatprep.subr.bf16.mxu0 %v2632
    %3863 = vmatpush1.bf16.msra.mxu0 %v2631
    %3864 = vmatprep.subr.bf16.mxu0 %v2640
    %3865 = vmatpush1.bf16.msra.mxu0 %v2639
    %3866 = vmatprep.subr.bf16.mxu0 %v2648
    %3867 = vmatpush1.bf16.msra.mxu0 %v2647
    %3868 = vmatprep.subr.bf16.mxu0 %v2656
    %3869 = vmatpush1.bf16.msra.mxu0 %v2655
    %3870 = vmatprep.subr.bf16.mxu0 %v2664
    %3871 = vmatpush1.bf16.msra.mxu0 %v2663
    %3872 = vmatprep.subr.bf16.mxu0 %v2672
    %3873 = vmatpush1.bf16.msra.mxu0 %v2671
    %3874 = vmatprep.subr.bf16.mxu0 %v2680
    %3875 = vmatpush1.bf16.msra.mxu0 %v2679
    %3876 = vmatprep.subr.bf16.mxu0 %v2688
    %3877 = vmatpush1.bf16.msra.mxu0 %v2687
    %3878 = vmatprep.subr.bf16.mxu0 %v2696
    %3879 = vmatpush1.bf16.msra.mxu0 %v2695
    %3880 = vmatprep.subr.bf16.mxu0 %v2704
    %3881 = vmatpush1.bf16.msra.mxu0 %v2703
    %3882 = vmatprep.subr.bf16.mxu0 %v2712
    %3883 = vmatpush1.bf16.msra.mxu0 %v2711
    %3884 = vmatprep.subr.bf16.mxu0 %v2720
    %3885 = vmatpush1.bf16.msra.mxu0 %v2719
    %3886 = vmatprep.subr.bf16.mxu0 %v2728
    %3887 = vmatpush1.bf16.msra.mxu0 %v2727
    %3888 = vmatprep.mubr.bf16.mxu0 %v126
    %3889 = vmatmul.mubr.bf16.gmra.mrb[0].mxu0 %v125
    %v3890 = vpop.f32.mrb[0].mxu0
    %v3891 = vadd.f32 %v3850, %v3890
    %v3892 = vpop.f32.mrb[0].mxu0
    %v3893 = vadd.f32 %v3852, %v3892
    %v3894 = vpop.f32.mrb[0].mxu0
    %v3895 = vpop.f32.mrb[0].mxu0
    %3896 = vdwg.mxu0
    %v3897 = vpack.c.bf16 %v3399, %v3399
    %v3898 = vpack.c.bf16 %v3401, %v3401
    %v3899 = vpack.c.bf16 %v3563, %v3563
    %v3900 = vpack.c.bf16 %v3565, %v3565
    %v3901 = vpack.c.bf16 %v3727, %v3727
    %v3902 = vpack.c.bf16 %v3729, %v3729
    %v3903 = vpack.c.bf16 %v3891, %v3891
    %v3904 = vpack.c.bf16 %v3893, %v3893
    %v3905 = vld [vmem:[#allocation7] sm:$0xf]
    %v3906 = vld [vmem:[#allocation7 + $0x4] sm:$0xf]
    %v3907 = vld [vmem:[#allocation7 + $0x8] sm:$0xf]
    %v3908 = vld [vmem:[#allocation7 + $0xc] sm:$0xf]
    %v3909 = vld [vmem:[#allocation7 + $0x10] sm:$0xf]
    %v3910 = vld [vmem:[#allocation7 + $0x14] sm:$0xf]
    %v3911 = vld [vmem:[#allocation7 + $0x18] sm:$0xf]
    %v3912 = vld [vmem:[#allocation7 + $0x1c] sm:$0xf]
    %v3913 = vld [vmem:[#allocation7 + $0x20] sm:$0xf]
    %v3914 = vld [vmem:[#allocation7 + $0x24] sm:$0xf]
    %v3915 = vld [vmem:[#allocation7 + $0x28] sm:$0xf]
    %v3916 = vld [vmem:[#allocation7 + $0x2c] sm:$0xf]
    %v3917 = vld [vmem:[#allocation7 + $0x30] sm:$0xf]
    %v3918 = vld [vmem:[#allocation7 + $0x34] sm:$0xf]
    %v3919 = vld [vmem:[#allocation7 + $0x38] sm:$0xf]
    %v3920 = vld [vmem:[#allocation7 + $0x3c] sm:$0xf]
    %v3921 = vld [vmem:[#allocation7 + $0x40] sm:$0xf]
    %v3922 = vld [vmem:[#allocation7 + $0x44] sm:$0xf]
    %v3923 = vld [vmem:[#allocation7 + $0x48] sm:$0xf]
    %v3924 = vld [vmem:[#allocation7 + $0x4c] sm:$0xf]
    %v3925 = vld [vmem:[#allocation7 + $0x50] sm:$0xf]
    %v3926 = vld [vmem:[#allocation7 + $0x54] sm:$0xf]
    %v3927 = vld [vmem:[#allocation7 + $0x58] sm:$0xf]
    %v3928 = vld [vmem:[#allocation7 + $0x5c] sm:$0xf]
    %v3929 = vld [vmem:[#allocation7 + $0x60] sm:$0xf]
    %v3930 = vld [vmem:[#allocation7 + $0x64] sm:$0xf]
    %v3931 = vld [vmem:[#allocation7 + $0x68] sm:$0xf]
    %v3932 = vld [vmem:[#allocation7 + $0x6c] sm:$0xf]
    %v3933 = vld [vmem:[#allocation7 + $0x70] sm:$0xf]
    %v3934 = vld [vmem:[#allocation7 + $0x74] sm:$0xf]
    %v3935 = vld [vmem:[#allocation7 + $0x78] sm:$0xf]
    %v3936 = vld [vmem:[#allocation7 + $0x7c] sm:$0xf]
    %v3937 = vld [vmem:[#allocation7 + $0x80] sm:$0xf]
    %v3938 = vld [vmem:[#allocation7 + $0x84] sm:$0xf]
    %v3939 = vld [vmem:[#allocation7 + $0x88] sm:$0xf]
    %v3940 = vld [vmem:[#allocation7 + $0x8c] sm:$0xf]
    %v3941 = vld [vmem:[#allocation7 + $0x90] sm:$0xf]
    %v3942 = vld [vmem:[#allocation7 + $0x94] sm:$0xf]
    %v3943 = vld [vmem:[#allocation7 + $0x98] sm:$0xf]
    %v3944 = vld [vmem:[#allocation7 + $0x9c] sm:$0xf]
    %v3945 = vld [vmem:[#allocation7 + $0xa0] sm:$0xf]
    %v3946 = vld [vmem:[#allocation7 + $0xa4] sm:$0xf]
    %v3947 = vld [vmem:[#allocation7 + $0xa8] sm:$0xf]
    %v3948 = vld [vmem:[#allocation7 + $0xac] sm:$0xf]
    %v3949 = vld [vmem:[#allocation7 + $0xb0] sm:$0xf]
    %v3950 = vld [vmem:[#allocation7 + $0xb4] sm:$0xf]
    %v3951 = vld [vmem:[#allocation7 + $0xb8] sm:$0xf]
    %v3952 = vld [vmem:[#allocation7 + $0xbc] sm:$0xf]
    %v3953 = vld [vmem:[#allocation7 + $0xc0] sm:$0xf]
    %v3954 = vld [vmem:[#allocation7 + $0xc4] sm:$0xf]
    %v3955 = vld [vmem:[#allocation7 + $0xc8] sm:$0xf]
    %v3956 = vld [vmem:[#allocation7 + $0xcc] sm:$0xf]
    %v3957 = vld [vmem:[#allocation7 + $0xd0] sm:$0xf]
    %v3958 = vld [vmem:[#allocation7 + $0xd4] sm:$0xf]
    %v3959 = vld [vmem:[#allocation7 + $0xd8] sm:$0xf]
    %v3960 = vld [vmem:[#allocation7 + $0xdc] sm:$0xf]
    %v3961 = vld [vmem:[#allocation7 + $0xe0] sm:$0xf]
    %v3962 = vld [vmem:[#allocation7 + $0xe4] sm:$0xf]
    %v3963 = vld [vmem:[#allocation7 + $0xe8] sm:$0xf]
    %v3964 = vld [vmem:[#allocation7 + $0xec] sm:$0xf]
    %v3965 = vld [vmem:[#allocation7 + $0xf0] sm:$0xf]
    %v3966 = vld [vmem:[#allocation7 + $0xf4] sm:$0xf]
    %v3967 = vld [vmem:[#allocation7 + $0xf8] sm:$0xf]
    %v3968 = vld [vmem:[#allocation7 + $0xfc] sm:$0xf]
    %v3969 = vld [vmem:[#allocation7 + $0x100] sm:$0xf]
    %v3970 = vld [vmem:[#allocation7 + $0x104] sm:$0xf]
    %v3971 = vld [vmem:[#allocation7 + $0x108] sm:$0xf]
    %v3972 = vld [vmem:[#allocation7 + $0x10c] sm:$0xf]
    %v3973 = vld [vmem:[#allocation7 + $0x110] sm:$0xf]
    %v3974 = vld [vmem:[#allocation7 + $0x114] sm:$0xf]
    %v3975 = vld [vmem:[#allocation7 + $0x118] sm:$0xf]
    %v3976 = vld [vmem:[#allocation7 + $0x11c] sm:$0xf]
    %v3977 = vld [vmem:[#allocation7 + $0x120] sm:$0xf]
    %v3978 = vld [vmem:[#allocation7 + $0x124] sm:$0xf]
    %v3979 = vld [vmem:[#allocation7 + $0x128] sm:$0xf]
    %v3980 = vld [vmem:[#allocation7 + $0x12c] sm:$0xf]
    %v3981 = vld [vmem:[#allocation7 + $0x130] sm:$0xf]
    %v3982 = vld [vmem:[#allocation7 + $0x134] sm:$0xf]
    %v3983 = vld [vmem:[#allocation7 + $0x138] sm:$0xf]
    %v3984 = vld [vmem:[#allocation7 + $0x13c] sm:$0xf]
    %v3985 = vld [vmem:[#allocation7 + $0x140] sm:$0xf]
    %v3986 = vld [vmem:[#allocation7 + $0x144] sm:$0xf]
    %v3987 = vld [vmem:[#allocation7 + $0x148] sm:$0xf]
    %v3988 = vld [vmem:[#allocation7 + $0x14c] sm:$0xf]
    %v3989 = vld [vmem:[#allocation7 + $0x150] sm:$0xf]
    %v3990 = vld [vmem:[#allocation7 + $0x154] sm:$0xf]
    %v3991 = vld [vmem:[#allocation7 + $0x158] sm:$0xf]
    %v3992 = vld [vmem:[#allocation7 + $0x15c] sm:$0xf]
    %v3993 = vld [vmem:[#allocation7 + $0x160] sm:$0xf]
    %v3994 = vld [vmem:[#allocation7 + $0x164] sm:$0xf]
    %v3995 = vld [vmem:[#allocation7 + $0x168] sm:$0xf]
    %v3996 = vld [vmem:[#allocation7 + $0x16c] sm:$0xf]
    %v3997 = vld [vmem:[#allocation7 + $0x170] sm:$0xf]
    %v3998 = vld [vmem:[#allocation7 + $0x174] sm:$0xf]
    %v3999 = vld [vmem:[#allocation7 + $0x178] sm:$0xf]
    %v4000 = vld [vmem:[#allocation7 + $0x17c] sm:$0xf]
    %v4001 = vld [vmem:[#allocation7 + $0x180] sm:$0xf]
    %v4002 = vld [vmem:[#allocation7 + $0x184] sm:$0xf]
    %v4003 = vld [vmem:[#allocation7 + $0x188] sm:$0xf]
    %v4004 = vld [vmem:[#allocation7 + $0x18c] sm:$0xf]
    %v4005 = vld [vmem:[#allocation7 + $0x190] sm:$0xf]
    %v4006 = vld [vmem:[#allocation7 + $0x194] sm:$0xf]
    %v4007 = vld [vmem:[#allocation7 + $0x198] sm:$0xf]
    %v4008 = vld [vmem:[#allocation7 + $0x19c] sm:$0xf]
    %v4009 = vld [vmem:[#allocation7 + $0x1a0] sm:$0xf]
    %v4010 = vld [vmem:[#allocation7 + $0x1a4] sm:$0xf]
    %v4011 = vld [vmem:[#allocation7 + $0x1a8] sm:$0xf]
    %v4012 = vld [vmem:[#allocation7 + $0x1ac] sm:$0xf]
    %v4013 = vld [vmem:[#allocation7 + $0x1b0] sm:$0xf]
    %v4014 = vld [vmem:[#allocation7 + $0x1b4] sm:$0xf]
    %v4015 = vld [vmem:[#allocation7 + $0x1b8] sm:$0xf]
    %v4016 = vld [vmem:[#allocation7 + $0x1bc] sm:$0xf]
    %v4017 = vld [vmem:[#allocation7 + $0x1c0] sm:$0xf]
    %v4018 = vld [vmem:[#allocation7 + $0x1c4] sm:$0xf]
    %v4019 = vld [vmem:[#allocation7 + $0x1c8] sm:$0xf]
    %v4020 = vld [vmem:[#allocation7 + $0x1cc] sm:$0xf]
    %v4021 = vld [vmem:[#allocation7 + $0x1d0] sm:$0xf]
    %v4022 = vld [vmem:[#allocation7 + $0x1d4] sm:$0xf]
    %v4023 = vld [vmem:[#allocation7 + $0x1d8] sm:$0xf]
    %v4024 = vld [vmem:[#allocation7 + $0x1dc] sm:$0xf]
    %v4025 = vld [vmem:[#allocation7 + $0x1e0] sm:$0xf]
    %v4026 = vld [vmem:[#allocation7 + $0x1e4] sm:$0xf]
    %v4027 = vld [vmem:[#allocation7 + $0x1e8] sm:$0xf]
    %v4028 = vld [vmem:[#allocation7 + $0x1ec] sm:$0xf]
    %v4029 = vld [vmem:[#allocation7 + $0x1f0] sm:$0xf]
    %v4030 = vld [vmem:[#allocation7 + $0x1f4] sm:$0xf]
    %v4031 = vld [vmem:[#allocation7 + $0x1f8] sm:$0xf]
    %v4032 = vld [vmem:[#allocation7 + $0x1fc] sm:$0xf]
    %v4033 = vld [vmem:[#allocation8] sm:$0x1]
    %v4035 = vlaneseq
    %v4036 = vshrl.u32 %v4035, 7
    %v4037 = vsub.s32 0, %v4036
    %v4038 = vrot.slane %v4033, %v4037
    %v4168 = vunpack.c.l.b16 %v3905
    %v4169 = vunpack.c.l.b16 %v3906
    %v4170 = vunpack.c.l.b16 %v3907
    %v4171 = vunpack.c.l.b16 %v3908
    %v4172 = vunpack.c.l.b16 %v3909
    %v4173 = vunpack.c.l.b16 %v3910
    %v4174 = vunpack.c.l.b16 %v3911
    %v4175 = vunpack.c.l.b16 %v3912
    %v4176 = vunpack.c.l.b16 %v3913
    %v4177 = vunpack.c.l.b16 %v3914
    %v4178 = vunpack.c.l.b16 %v3915
    %v4179 = vunpack.c.l.b16 %v3916
    %v4180 = vunpack.c.l.b16 %v3917
    %v4181 = vunpack.c.l.b16 %v3918
    %v4182 = vunpack.c.l.b16 %v3919
    %v4183 = vunpack.c.l.b16 %v3920
    %v4184 = vunpack.c.l.b16 %v3921
    %v4185 = vunpack.c.l.b16 %v3922
    %v4186 = vunpack.c.l.b16 %v3923
    %v4187 = vunpack.c.l.b16 %v3924
    %v4188 = vunpack.c.l.b16 %v3925
    %v4189 = vunpack.c.l.b16 %v3926
    %v4190 = vunpack.c.l.b16 %v3927
    %v4191 = vunpack.c.l.b16 %v3928
    %v4192 = vunpack.c.l.b16 %v3929
    %v4193 = vunpack.c.l.b16 %v3930
    %v4194 = vunpack.c.l.b16 %v3931
    %v4195 = vunpack.c.l.b16 %v3932
    %v4196 = vunpack.c.l.b16 %v3933
    %v4197 = vunpack.c.l.b16 %v3934
    %v4198 = vunpack.c.l.b16 %v3935
    %v4199 = vunpack.c.l.b16 %v3936
    %v4200 = vunpack.c.l.b16 %v3937
    %v4201 = vunpack.c.l.b16 %v3938
    %v4202 = vunpack.c.l.b16 %v3939
    %v4203 = vunpack.c.l.b16 %v3940
    %v4204 = vunpack.c.l.b16 %v3941
    %v4205 = vunpack.c.l.b16 %v3942
    %v4206 = vunpack.c.l.b16 %v3943
    %v4207 = vunpack.c.l.b16 %v3944
    %v4208 = vunpack.c.l.b16 %v3945
    %v4209 = vunpack.c.l.b16 %v3946
    %v4210 = vunpack.c.l.b16 %v3947
    %v4211 = vunpack.c.l.b16 %v3948
    %v4212 = vunpack.c.l.b16 %v3949
    %v4213 = vunpack.c.l.b16 %v3950
    %v4214 = vunpack.c.l.b16 %v3951
    %v4215 = vunpack.c.l.b16 %v3952
    %v4216 = vunpack.c.l.b16 %v3953
    %v4217 = vunpack.c.l.b16 %v3954
    %v4218 = vunpack.c.l.b16 %v3955
    %v4219 = vunpack.c.l.b16 %v3956
    %v4220 = vunpack.c.l.b16 %v3957
    %v4221 = vunpack.c.l.b16 %v3958
    %v4222 = vunpack.c.l.b16 %v3959
    %v4223 = vunpack.c.l.b16 %v3960
    %v4224 = vunpack.c.l.b16 %v3961
    %v4225 = vunpack.c.l.b16 %v3962
    %v4226 = vunpack.c.l.b16 %v3963
    %v4227 = vunpack.c.l.b16 %v3964
    %v4228 = vunpack.c.l.b16 %v3965
    %v4229 = vunpack.c.l.b16 %v3966
    %v4230 = vunpack.c.l.b16 %v3967
    %v4231 = vunpack.c.l.b16 %v3968
    %v4232 = vunpack.c.l.b16 %v3969
    %v4233 = vunpack.c.l.b16 %v3970
    %v4234 = vunpack.c.l.b16 %v3971
    %v4235 = vunpack.c.l.b16 %v3972
    %v4236 = vunpack.c.l.b16 %v3973
    %v4237 = vunpack.c.l.b16 %v3974
    %v4238 = vunpack.c.l.b16 %v3975
    %v4239 = vunpack.c.l.b16 %v3976
    %v4240 = vunpack.c.l.b16 %v3977
    %v4241 = vunpack.c.l.b16 %v3978
    %v4242 = vunpack.c.l.b16 %v3979
    %v4243 = vunpack.c.l.b16 %v3980
    %v4244 = vunpack.c.l.b16 %v3981
    %v4245 = vunpack.c.l.b16 %v3982
    %v4246 = vunpack.c.l.b16 %v3983
    %v4247 = vunpack.c.l.b16 %v3984
    %v4248 = vunpack.c.l.b16 %v3985
    %v4249 = vunpack.c.l.b16 %v3986
    %v4250 = vunpack.c.l.b16 %v3987
    %v4251 = vunpack.c.l.b16 %v3988
    %v4252 = vunpack.c.l.b16 %v3989
    %v4253 = vunpack.c.l.b16 %v3990
    %v4254 = vunpack.c.l.b16 %v3991
    %v4255 = vunpack.c.l.b16 %v3992
    %v4256 = vunpack.c.l.b16 %v3993
    %v4257 = vunpack.c.l.b16 %v3994
    %v4258 = vunpack.c.l.b16 %v3995
    %v4259 = vunpack.c.l.b16 %v3996
    %v4260 = vunpack.c.l.b16 %v3997
    %v4261 = vunpack.c.l.b16 %v3998
    %v4262 = vunpack.c.l.b16 %v3999
    %v4263 = vunpack.c.l.b16 %v4000
    %v4264 = vunpack.c.l.b16 %v4001
    %v4265 = vunpack.c.l.b16 %v4002
    %v4266 = vunpack.c.l.b16 %v4003
    %v4267 = vunpack.c.l.b16 %v4004
    %v4268 = vunpack.c.l.b16 %v4005
    %v4269 = vunpack.c.l.b16 %v4006
    %v4270 = vunpack.c.l.b16 %v4007
    %v4271 = vunpack.c.l.b16 %v4008
    %v4272 = vunpack.c.l.b16 %v4009
    %v4273 = vunpack.c.l.b16 %v4010
    %v4274 = vunpack.c.l.b16 %v4011
    %v4275 = vunpack.c.l.b16 %v4012
    %v4276 = vunpack.c.l.b16 %v4013
    %v4277 = vunpack.c.l.b16 %v4014
    %v4278 = vunpack.c.l.b16 %v4015
    %v4279 = vunpack.c.l.b16 %v4016
    %v4280 = vunpack.c.l.b16 %v4017
    %v4281 = vunpack.c.l.b16 %v4018
    %v4282 = vunpack.c.l.b16 %v4019
    %v4283 = vunpack.c.l.b16 %v4020
    %v4284 = vunpack.c.l.b16 %v4021
    %v4285 = vunpack.c.l.b16 %v4022
    %v4286 = vunpack.c.l.b16 %v4023
    %v4287 = vunpack.c.l.b16 %v4024
    %v4288 = vunpack.c.l.b16 %v4025
    %v4289 = vunpack.c.l.b16 %v4026
    %v4290 = vunpack.c.l.b16 %v4027
    %v4291 = vunpack.c.l.b16 %v4028
    %v4292 = vunpack.c.l.b16 %v4029
    %v4293 = vunpack.c.l.b16 %v4030
    %v4294 = vunpack.c.l.b16 %v4031
    %v4295 = vunpack.c.l.b16 %v4032
    %v4296 = vpack.c.b16 %v4169, %v4168
    %v4297 = vpack.c.b16 %v4171, %v4170
    %v4298 = vpack.c.b16 %v4173, %v4172
    %v4299 = vpack.c.b16 %v4175, %v4174
    %v4300 = vpack.c.b16 %v4177, %v4176
    %v4301 = vpack.c.b16 %v4179, %v4178
    %v4302 = vpack.c.b16 %v4181, %v4180
    %v4303 = vpack.c.b16 %v4183, %v4182
    %v4304 = vpack.c.b16 %v4185, %v4184
    %v4305 = vpack.c.b16 %v4187, %v4186
    %v4306 = vpack.c.b16 %v4189, %v4188
    %v4307 = vpack.c.b16 %v4191, %v4190
    %v4308 = vpack.c.b16 %v4193, %v4192
    %v4309 = vpack.c.b16 %v4195, %v4194
    %v4310 = vpack.c.b16 %v4197, %v4196
    %v4311 = vpack.c.b16 %v4199, %v4198
    %v4312 = vpack.c.b16 %v4201, %v4200
    %v4313 = vpack.c.b16 %v4203, %v4202
    %v4314 = vpack.c.b16 %v4205, %v4204
    %v4315 = vpack.c.b16 %v4207, %v4206
    %v4316 = vpack.c.b16 %v4209, %v4208
    %v4317 = vpack.c.b16 %v4211, %v4210
    %v4318 = vpack.c.b16 %v4213, %v4212
    %v4319 = vpack.c.b16 %v4215, %v4214
    %v4320 = vpack.c.b16 %v4217, %v4216
    %v4321 = vpack.c.b16 %v4219, %v4218
    %v4322 = vpack.c.b16 %v4221, %v4220
    %v4323 = vpack.c.b16 %v4223, %v4222
    %v4324 = vpack.c.b16 %v4225, %v4224
    %v4325 = vpack.c.b16 %v4227, %v4226
    %v4326 = vpack.c.b16 %v4229, %v4228
    %v4327 = vpack.c.b16 %v4231, %v4230
    %v4328 = vpack.c.b16 %v4233, %v4232
    %v4329 = vpack.c.b16 %v4235, %v4234
    %v4330 = vpack.c.b16 %v4237, %v4236
    %v4331 = vpack.c.b16 %v4239, %v4238
    %v4332 = vpack.c.b16 %v4241, %v4240
    %v4333 = vpack.c.b16 %v4243, %v4242
    %v4334 = vpack.c.b16 %v4245, %v4244
    %v4335 = vpack.c.b16 %v4247, %v4246
    %v4336 = vpack.c.b16 %v4249, %v4248
    %v4337 = vpack.c.b16 %v4251, %v4250
    %v4338 = vpack.c.b16 %v4253, %v4252
    %v4339 = vpack.c.b16 %v4255, %v4254
    %v4340 = vpack.c.b16 %v4257, %v4256
    %v4341 = vpack.c.b16 %v4259, %v4258
    %v4342 = vpack.c.b16 %v4261, %v4260
    %v4343 = vpack.c.b16 %v4263, %v4262
    %v4344 = vpack.c.b16 %v4265, %v4264
    %v4345 = vpack.c.b16 %v4267, %v4266
    %v4346 = vpack.c.b16 %v4269, %v4268
    %v4347 = vpack.c.b16 %v4271, %v4270
    %v4348 = vpack.c.b16 %v4273, %v4272
    %v4349 = vpack.c.b16 %v4275, %v4274
    %v4350 = vpack.c.b16 %v4277, %v4276
    %v4351 = vpack.c.b16 %v4279, %v4278
    %v4352 = vpack.c.b16 %v4281, %v4280
    %v4353 = vpack.c.b16 %v4283, %v4282
    %v4354 = vpack.c.b16 %v4285, %v4284
    %v4355 = vpack.c.b16 %v4287, %v4286
    %v4356 = vpack.c.b16 %v4289, %v4288
    %v4357 = vpack.c.b16 %v4291, %v4290
    %v4358 = vpack.c.b16 %v4293, %v4292
    %v4359 = vpack.c.b16 %v4295, %v4294
    %4424 = vmatprep.subr.bf16.mxu0 0
    %4425 = vmatpush1.bf16.msra.mxu0 %v4296
    %4426 = vmatprep.subr.bf16.mxu0 0
    %4427 = vmatpush1.bf16.msra.mxu0 %v4297
    %4428 = vmatprep.subr.bf16.mxu0 0
    %4429 = vmatpush1.bf16.msra.mxu0 %v4298
    %4430 = vmatprep.subr.bf16.mxu0 0
    %4431 = vmatpush1.bf16.msra.mxu0 %v4299
    %4432 = vmatprep.subr.bf16.mxu0 0
    %4433 = vmatpush1.bf16.msra.mxu0 %v4300
    %4434 = vmatprep.subr.bf16.mxu0 0
    %4435 = vmatpush1.bf16.msra.mxu0 %v4301
    %4436 = vmatprep.subr.bf16.mxu0 0
    %4437 = vmatpush1.bf16.msra.mxu0 %v4302
    %4438 = vmatprep.subr.bf16.mxu0 0
    %4439 = vmatpush1.bf16.msra.mxu0 %v4303
    %4440 = vmatprep.subr.bf16.mxu0 0
    %4441 = vmatpush1.bf16.msra.mxu0 %v4304
    %4442 = vmatprep.subr.bf16.mxu0 0
    %4443 = vmatpush1.bf16.msra.mxu0 %v4305
    %4444 = vmatprep.subr.bf16.mxu0 0
    %4445 = vmatpush1.bf16.msra.mxu0 %v4306
    %4446 = vmatprep.subr.bf16.mxu0 0
    %4447 = vmatpush1.bf16.msra.mxu0 %v4307
    %4448 = vmatprep.subr.bf16.mxu0 0
    %4449 = vmatpush1.bf16.msra.mxu0 %v4308
    %4450 = vmatprep.subr.bf16.mxu0 0
    %4451 = vmatpush1.bf16.msra.mxu0 %v4309
    %4452 = vmatprep.subr.bf16.mxu0 0
    %4453 = vmatpush1.bf16.msra.mxu0 %v4310
    %4454 = vmatprep.subr.bf16.mxu0 0
    %4455 = vmatpush1.bf16.msra.mxu0 %v4311
    %4456 = vmatprep.mubr.bf16.mxu0 %v3898
    %4457 = vmatmul.mubr.bf16.gmra.mrb[0].mxu0 %v3897
    %v4458 = vpop.f32.mrb[0].mxu0
    %v4459 = vadd.f32 %v4038, %v4458
    %v4460 = vpop.f32.mrb[0].mxu0
    %v4461 = vpop.f32.mrb[0].mxu0
    %v4462 = vpop.f32.mrb[0].mxu0
    %4463 = vdwg.mxu0
    %4464 = vmatprep.subr.bf16.mxu0 0
    %4465 = vmatpush1.bf16.msra.mxu0 %v4312
    %4466 = vmatprep.subr.bf16.mxu0 0
    %4467 = vmatpush1.bf16.msra.mxu0 %v4313
    %4468 = vmatprep.subr.bf16.mxu0 0
    %4469 = vmatpush1.bf16.msra.mxu0 %v4314
    %4470 = vmatprep.subr.bf16.mxu0 0
    %4471 = vmatpush1.bf16.msra.mxu0 %v4315
    %4472 = vmatprep.subr.bf16.mxu0 0
    %4473 = vmatpush1.bf16.msra.mxu0 %v4316
    %4474 = vmatprep.subr.bf16.mxu0 0
    %4475 = vmatpush1.bf16.msra.mxu0 %v4317
    %4476 = vmatprep.subr.bf16.mxu0 0
    %4477 = vmatpush1.bf16.msra.mxu0 %v4318
    %4478 = vmatprep.subr.bf16.mxu0 0
    %4479 = vmatpush1.bf16.msra.mxu0 %v4319
    %4480 = vmatprep.subr.bf16.mxu0 0
    %4481 = vmatpush1.bf16.msra.mxu0 %v4320
    %4482 = vmatprep.subr.bf16.mxu0 0
    %4483 = vmatpush1.bf16.msra.mxu0 %v4321
    %4484 = vmatprep.subr.bf16.mxu0 0
    %4485 = vmatpush1.bf16.msra.mxu0 %v4322
    %4486 = vmatprep.subr.bf16.mxu0 0
    %4487 = vmatpush1.bf16.msra.mxu0 %v4323
    %4488 = vmatprep.subr.bf16.mxu0 0
    %4489 = vmatpush1.bf16.msra.mxu0 %v4324
    %4490 = vmatprep.subr.bf16.mxu0 0
    %4491 = vmatpush1.bf16.msra.mxu0 %v4325
    %4492 = vmatprep.subr.bf16.mxu0 0
    %4493 = vmatpush1.bf16.msra.mxu0 %v4326
    %4494 = vmatprep.subr.bf16.mxu0 0
    %4495 = vmatpush1.bf16.msra.mxu0 %v4327
    %4496 = vmatprep.mubr.bf16.mxu0 %v3900
    %4497 = vmatmul.mubr.bf16.gmra.mrb[0].mxu0 %v3899
    %v4498 = vpop.f32.mrb[0].mxu0
    %v4499 = vadd.f32 %v4459, %v4498
    %v4500 = vpop.f32.mrb[0].mxu0
    %v4501 = vpop.f32.mrb[0].mxu0
    %v4502 = vpop.f32.mrb[0].mxu0
    %4503 = vdwg.mxu0
    %4504 = vmatprep.subr.bf16.mxu0 0
    %4505 = vmatpush1.bf16.msra.mxu0 %v4328
    %4506 = vmatprep.subr.bf16.mxu0 0
    %4507 = vmatpush1.bf16.msra.mxu0 %v4329
    %4508 = vmatprep.subr.bf16.mxu0 0
    %4509 = vmatpush1.bf16.msra.mxu0 %v4330
    %4510 = vmatprep.subr.bf16.mxu0 0
    %4511 = vmatpush1.bf16.msra.mxu0 %v4331
    %4512 = vmatprep.subr.bf16.mxu0 0
    %4513 = vmatpush1.bf16.msra.mxu0 %v4332
    %4514 = vmatprep.subr.bf16.mxu0 0
    %4515 = vmatpush1.bf16.msra.mxu0 %v4333
    %4516 = vmatprep.subr.bf16.mxu0 0
    %4517 = vmatpush1.bf16.msra.mxu0 %v4334
    %4518 = vmatprep.subr.bf16.mxu0 0
    %4519 = vmatpush1.bf16.msra.mxu0 %v4335
    %4520 = vmatprep.subr.bf16.mxu0 0
    %4521 = vmatpush1.bf16.msra.mxu0 %v4336
    %4522 = vmatprep.subr.bf16.mxu0 0
    %4523 = vmatpush1.bf16.msra.mxu0 %v4337
    %4524 = vmatprep.subr.bf16.mxu0 0
    %4525 = vmatpush1.bf16.msra.mxu0 %v4338
    %4526 = vmatprep.subr.bf16.mxu0 0
    %4527 = vmatpush1.bf16.msra.mxu0 %v4339
    %4528 = vmatprep.subr.bf16.mxu0 0
    %4529 = vmatpush1.bf16.msra.mxu0 %v4340
    %4530 = vmatprep.subr.bf16.mxu0 0
    %4531 = vmatpush1.bf16.msra.mxu0 %v4341
    %4532 = vmatprep.subr.bf16.mxu0 0
    %4533 = vmatpush1.bf16.msra.mxu0 %v4342
    %4534 = vmatprep.subr.bf16.mxu0 0
    %4535 = vmatpush1.bf16.msra.mxu0 %v4343
    %4536 = vmatprep.mubr.bf16.mxu0 %v3902
    %4537 = vmatmul.mubr.bf16.gmra.mrb[0].mxu0 %v3901
    %v4538 = vpop.f32.mrb[0].mxu0
    %v4539 = vadd.f32 %v4499, %v4538
    %v4540 = vpop.f32.mrb[0].mxu0
    %v4541 = vpop.f32.mrb[0].mxu0
    %v4542 = vpop.f32.mrb[0].mxu0
    %4543 = vdwg.mxu0
    %4544 = vmatprep.subr.bf16.mxu0 0
    %4545 = vmatpush1.bf16.msra.mxu0 %v4344
    %4546 = vmatprep.subr.bf16.mxu0 0
    %4547 = vmatpush1.bf16.msra.mxu0 %v4345
    %4548 = vmatprep.subr.bf16.mxu0 0
    %4549 = vmatpush1.bf16.msra.mxu0 %v4346
    %4550 = vmatprep.subr.bf16.mxu0 0
    %4551 = vmatpush1.bf16.msra.mxu0 %v4347
    %4552 = vmatprep.subr.bf16.mxu0 0
    %4553 = vmatpush1.bf16.msra.mxu0 %v4348
    %4554 = vmatprep.subr.bf16.mxu0 0
    %4555 = vmatpush1.bf16.msra.mxu0 %v4349
    %4556 = vmatprep.subr.bf16.mxu0 0
    %4557 = vmatpush1.bf16.msra.mxu0 %v4350
    %4558 = vmatprep.subr.bf16.mxu0 0
    %4559 = vmatpush1.bf16.msra.mxu0 %v4351
    %4560 = vmatprep.subr.bf16.mxu0 0
    %4561 = vmatpush1.bf16.msra.mxu0 %v4352
    %4562 = vmatprep.subr.bf16.mxu0 0
    %4563 = vmatpush1.bf16.msra.mxu0 %v4353
    %4564 = vmatprep.subr.bf16.mxu0 0
    %4565 = vmatpush1.bf16.msra.mxu0 %v4354
    %4566 = vmatprep.subr.bf16.mxu0 0
    %4567 = vmatpush1.bf16.msra.mxu0 %v4355
    %4568 = vmatprep.subr.bf16.mxu0 0
    %4569 = vmatpush1.bf16.msra.mxu0 %v4356
    %4570 = vmatprep.subr.bf16.mxu0 0
    %4571 = vmatpush1.bf16.msra.mxu0 %v4357
    %4572 = vmatprep.subr.bf16.mxu0 0
    %4573 = vmatpush1.bf16.msra.mxu0 %v4358
    %4574 = vmatprep.subr.bf16.mxu0 0
    %4575 = vmatpush1.bf16.msra.mxu0 %v4359
    %4576 = vmatprep.mubr.bf16.mxu0 %v3904
    %4577 = vmatmul.mubr.bf16.gmra.mrb[0].mxu0 %v3903
    %v4578 = vpop.f32.mrb[0].mxu0
    %v4579 = vadd.f32 %v4539, %v4578
    %v4580 = vpop.f32.mrb[0].mxu0
    %v4581 = vpop.f32.mrb[0].mxu0
    %v4582 = vpop.f32.mrb[0].mxu0
    %4583 = vdwg.mxu0
    %4584 = vst [vmem:[#allocation10] sm:$0x3] %v4579
    // Predicated region
    $region38: #{micronet_m3_head.1} parent=1 // pred_check
      _
    $region39: #{micronet_m3_head.1} parent=1 // pred_check_branch
      %4586 = sbr.rel (0) target = $region41
    $region40: #{micronet_m3_head.1} parent=1 // pred_region
      %s4588 = ssub.s32 32, 32
      %4589 = vsyncadd [#allocation4], %s4588
      %s4591 = sshll.u32 [#allocation10], 4
      %s4592 = int_to_ptr.vmem [resolvable:$true] %s4591
      %4594 = dma.vmem_to_hbm [thread:$0]  %s4592, 32, %s5, [#allocation4]
    $region41: #{micronet_m3_head.1} parent=1 // pred_fallthru
      _
    // Predicated region
    $region42: #{micronet_m3_head.1} parent=1 // pred_check
      _
    $region43: #{micronet_m3_head.1} parent=1 // pred_check_branch
      %4596 = sbr.rel (0) target = $region45
    $region44: #{micronet_m3_head.1} parent=1 // pred_region
      %4597 = dma.done [#allocation4], 32
    $region45: #{micronet_m3_head.1} parent=1 // pred_fallthru
      _
    %4598 = vsyncpa [#allocation3], 1
    %4599 = vsyncpa [#allocation6], 1
    %4600 = vsyncpa [#allocation9], 1
    %4601 = vsyncpa [#allocation4], 1

</llo_original>
